<compile_context>
chip_gen: v5e
topology: v5e:2x2
jax: 0.10.0
libtpu: 0.0.40
codegen_flags: <defaults>
</compile_context>

<pallas_src>
import jax
import jax.numpy as jnp
from jax.experimental import pallas as pl
from jax.experimental.pallas import tpu as pltpu


# ----------------------------------------------------------------------------
# Rodrigues (axis-angle -> 3x3 rotation, quaternion formulation, as in
# util.batch_rodrigues).  Tiny elementwise glue on (B*24, 3); kept in plain
# JAX in the (jitted) wrapper — the kernel consumes the flattened result.
# ----------------------------------------------------------------------------
def batch_rodrigues(theta):  # theta: (N, 3)
    l1norm = jnp.sqrt(jnp.sum((theta + 1e-8) ** 2, axis=1, keepdims=True))  # (N,1)
    normalized = theta / l1norm
    half = l1norm * 0.5
    v_cos = jnp.cos(half)
    v_sin = jnp.sin(half)
    quat = jnp.concatenate([v_cos, v_sin * normalized], axis=1)  # (N,4)
    quat = quat / jnp.sqrt(jnp.sum(quat * quat, axis=1, keepdims=True))
    w, x, y, z = quat[:, 0], quat[:, 1], quat[:, 2], quat[:, 3]
    w2, x2, y2, z2 = w * w, x * x, y * y, z * z
    wx, wy, wz = w * x, w * y, w * z
    xy, xz, yz = x * y, x * z, y * z
    rot = jnp.stack(
        [w2 + x2 - y2 - z2, 2 * xy - 2 * wz, 2 * wy + 2 * xz,
         2 * wz + 2 * xy, w2 - x2 + y2 - z2, 2 * yz - 2 * wx,
         2 * xz - 2 * wy, 2 * wx + 2 * yz, w2 - x2 - y2 + z2],
        axis=1)
    return rot  # (N, 9)


# ----------------------------------------------------------------------------
# Fused kernel.  Grid = (num_batch_blocks, H // tn).
#   batch axis   : "parallel"  (independent rows; splits across TCs on v7x)
#   hidden axis  : "arbitrary" (carries the f32 accumulator scratch)
# Per hidden step t:
#   h0_t = relu(rot_bf16 @ W0'[:, t])          (bias folded into W0' row 207)
#   acc += h0_t_bf16 @ W1[t, :]
# At t == last (per batch block):
#   pose  = rot_f32 @ Wpose (folded convs+heads, block-diagonal, f32)
#   shape = shape-MLP
#   full  = relu(acc + b1) · w2  (VPU multiply + lane reduce)
#   write one fused (Bb, 25) output block.
# ----------------------------------------------------------------------------
def disc_kernel(rot_ref, shp_ref,
                wpose_ref,
                ws0_ref, bs0_ref, ws1_ref, bs1_ref,
                w0_ref, w1_ref, b1_ref, w2_ref, b2_ref,
                out_ref, acc_scr):
    t = pl.program_id(1)

    @pl.when(t == 0)
    def _init():
        acc_scr[...] = jnp.zeros_like(acc_scr)

    # Full-pose MLP layer-0 chunk + layer-1 partial accumulation.
    # bf16 operands go straight to the MXU; accumulation stays f32.
    rot_bf16 = rot_ref[...].astype(jnp.bfloat16)            # (Bb, 208) tiny cast
    h0 = jnp.maximum(
        jnp.dot(rot_bf16, w0_ref[...], preferred_element_type=jnp.float32),
        0.0)                                                # bias is W0' row 207
    acc_scr[...] += jnp.dot(h0.astype(jnp.bfloat16), w1_ref[...],
                            preferred_element_type=jnp.float32)

    @pl.when(t == pl.num_programs(1) - 1)
    def _finalize():
        rot = rot_ref[...]
        # 23 per-joint heads folded through the two 1x1 convs (f32, tight tol).
        pose = jnp.dot(rot, wpose_ref[...], preferred_element_type=jnp.float32)
        # ShapeDiscriminator: Linear(10,5) -> ReLU -> Linear(5,1).
        hs = jnp.maximum(
            jnp.dot(shp_ref[...], ws0_ref[...],
                    preferred_element_type=jnp.float32) + bs0_ref[...], 0.0)
        shape = (jnp.dot(hs, ws1_ref[...], preferred_element_type=jnp.float32)
                 + bs1_ref[...])
        # Full-pose tail: relu(acc + b1), then VPU multiply + lane reduction
        # against the (1,1024) last-layer row (no degenerate N=1 MXU op).
        h1 = jnp.maximum(acc_scr[...] + b1_ref[...], 0.0)
        full = jnp.sum(h1 * w2_ref[...], axis=1, keepdims=True) + b2_ref[...]
        # Single fused output block: [pose (23) | full (1) | shape (1)].
        out_ref[:, 0:23] = pose
        out_ref[:, 23:24] = full
        out_ref[:, 24:25] = shape


# ----------------------------------------------------------------------------
# One-time parameter plumbing (layout + algebraic folding, done once per
# weight set, at full f32 precision).
# ----------------------------------------------------------------------------
def prepare_params(p):
    f32 = jnp.float32
    with jax.default_matmul_precision("float32"):
        # Fold the two 1x1 convs:  x[b,j,:] = rot[b,j,:] @ w12 + b12   (9 -> 32)
        w12 = p["c1_w"].T @ p["c2_w"].T                          # (9, 32)
        b12 = p["c1_b"] @ p["c2_w"].T + p["c2_b"]                # (32,)

        # --- pose heads folded through the convs: per-joint 9 -> 1 map. ---
        vj = w12 @ p["j_w"].T                                    # (9, 23)
        wpose = (jnp.zeros((23, 9, 23), f32)
                 .at[jnp.arange(23), :, jnp.arange(23)].set(vj.T)
                 .reshape(207, 23))                              # block-diagonal
        bpose = p["j_w"] @ b12 + p["j_b"]                        # (23,)
        wpose_aug = jnp.concatenate([wpose, bpose.reshape(1, 23)], axis=0)

        # --- full-pose layer 0 folded through the convs: 207 -> 1024. ---
        # torch flattens the conv output channel-major: input index = c*23 + j.
        f0w = p["f0_w"].reshape(1024, 32, 23)                    # [n, c, j]
        w0 = jnp.einsum("kc,ncj->jkn", w12, f0w).reshape(207, 1024)
        b0 = p["f0_b"] + jnp.einsum("c,ncj->n", b12, f0w)        # (1024,)
        w0_aug = jnp.concatenate(
            [w0, b0.reshape(1, 1024)], axis=0).astype(jnp.bfloat16)  # (208,1024)

        w1 = p["f1_w"].T.astype(jnp.bfloat16)                    # (1024, 1024)
        b1 = p["f1_b"].reshape(1, 1024)
        w2 = p["f2_w"].reshape(1, 1024)                          # f32 row vector
        b2 = p["f2_b"].reshape(1, 1)

        # Shape discriminator (tiny, f32).
        ws0 = p["s0_w"].T
        bs0 = p["s0_b"].reshape(1, 5)
        ws1 = p["s1_w"].T
        bs1 = p["s1_b"].reshape(1, 1)
    return dict(wpose=wpose_aug, w0=w0_aug, w1=w1, b1=b1, w2=w2, b2=b2,
                ws0=ws0, bs0=bs0, ws1=ws1, bs1=bs1)


# ----------------------------------------------------------------------------
# Wrapper: Discriminator.forward(thetas) -> (B, 25)
# ----------------------------------------------------------------------------
def discriminator_forward(thetas, prep, *, block_b=None, tn=None):
    B = thetas.shape[0]
    H = 1024

    shapes = thetas[:, :10]
    poses = thetas[:, 10:]                                       # (B, 72)

    # axis-angle -> rotation matrices, drop the global (joint-0) rotation,
    # append a constant-1 column so all biases ride inside the weight blocks.
    rotm = batch_rodrigues(poses.reshape(-1, 3)).reshape(B, 24, 9)[:, 1:, :]
    rot_aug = jnp.concatenate(
        [rotm.reshape(B, 23 * 9), jnp.ones((B, 1), dtype=rotm.dtype)],
        axis=1)                                                  # (B, 208)

    # Tiling: for small B the kernel is pure weight-DMA with ~0 MXU time, so
    # fewer/larger grid steps win (each step carries ~0.35us fixed overhead).
    # Only chunk the 1024-wide hidden dim once B is large enough that per-chunk
    # MXU time can hide the chunk DMA; tile the batch only when B is big.
    if block_b is None:
        block_b = B if B <= 256 else 256
    if tn is None:
        tn = H if B < 512 else 256
    assert H % tn == 0

    Bp = ((B + block_b - 1) // block_b) * block_b
    if Bp != B:
        rot_aug = jnp.pad(rot_aug, ((0, Bp - B), (0, 0)))
        shapes = jnp.pad(shapes, ((0, Bp - B), (0, 0)))
    nb = Bp // block_b
    nt = H // tn

    def _const(shape):
        # whole-array block, constant index map -> fetched once, VMEM-resident
        return pl.BlockSpec(shape, lambda b, t: (0,) * len(shape))

    grid_spec = pltpu.PrefetchScalarGridSpec(
        num_scalar_prefetch=0,
        grid=(nb, nt),
        in_specs=[
            pl.BlockSpec((block_b, 208), lambda b, t: (b, 0)),   # rot_aug
            pl.BlockSpec((block_b, 10), lambda b, t: (b, 0)),    # shapes
            _const((208, 23)),                                   # wpose (f32)
            _const((10, 5)), _const((1, 5)),                     # shape disc l0
            _const((5, 1)), _const((1, 1)),                      # shape disc l1
            pl.BlockSpec((208, tn), lambda b, t: (0, t)),        # W0' chunk (bf16)
            pl.BlockSpec((tn, H), lambda b, t: (t, 0)),          # W1 chunk (bf16)
            _const((1, H)),                                      # b1 (f32)
            _const((1, H)),                                      # w2 row (f32)
            _const((1, 1)),                                      # b2 (f32)
        ],
        out_specs=pl.BlockSpec((block_b, 25), lambda b, t: (b, 0)),
        scratch_shapes=[pltpu.VMEM((block_b, H), jnp.float32)],  # layer-1 preact acc
    )

    out = pl.pallas_call(
        disc_kernel,
        out_shape=jax.ShapeDtypeStruct((Bp, 25), jnp.float32),
        grid_spec=grid_spec,
        compiler_params=pltpu.CompilerParams(
            dimension_semantics=("parallel", "arbitrary"),
            vmem_limit_bytes=16 * 1024 * 1024),
    )(rot_aug, shapes,
      prep["wpose"],
      prep["ws0"], prep["bs0"], prep["ws1"], prep["bs1"],
      prep["w0"], prep["w1"], prep["b1"], prep["w2"], prep["b2"])

    return out[:B] if Bp != B else out


# ----------------------------------------------------------------------------
# Pure-JAX reference (mirrors the PyTorch module exactly) for validation.
# ----------------------------------------------------------------------------
def reference_forward(thetas, p):
    B = thetas.shape[0]
    shapes, poses = thetas[:, :10], thetas[:, 10:]

    h = jnp.maximum(shapes @ p["s0_w"].T + p["s0_b"], 0.0)
    shape_out = h @ p["s1_w"].T + p["s1_b"]

    rotm = batch_rodrigues(poses.reshape(-1, 3)).reshape(B, 24, 9)[:, 1:, :]
    x = jnp.einsum("bjc,oc->bjo", rotm, p["c1_w"]) + p["c1_b"]
    inter = jnp.einsum("bjc,oc->bjo", x, p["c2_w"]) + p["c2_b"]   # (B,23,32)
    pose_out = jnp.einsum("bjc,jc->bj", inter, p["j_w"]) + p["j_b"]

    flat = jnp.transpose(inter, (0, 2, 1)).reshape(B, -1)         # idx = c*23+j
    h = jnp.maximum(flat @ p["f0_w"].T + p["f0_b"], 0.0)
    h = jnp.maximum(h @ p["f1_w"].T + p["f1_b"], 0.0)
    full_out = h @ p["f2_w"].T + p["f2_b"]

    return jnp.concatenate([pose_out, full_out, shape_out], axis=1)


# ----------------------------------------------------------------------------
# Deterministic parameter init (PyTorch native weight shapes).
# ----------------------------------------------------------------------------
def init_params(key):
    shapes = {
        "c1_w": (32, 9), "c1_b": (32,),          # Conv2d(9,32,1)
        "c2_w": (32, 32), "c2_b": (32,),         # Conv2d(32,32,1)
        "j_w": (23, 32), "j_b": (23,),           # 23 x Linear(32,1)
        "f0_w": (1024, 736), "f0_b": (1024,),    # Linear(736,1024)
        "f1_w": (1024, 1024), "f1_b": (1024,),   # Linear(1024,1024)
        "f2_w": (1, 1024), "f2_b": (1,),         # Linear(1024,1)
        "s0_w": (5, 10), "s0_b": (5,),           # Linear(10,5)
        "s1_w": (1, 5), "s1_b": (1,),            # Linear(5,1)
    }
    params = {}
    keys = jax.random.split(key, len(shapes))
    for k, (name, shp) in zip(keys, sorted(shapes.items())):
        params[name] = 0.05 * jax.random.normal(k, shp, dtype=jnp.float32)
    return params


if __name__ == "__main__":
    key = jax.random.PRNGKey(0)
    k_theta, k_params = jax.random.split(key)

    B = 2
    # thetas: 10 SMPL shape params + 24*3 axis-angle pose params
    thetas = 0.2 * jax.random.normal(k_theta, (B, 82), dtype=jnp.float32)
    params = init_params(k_params)

    prep = prepare_params(params)          # one-time folding + bf16 casts

    fwd = jax.jit(lambda th: discriminator_forward(th, prep))
    out = jax.block_until_ready(fwd(thetas))

    with jax.default_matmul_precision("float32"):
        ref = reference_forward(thetas, params)
    ref = jax.block_until_ready(ref)

    assert out.shape == (B, 25), out.shape
    err = float(jnp.max(jnp.abs(out - ref)))
    # pose (cols 0..22) and shape (col 24) use f32 weights -> tight check
    assert jnp.allclose(out[:, :23], ref[:, :23], rtol=1e-3, atol=1e-3), err
    assert jnp.allclose(out[:, 24:25], ref[:, 24:25], rtol=1e-3, atol=1e-3), err
    # full-pose column uses bf16 weights/activations -> looser tolerance
    assert jnp.allclose(out, ref, rtol=1e-2, atol=1e-2), (
        f"mismatch vs reference: max abs err {err}")

    print("KERNEL_OK")
</pallas_src>

<mosaic_0001>
module attributes {stable_mosaic.version = 11 : i64} {
  func.func @disc_kernel(%arg0: i32, %arg1: i32, %arg2: memref<2x208xf32, #tpu.memory_space<vmem>>, %arg3: memref<2x10xf32, #tpu.memory_space<vmem>>, %arg4: memref<208x23xf32, #tpu.memory_space<vmem>>, %arg5: memref<10x5xf32, #tpu.memory_space<vmem>>, %arg6: memref<1x5xf32, #tpu.memory_space<vmem>>, %arg7: memref<5x1xf32, #tpu.memory_space<vmem>>, %arg8: memref<1x1xf32, #tpu.memory_space<vmem>>, %arg9: memref<208x1024xbf16, #tpu.memory_space<vmem>>, %arg10: memref<1024x1024xbf16, #tpu.memory_space<vmem>>, %arg11: memref<1x1024xf32, #tpu.memory_space<vmem>>, %arg12: memref<1x1024xf32, #tpu.memory_space<vmem>>, %arg13: memref<1x1xf32, #tpu.memory_space<vmem>>, %arg14: memref<2x25xf32, #tpu.memory_space<vmem>>, %arg15: memref<2x1024xf32, #tpu.memory_space<vmem>>) attributes {dimension_semantics = [#tpu.dimension_semantics<parallel>, #tpu.dimension_semantics<arbitrary>], iteration_bounds = array<i64: 1, 1>, scalar_prefetch = 0 : i64, scratch_operands = 1 : i64, tpu.core_type = #tpu.core_type<tc>, window_params = [{transform_indices = @transform_0, window_bounds = array<i64: 2, 208>}, {transform_indices = @transform_1, window_bounds = array<i64: 2, 10>}, {pipeline_mode = #tpu.pipeline_mode<synchronous>, transform_indices = @transform_2, window_bounds = array<i64: 208, 23>}, {pipeline_mode = #tpu.pipeline_mode<synchronous>, transform_indices = @transform_3, window_bounds = array<i64: 10, 5>}, {pipeline_mode = #tpu.pipeline_mode<synchronous>, transform_indices = @transform_4, window_bounds = array<i64: 1, 5>}, {pipeline_mode = #tpu.pipeline_mode<synchronous>, transform_indices = @transform_5, window_bounds = array<i64: 5, 1>}, {pipeline_mode = #tpu.pipeline_mode<synchronous>, transform_indices = @transform_6, window_bounds = array<i64: 1, 1>}, {transform_indices = @transform_7, window_bounds = array<i64: 208, 1024>}, {transform_indices = @transform_8, window_bounds = array<i64: 1024, 1024>}, {pipeline_mode = #tpu.pipeline_mode<synchronous>, transform_indices = @transform_9, window_bounds = array<i64: 1, 1024>}, {pipeline_mode = #tpu.pipeline_mode<synchronous>, transform_indices = @transform_10, window_bounds = array<i64: 1, 1024>}, {pipeline_mode = #tpu.pipeline_mode<synchronous>, transform_indices = @transform_11, window_bounds = array<i64: 1, 1>}, {transform_indices = @transform_12, window_bounds = array<i64: 2, 25>}]} {
    %c0_i32 = arith.constant 0 : i32
    %0 = arith.cmpi eq, %arg1, %c0_i32 : i32
    %1 = arith.extui %0 : i1 to i32
    %c0_i32_0 = arith.constant 0 : i32
    %2 = arith.cmpi ne, %1, %c0_i32_0 : i32
    scf.if %2 {
      %cst_14 = arith.constant 0.000000e+00 : f32
      %18 = vector.broadcast %cst_14 : f32 to vector<2x1024xf32>
      %c0_15 = arith.constant 0 : index
      %c0_16 = arith.constant 0 : index
      %19 = vector.load %arg15[%c0_15, %c0_16] : memref<2x1024xf32, #tpu.memory_space<vmem>>, vector<2x1024xf32>
      tpu.vector_store %arg15[%c0_15, %c0_16], %18 {strides = array<i32>} : memref<2x1024xf32, #tpu.memory_space<vmem>>, vector<2x1024xf32>,
    } else {
    }
    %c0 = arith.constant 0 : index
    %c0_1 = arith.constant 0 : index
    %3 = vector.load %arg2[%c0, %c0_1] : memref<2x208xf32, #tpu.memory_space<vmem>>, vector<2x208xf32>
    %4 = arith.truncf %3 : vector<2x208xf32> to vector<2x208xbf16>
    %c0_2 = arith.constant 0 : index
    %c0_3 = arith.constant 0 : index
    %5 = vector.load %arg9[%c0_2, %c0_3] : memref<208x1024xbf16, #tpu.memory_space<vmem>>, vector<208x1024xbf16>
    %cst = arith.constant dense<0.000000e+00> : vector<2x1024xf32>
    %6 = tpu.matmul %4, %5, %cst {dimension_numbers = #tpu.dot_dimension_numbers<[1], [0], [0], [1], [0, 0, 1, 1], [], []>} : vector<2x208xbf16>, vector<208x1024xbf16>, vector<2x1024xf32> -> vector<2x1024xf32>
    %cst_4 = arith.constant 0.000000e+00 : f32
    %7 = vector.broadcast %cst_4 : f32 to vector<2x1024xf32>
    %8 = arith.maximumf %6, %7 : vector<2x1024xf32>
    %c0_5 = arith.constant 0 : index
    %c0_6 = arith.constant 0 : index
    %9 = vector.load %arg15[%c0_5, %c0_6] : memref<2x1024xf32, #tpu.memory_space<vmem>>, vector<2x1024xf32>
    %10 = arith.truncf %8 : vector<2x1024xf32> to vector<2x1024xbf16>
    %c0_7 = arith.constant 0 : index
    %c0_8 = arith.constant 0 : index
    %11 = vector.load %arg10[%c0_7, %c0_8] : memref<1024x1024xbf16, #tpu.memory_space<vmem>>, vector<1024x1024xbf16>
    %cst_9 = arith.constant dense<0.000000e+00> : vector<2x1024xf32>
    %12 = tpu.matmul %10, %11, %cst_9 {dimension_numbers = #tpu.dot_dimension_numbers<[1], [0], [0], [1], [0, 0, 1, 1], [], []>} : vector<2x1024xbf16>, vector<1024x1024xbf16>, vector<2x1024xf32> -> vector<2x1024xf32>
    %13 = arith.addf %9, %12 : vector<2x1024xf32>
    %c0_10 = arith.constant 0 : index
    %c0_11 = arith.constant 0 : index
    %14 = vector.load %arg15[%c0_10, %c0_11] : memref<2x1024xf32, #tpu.memory_space<vmem>>, vector<2x1024xf32>
    tpu.vector_store %arg15[%c0_10, %c0_11], %13 {strides = array<i32>} : memref<2x1024xf32, #tpu.memory_space<vmem>>, vector<2x1024xf32>,
    %c0_i32_12 = arith.constant 0 : i32
    %15 = arith.cmpi eq, %arg1, %c0_i32_12 : i32
    %16 = arith.extui %15 : i1 to i32
    %c0_i32_13 = arith.constant 0 : i32
    %17 = arith.cmpi ne, %16, %c0_i32_13 : i32
    scf.if %17 {
      %c0_14 = arith.constant 0 : index
      %c0_15 = arith.constant 0 : index
      %18 = vector.load %arg2[%c0_14, %c0_15] : memref<2x208xf32, #tpu.memory_space<vmem>>, vector<2x208xf32>
      %c0_16 = arith.constant 0 : index
      %c0_17 = arith.constant 0 : index
      %19 = vector.load %arg4[%c0_16, %c0_17] : memref<208x23xf32, #tpu.memory_space<vmem>>, vector<208x23xf32>
      %cst_18 = arith.constant dense<0.000000e+00> : vector<2x23xf32>
      %20 = tpu.matmul %18, %19, %cst_18 {dimension_numbers = #tpu.dot_dimension_numbers<[1], [0], [0], [1], [0, 0, 1, 1], [], []>} : vector<2x208xf32>, vector<208x23xf32>, vector<2x23xf32> -> vector<2x23xf32>
      %c0_19 = arith.constant 0 : index
      %c0_20 = arith.constant 0 : index
      %21 = vector.load %arg3[%c0_19, %c0_20] : memref<2x10xf32, #tpu.memory_space<vmem>>, vector<2x10xf32>
      %c0_21 = arith.constant 0 : index
      %c0_22 = arith.constant 0 : index
      %22 = vector.load %arg5[%c0_21, %c0_22] : memref<10x5xf32, #tpu.memory_space<vmem>>, vector<10x5xf32>
      %cst_23 = arith.constant dense<0.000000e+00> : vector<2x5xf32>
      %23 = tpu.matmul %21, %22, %cst_23 {dimension_numbers = #tpu.dot_dimension_numbers<[1], [0], [0], [1], [0, 0, 1, 1], [], []>} : vector<2x10xf32>, vector<10x5xf32>, vector<2x5xf32> -> vector<2x5xf32>
      %c0_24 = arith.constant 0 : index
      %c0_25 = arith.constant 0 : index
      %24 = vector.load %arg6[%c0_24, %c0_25] : memref<1x5xf32, #tpu.memory_space<vmem>>, vector<1x5xf32>
      %25 = vector.broadcast %24 : vector<1x5xf32> to vector<2x5xf32>
      %26 = arith.addf %23, %25 : vector<2x5xf32>
      %cst_26 = arith.constant 0.000000e+00 : f32
      %27 = vector.broadcast %cst_26 : f32 to vector<2x5xf32>
      %28 = arith.maximumf %26, %27 : vector<2x5xf32>
      %c0_27 = arith.constant 0 : index
      %c0_28 = arith.constant 0 : index
      %29 = vector.load %arg7[%c0_27, %c0_28] : memref<5x1xf32, #tpu.memory_space<vmem>>, vector<5x1xf32>
      %cst_29 = arith.constant dense<0.000000e+00> : vector<2x1xf32>
      %30 = tpu.matmul %28, %29, %cst_29 {dimension_numbers = #tpu.dot_dimension_numbers<[1], [0], [0], [1], [0, 0, 1, 1], [], []>} : vector<2x5xf32>, vector<5x1xf32>, vector<2x1xf32> -> vector<2x1xf32>
      %c0_30 = arith.constant 0 : index
      %c0_31 = arith.constant 0 : index
      %31 = vector.load %arg8[%c0_30, %c0_31] : memref<1x1xf32, #tpu.memory_space<vmem>>, vector<1x1xf32>
      %32 = vector.broadcast %31 : vector<1x1xf32> to vector<2x1xf32>
      %33 = arith.addf %30, %32 : vector<2x1xf32>
      %c0_32 = arith.constant 0 : index
      %c0_33 = arith.constant 0 : index
      %34 = vector.load %arg15[%c0_32, %c0_33] : memref<2x1024xf32, #tpu.memory_space<vmem>>, vector<2x1024xf32>
      %c0_34 = arith.constant 0 : index
      %c0_35 = arith.constant 0 : index
      %35 = vector.load %arg11[%c0_34, %c0_35] : memref<1x1024xf32, #tpu.memory_space<vmem>>, vector<1x1024xf32>
      %36 = vector.broadcast %35 : vector<1x1024xf32> to vector<2x1024xf32>
      %37 = arith.addf %34, %36 : vector<2x1024xf32>
      %cst_36 = arith.constant 0.000000e+00 : f32
      %38 = vector.broadcast %cst_36 : f32 to vector<2x1024xf32>
      %39 = arith.maximumf %37, %38 : vector<2x1024xf32>
      %c0_37 = arith.constant 0 : index
      %c0_38 = arith.constant 0 : index
      %40 = vector.load %arg12[%c0_37, %c0_38] : memref<1x1024xf32, #tpu.memory_space<vmem>>, vector<1x1024xf32>
      %41 = vector.broadcast %40 : vector<1x1024xf32> to vector<2x1024xf32>
      %42 = arith.mulf %39, %41 : vector<2x1024xf32>
      %cst_39 = arith.constant dense<0.000000e+00> : vector<2xf32>
      %43 = vector.multi_reduction <add>, %42, %cst_39 [1] : vector<2x1024xf32> to vector<2xf32>
      %44 = vector.shape_cast %43 : vector<2xf32> to vector<2x1xf32>
      %c0_40 = arith.constant 0 : index
      %c0_41 = arith.constant 0 : index
      %45 = vector.load %arg13[%c0_40, %c0_41] : memref<1x1xf32, #tpu.memory_space<vmem>>, vector<1x1xf32>
      %46 = vector.broadcast %45 : vector<1x1xf32> to vector<2x1xf32>
      %47 = arith.addf %44, %46 : vector<2x1xf32>
      %c0_42 = arith.constant 0 : index
      %c0_43 = arith.constant 0 : index
      %48 = vector.load %arg14[%c0_42, %c0_43] : memref<2x25xf32, #tpu.memory_space<vmem>>, vector<2x23xf32>
      tpu.vector_store %arg14[%c0_42, %c0_43], %20 {strides = array<i32>} : memref<2x25xf32, #tpu.memory_space<vmem>>, vector<2x23xf32>,
      %c0_44 = arith.constant 0 : index
      %c23 = arith.constant 23 : index
      %49 = vector.load %arg14[%c0_44, %c23] : memref<2x25xf32, #tpu.memory_space<vmem>>, vector<2x1xf32>
      tpu.vector_store %arg14[%c0_44, %c23], %47 {strides = array<i32>} : memref<2x25xf32, #tpu.memory_space<vmem>>, vector<2x1xf32>,
      %c0_45 = arith.constant 0 : index
      %c24 = arith.constant 24 : index
      %50 = vector.load %arg14[%c0_45, %c24] : memref<2x25xf32, #tpu.memory_space<vmem>>, vector<2x1xf32>
      tpu.vector_store %arg14[%c0_45, %c24], %33 {strides = array<i32>} : memref<2x25xf32, #tpu.memory_space<vmem>>, vector<2x1xf32>,
    } else {
    }
    return
  }
  func.func @transform_0(%arg0: i32, %arg1: i32) -> (i32, i32) {
    %c0_i32 = arith.constant 0 : i32
    %c0_i32_0 = arith.constant 0 : i32
    return %arg0, %c0_i32 : i32, i32
  }
  func.func @transform_1(%arg0: i32, %arg1: i32) -> (i32, i32) {
    %c0_i32 = arith.constant 0 : i32
    %c0_i32_0 = arith.constant 0 : i32
    return %arg0, %c0_i32 : i32, i32
  }
  func.func @transform_2(%arg0: i32, %arg1: i32) -> (i32, i32) {
    %c0_i32 = arith.constant 0 : i32
    %c0_i32_0 = arith.constant 0 : i32
    %c0_i32_1 = arith.constant 0 : i32
    return %c0_i32, %c0_i32_0 : i32, i32
  }
  func.func @transform_3(%arg0: i32, %arg1: i32) -> (i32, i32) {
    %c0_i32 = arith.constant 0 : i32
    %c0_i32_0 = arith.constant 0 : i32
    %c0_i32_1 = arith.constant 0 : i32
    return %c0_i32, %c0_i32_0 : i32, i32
  }
  func.func @transform_4(%arg0: i32, %arg1: i32) -> (i32, i32) {
    %c0_i32 = arith.constant 0 : i32
    %c0_i32_0 = arith.constant 0 : i32
    %c0_i32_1 = arith.constant 0 : i32
    return %c0_i32, %c0_i32_0 : i32, i32
  }
  func.func @transform_5(%arg0: i32, %arg1: i32) -> (i32, i32) {
    %c0_i32 = arith.constant 0 : i32
    %c0_i32_0 = arith.constant 0 : i32
    %c0_i32_1 = arith.constant 0 : i32
    return %c0_i32, %c0_i32_0 : i32, i32
  }
  func.func @transform_6(%arg0: i32, %arg1: i32) -> (i32, i32) {
    %c0_i32 = arith.constant 0 : i32
    %c0_i32_0 = arith.constant 0 : i32
    %c0_i32_1 = arith.constant 0 : i32
    return %c0_i32, %c0_i32_0 : i32, i32
  }
  func.func @transform_7(%arg0: i32, %arg1: i32) -> (i32, i32) {
    %c0_i32 = arith.constant 0 : i32
    %c0_i32_0 = arith.constant 0 : i32
    return %c0_i32, %arg1 : i32, i32
  }
  func.func @transform_8(%arg0: i32, %arg1: i32) -> (i32, i32) {
    %c0_i32 = arith.constant 0 : i32
    %c0_i32_0 = arith.constant 0 : i32
    return %arg1, %c0_i32 : i32, i32
  }
  func.func @transform_9(%arg0: i32, %arg1: i32) -> (i32, i32) {
    %c0_i32 = arith.constant 0 : i32
    %c0_i32_0 = arith.constant 0 : i32
    %c0_i32_1 = arith.constant 0 : i32
    return %c0_i32, %c0_i32_0 : i32, i32
  }
  func.func @transform_10(%arg0: i32, %arg1: i32) -> (i32, i32) {
    %c0_i32 = arith.constant 0 : i32
    %c0_i32_0 = arith.constant 0 : i32
    %c0_i32_1 = arith.constant 0 : i32
    return %c0_i32, %c0_i32_0 : i32, i32
  }
  func.func @transform_11(%arg0: i32, %arg1: i32) -> (i32, i32) {
    %c0_i32 = arith.constant 0 : i32
    %c0_i32_0 = arith.constant 0 : i32
    %c0_i32_1 = arith.constant 0 : i32
    return %c0_i32, %c0_i32_0 : i32, i32
  }
  func.func @transform_12(%arg0: i32, %arg1: i32) -> (i32, i32) {
    %c0_i32 = arith.constant 0 : i32
    %c0_i32_0 = arith.constant 0 : i32
    return %arg0, %c0_i32 : i32, i32
  }
}

</mosaic_0001>

<llo_original>
// kernel: _lambda_.1
$region0: #{_lambda_.1}
  #allocation0 [shape = 'u32[]', space=smem, size = 0x4, offset = 0x4, fixed_abs, tag = 'smem constant byte address 0x4 - core index']
  #allocation1 [shape = 'u32[72,128]{1,0:T(1,128)}', space=vmem, size = 0x9000, scoped, tag = 'internal scratch']
  #allocation2 [shape = 'f32[2,1024]{1,0:T(2,128)}', space=vmem, size = 0x2000, scoped, tag = 'scratch operand']
  #allocation3 [shape = 'f32[1,1]{1,0:T(1,128)S(1)}', space=vmem, size = 0x200, scoped, tag = 'scoped memory for _lambda_.1']
  #allocation4 [shape = 'f32[1,1]{1,0:T(1,128)S(1)}', space=vmem, size = 0x200, scoped, tag = 'scoped memory for _lambda_.1']
  %s0 = inlined_call_operand.vmem [shape: f32[2,208], index: 0, kind: input, shape index: {}]
  %s1 = inlined_call_operand.hbm [shape: f32[2,10], index: 1, kind: input, shape index: {}]
  %s2 = inlined_call_operand.hbm [shape: f32[208,23], index: 2, kind: input, shape index: {}]
  %s3 = inlined_call_operand.hbm [shape: f32[10,5], index: 3, kind: input, shape index: {}]
  %s4 = inlined_call_operand.hbm [shape: f32[1,5], index: 4, kind: input, shape index: {}]
  %s5 = inlined_call_operand.hbm [shape: f32[5,1], index: 5, kind: input, shape index: {}]
  %s6 = inlined_call_operand.<no memory space> [shape: f32[1,1], index: 6, kind: input, shape index: {}]
  %s7 = inlined_call_operand.hbm [shape: bf16[208,1024], index: 7, kind: input, shape index: {}]
  %s8 = inlined_call_operand.hbm [shape: bf16[1024,1024], index: 8, kind: input, shape index: {}]
  %s9 = inlined_call_operand.hbm [shape: f32[1,1024], index: 9, kind: input, shape index: {}]
  %s10 = inlined_call_operand.hbm [shape: f32[1,1024], index: 10, kind: input, shape index: {}]
  %s11 = inlined_call_operand.<no memory space> [shape: f32[1,1], index: 11, kind: input, shape index: {}]
  %s12 = inlined_call_operand.hbm [shape: f32[2,25], index: 12, kind: output, shape index: {}]
  %s13 = sld [smem:[#allocation0]]
  $region102: #{_lambda_.1} parent=0
    _
  %s15 = ssub.s32 1, %s13
  %s16 = scalar_select 0, %s15, %s13
  %v17 = vstv %s6
  %18 = vst [vmem:[#allocation3] sm:$0x1] %v17
  %v19 = vstv %s11
  %20 = vst [vmem:[#allocation4] sm:$0x1] %v19
  $region1: #{_lambda_.1} parent=0
    #allocation5 [shape = 'u8[1024]{0}', space=vmem, size = 0x400, scoped, tag = 'input window, operand 1, single buffered']
    #allocation6 [shape = 's32[1]{0}', space=sflag, size = 0x4, scoped, tag = 'scoped memory for _lambda_.1']
    #allocation7 [shape = 's32[1]{0}', space=sflag, size = 0x4, scoped, tag = 'scoped memory for _lambda_.1']
    #allocation8 [shape = 'u8[106496]{0}', space=vmem, size = 0x1a000, scoped, tag = 'input window, operand 2, single buffered']
    #allocation9 [shape = 's32[1]{0}', space=sflag, size = 0x4, scoped, tag = 'scoped memory for _lambda_.1']
    #allocation10 [shape = 'u8[8192]{0}', space=vmem, size = 0x2000, scoped, tag = 'input window, operand 3, single buffered']
    #allocation11 [shape = 'u8[512]{0}', space=vmem, size = 0x400, scoped, tag = 'input window, operand 4, single buffered']
    #allocation12 [shape = 's32[1]{0}', space=sflag, size = 0x4, scoped, tag = 'scoped memory for _lambda_.1']
    #allocation13 [shape = 'u8[4096]{0}', space=vmem, size = 0x1000, scoped, tag = 'input window, operand 5, single buffered']
    #allocation14 [shape = 'u8[425984]{0}', space=vmem, size = 0x68000, scoped, tag = 'input window, operand 7, single buffered']
    #allocation15 [shape = 's32[1]{0}', space=sflag, size = 0x4, scoped, tag = 'scoped memory for _lambda_.1']
    #allocation16 [shape = 'u8[2097152]{0}', space=vmem, size = 0x200000, scoped, tag = 'input window, operand 8, single buffered']
    #allocation17 [shape = 'u8[4096]{0}', space=vmem, size = 0x1000, scoped, tag = 'input window, operand 9, single buffered']
    #allocation18 [shape = 's32[1]{0}', space=sflag, size = 0x4, scoped, tag = 'scoped memory for _lambda_.1']
    #allocation19 [shape = 'u8[4096]{0}', space=vmem, size = 0x1000, scoped, tag = 'input window, operand 10, single buffered']
    #allocation20 [shape = 'u8[1024]{0}', space=vmem, size = 0x400, scoped, tag = 'output window, operand 0, single buffered']
    %21 = vsyncpa [#allocation6], 0
    %22 = vsyncpa [#allocation9], 0
    %23 = vsyncpa [#allocation12], 0
    %24 = vsyncpa [#allocation15], 0
    %25 = vsyncpa [#allocation18], 0
    %26 = vsyncpa [#allocation7], 0
    // Predicated region
    $region2: #{_lambda_.1} parent=1 // pred_check
      _
    $region3: #{_lambda_.1} parent=1 // pred_check_branch
      %28 = sbr.rel (0) target = $region5
    $region4: #{_lambda_.1} parent=1 // pred_region
      _
    $region5: #{_lambda_.1} parent=1 // pred_fallthru
      _
    // Predicated region
    $region6: #{_lambda_.1} parent=1 // pred_check
      _
    $region7: #{_lambda_.1} parent=1 // pred_check_branch
      %30 = sbr.rel (0) target = $region9
    $region8: #{_lambda_.1} parent=1 // pred_region
      %32 = vsyncadd [#allocation6], 0
      %s34 = sshll.u32 %s1, 4
      %s35 = int_to_ptr.hbm [resolvable:$true] %s34
      %s36 = sshll.u32 [#allocation5], 4
      %s37 = int_to_ptr.vmem [resolvable:$true] %s36
      %39 = dma.hbm_to_vmem [thread:$0]  %s35, 32, %s37, [#allocation6]
    $region9: #{_lambda_.1} parent=1 // pred_fallthru
      _
    // Predicated region
    $region10: #{_lambda_.1} parent=1 // pred_check
      _
    $region11: #{_lambda_.1} parent=1 // pred_check_branch
      %41 = sbr.rel (0) target = $region13
    $region12: #{_lambda_.1} parent=1 // pred_region
      %43 = vsyncadd [#allocation9], 0
      %s44 = sshll.u32 %s2, 4
      %s45 = int_to_ptr.hbm [resolvable:$true] %s44
      %s46 = sshll.u32 [#allocation8], 4
      %s47 = int_to_ptr.vmem [resolvable:$true] %s46
      %52 = dma.hbm_to_vmem [thread:$0]  %s45, 3328, %s47, [#allocation9], 128, 128, 8
    $region13: #{_lambda_.1} parent=1 // pred_fallthru
      _
    // Predicated region
    $region14: #{_lambda_.1} parent=1 // pred_check
      _
    $region15: #{_lambda_.1} parent=1 // pred_check_branch
      %54 = sbr.rel (0) target = $region17
    $region16: #{_lambda_.1} parent=1 // pred_region
      %56 = vsyncadd [#allocation9], 0
      %s57 = sshll.u32 %s3, 4
      %s58 = int_to_ptr.hbm [resolvable:$true] %s57
      %s59 = sshll.u32 [#allocation10], 4
      %s60 = int_to_ptr.vmem [resolvable:$true] %s59
      %65 = dma.hbm_to_vmem [thread:$0]  %s58, 256, %s60, [#allocation9], 128, 128, 8
    $region17: #{_lambda_.1} parent=1 // pred_fallthru
      _
    // Predicated region
    $region18: #{_lambda_.1} parent=1 // pred_check
      _
    $region19: #{_lambda_.1} parent=1 // pred_check_branch
      %67 = sbr.rel (0) target = $region21
    $region20: #{_lambda_.1} parent=1 // pred_region
      %69 = vsyncadd [#allocation12], 0
      %s71 = sshll.u32 %s4, 4
      %s72 = int_to_ptr.hbm [resolvable:$true] %s71
      %s73 = sshll.u32 [#allocation11], 4
      %s74 = int_to_ptr.vmem [resolvable:$true] %s73
      %76 = dma.hbm_to_vmem [thread:$0]  %s72, 16, %s74, [#allocation12]
    $region21: #{_lambda_.1} parent=1 // pred_fallthru
      _
    // Predicated region
    $region22: #{_lambda_.1} parent=1 // pred_check
      _
    $region23: #{_lambda_.1} parent=1 // pred_check_branch
      %78 = sbr.rel (0) target = $region25
    $region24: #{_lambda_.1} parent=1 // pred_region
      %80 = vsyncadd [#allocation12], 0
      %s82 = sshll.u32 %s5, 4
      %s83 = int_to_ptr.hbm [resolvable:$true] %s82
      %s84 = sshll.u32 [#allocation13], 4
      %s85 = int_to_ptr.vmem [resolvable:$true] %s84
      %87 = dma.hbm_to_vmem [thread:$0]  %s83, 128, %s85, [#allocation12]
    $region25: #{_lambda_.1} parent=1 // pred_fallthru
      _
    // Predicated region
    $region26: #{_lambda_.1} parent=1 // pred_check
      _
    $region27: #{_lambda_.1} parent=1 // pred_check_branch
      %89 = sbr.rel (0) target = $region29
    $region28: #{_lambda_.1} parent=1 // pred_region
      _
    $region29: #{_lambda_.1} parent=1 // pred_fallthru
      _
    // Predicated region
    $region30: #{_lambda_.1} parent=1 // pred_check
      _
    $region31: #{_lambda_.1} parent=1 // pred_check_branch
      %91 = sbr.rel (0) target = $region33
    $region32: #{_lambda_.1} parent=1 // pred_region
      %93 = vsyncadd [#allocation15], 0
      %s94 = sshll.u32 %s7, 4
      %s95 = int_to_ptr.hbm [resolvable:$true] %s94
      %s96 = sshll.u32 [#allocation14], 4
      %s97 = int_to_ptr.vmem [resolvable:$true] %s96
      %102 = dma.hbm_to_vmem [thread:$0]  %s95, 13312, %s97, [#allocation15], 512, 512, 32
    $region33: #{_lambda_.1} parent=1 // pred_fallthru
      _
    // Predicated region
    $region34: #{_lambda_.1} parent=1 // pred_check
      _
    $region35: #{_lambda_.1} parent=1 // pred_check_branch
      %104 = sbr.rel (0) target = $region37
    $region36: #{_lambda_.1} parent=1 // pred_region
      %106 = vsyncadd [#allocation15], 0
      %s107 = sshll.u32 %s8, 4
      %s108 = int_to_ptr.hbm [resolvable:$true] %s107
      %s109 = sshll.u32 [#allocation16], 4
      %s110 = int_to_ptr.vmem [resolvable:$true] %s109
      %115 = dma.hbm_to_vmem [thread:$0]  %s108, 65536, %s110, [#allocation15], 512, 512, 32
    $region37: #{_lambda_.1} parent=1 // pred_fallthru
      _
    // Predicated region
    $region38: #{_lambda_.1} parent=1 // pred_check
      _
    $region39: #{_lambda_.1} parent=1 // pred_check_branch
      %117 = sbr.rel (0) target = $region41
    $region40: #{_lambda_.1} parent=1 // pred_region
      %119 = vsyncadd [#allocation18], 0
      %s121 = sshll.u32 %s9, 4
      %s122 = int_to_ptr.hbm [resolvable:$true] %s121
      %s123 = sshll.u32 [#allocation17], 4
      %s124 = int_to_ptr.vmem [resolvable:$true] %s123
      %126 = dma.hbm_to_vmem [thread:$0]  %s122, 128, %s124, [#allocation18]
    $region41: #{_lambda_.1} parent=1 // pred_fallthru
      _
    // Predicated region
    $region42: #{_lambda_.1} parent=1 // pred_check
      _
    $region43: #{_lambda_.1} parent=1 // pred_check_branch
      %128 = sbr.rel (0) target = $region45
    $region44: #{_lambda_.1} parent=1 // pred_region
      %130 = vsyncadd [#allocation18], 0
      %s132 = sshll.u32 %s10, 4
      %s133 = int_to_ptr.hbm [resolvable:$true] %s132
      %s134 = sshll.u32 [#allocation19], 4
      %s135 = int_to_ptr.vmem [resolvable:$true] %s134
      %137 = dma.hbm_to_vmem [thread:$0]  %s133, 128, %s135, [#allocation18]
    $region45: #{_lambda_.1} parent=1 // pred_fallthru
      _
    // Predicated region
    $region46: #{_lambda_.1} parent=1 // pred_check
      _
    $region47: #{_lambda_.1} parent=1 // pred_check_branch
      %139 = sbr.rel (0) target = $region49
    $region48: #{_lambda_.1} parent=1 // pred_region
      _
    $region49: #{_lambda_.1} parent=1 // pred_fallthru
      _
    // Predicated region
    $region50: #{_lambda_.1} parent=1 // pred_check
      _
    $region51: #{_lambda_.1} parent=1 // pred_check_branch
      %141 = sbr.rel (0) target = $region53
    $region52: #{_lambda_.1} parent=1 // pred_region
      %143 = dma.done [#allocation6], 32
    $region53: #{_lambda_.1} parent=1 // pred_fallthru
      _
    // Predicated region
    $region54: #{_lambda_.1} parent=1 // pred_check
      _
    $region55: #{_lambda_.1} parent=1 // pred_check_branch
      %145 = sbr.rel (0) target = $region57
    $region56: #{_lambda_.1} parent=1 // pred_region
      %147 = dma.done [#allocation9], 3328
    $region57: #{_lambda_.1} parent=1 // pred_fallthru
      _
    // Predicated region
    $region58: #{_lambda_.1} parent=1 // pred_check
      _
    $region59: #{_lambda_.1} parent=1 // pred_check_branch
      %149 = sbr.rel (0) target = $region61
    $region60: #{_lambda_.1} parent=1 // pred_region
      %151 = dma.done [#allocation9], 256
    $region61: #{_lambda_.1} parent=1 // pred_fallthru
      _
    // Predicated region
    $region62: #{_lambda_.1} parent=1 // pred_check
      _
    $region63: #{_lambda_.1} parent=1 // pred_check_branch
      %153 = sbr.rel (0) target = $region65
    $region64: #{_lambda_.1} parent=1 // pred_region
      %155 = dma.done [#allocation12], 16
    $region65: #{_lambda_.1} parent=1 // pred_fallthru
      _
    // Predicated region
    $region66: #{_lambda_.1} parent=1 // pred_check
      _
    $region67: #{_lambda_.1} parent=1 // pred_check_branch
      %157 = sbr.rel (0) target = $region69
    $region68: #{_lambda_.1} parent=1 // pred_region
      %159 = dma.done [#allocation12], 128
    $region69: #{_lambda_.1} parent=1 // pred_fallthru
      _
    // Predicated region
    $region70: #{_lambda_.1} parent=1 // pred_check
      _
    $region71: #{_lambda_.1} parent=1 // pred_check_branch
      %161 = sbr.rel (0) target = $region73
    $region72: #{_lambda_.1} parent=1 // pred_region
      %163 = dma.done [#allocation15], 13312
    $region73: #{_lambda_.1} parent=1 // pred_fallthru
      _
    // Predicated region
    $region74: #{_lambda_.1} parent=1 // pred_check
      _
    $region75: #{_lambda_.1} parent=1 // pred_check_branch
      %165 = sbr.rel (0) target = $region77
    $region76: #{_lambda_.1} parent=1 // pred_region
      %167 = dma.done [#allocation15], 65536
    $region77: #{_lambda_.1} parent=1 // pred_fallthru
      _
    // Predicated region
    $region78: #{_lambda_.1} parent=1 // pred_check
      _
    $region79: #{_lambda_.1} parent=1 // pred_check_branch
      %169 = sbr.rel (0) target = $region81
    $region80: #{_lambda_.1} parent=1 // pred_region
      %171 = dma.done [#allocation18], 128
    $region81: #{_lambda_.1} parent=1 // pred_fallthru
      _
    // Predicated region
    $region82: #{_lambda_.1} parent=1 // pred_check
      _
    $region83: #{_lambda_.1} parent=1 // pred_check_branch
      %173 = sbr.rel (0) target = $region85
    $region84: #{_lambda_.1} parent=1 // pred_region
      %175 = dma.done [#allocation18], 128
    $region85: #{_lambda_.1} parent=1 // pred_fallthru
      _
    %p177 = scmp.eq.s32.totalorder 0, 0
    // Predicated region
    $region86: #{_lambda_.1} parent=1 // pred_check
      %p178 = pneg %p177
    $region87: #{_lambda_.1} parent=1 // pred_check_branch
      %180 = sbr.rel (%p178) target = $region89
    $region88: #{_lambda_.1} parent=1 // pred_region
      %181 = vst [vmem:[#allocation2] sm:$0xff] 0.0
      %182 = vst [vmem:[#allocation2 + $0x8] sm:$0xff] 0.0
    $region89: #{_lambda_.1} parent=1 // pred_fallthru
      _
    %v183 = vld [vmem:[%s0] sm:$0xf]
    %185 = vst [vmem:[#allocation1] ss:$4 sm:$0xff] %v183
    %v186 = vld.sshfl [vmem:[#allocation1] sm:$0xff pattern:$0x73625140]
    %v187 = vld.sshfl [vmem:[#allocation1 + $0x8] sm:$0xff pattern:$0x73625140]
    %v190 = vpack.c.bf16 %v186, %v186
    %v191 = vpack.c.bf16 %v187, %v187
    %v192 = vld [vmem:[#allocation14] sm:$0xff]
    %v193 = vld [vmem:[#allocation14 + $0x8] sm:$0xff]
    %v194 = vld [vmem:[#allocation14 + $0x10] sm:$0xff]
    %v195 = vld [vmem:[#allocation14 + $0x18] sm:$0xff]
    %v196 = vld [vmem:[#allocation14 + $0x20] sm:$0xff]
    %v197 = vld [vmem:[#allocation14 + $0x28] sm:$0xff]
    %v198 = vld [vmem:[#allocation14 + $0x30] sm:$0xff]
    %v199 = vld [vmem:[#allocation14 + $0x38] sm:$0xff]
    %v200 = vld [vmem:[#allocation14 + $0x40] sm:$0xff]
    %v201 = vld [vmem:[#allocation14 + $0x48] sm:$0xff]
    %v202 = vld [vmem:[#allocation14 + $0x50] sm:$0xff]
    %v203 = vld [vmem:[#allocation14 + $0x58] sm:$0xff]
    %v204 = vld [vmem:[#allocation14 + $0x60] sm:$0xff]
    %v205 = vld [vmem:[#allocation14 + $0x68] sm:$0xff]
    %v206 = vld [vmem:[#allocation14 + $0x70] sm:$0xff]
    %v207 = vld [vmem:[#allocation14 + $0x78] sm:$0xff]
    %v208 = vld [vmem:[#allocation14 + $0x80] sm:$0xff]
    %v209 = vld [vmem:[#allocation14 + $0x88] sm:$0xff]
    %v210 = vld [vmem:[#allocation14 + $0x90] sm:$0xff]
    %v211 = vld [vmem:[#allocation14 + $0x98] sm:$0xff]
    %v212 = vld [vmem:[#allocation14 + $0xa0] sm:$0xff]
    %v213 = vld [vmem:[#allocation14 + $0xa8] sm:$0xff]
    %v214 = vld [vmem:[#allocation14 + $0xb0] sm:$0xff]
    %v215 = vld [vmem:[#allocation14 + $0xb8] sm:$0xff]
    %v216 = vld [vmem:[#allocation14 + $0xc0] sm:$0xff]
    %v217 = vld [vmem:[#allocation14 + $0xc8] sm:$0xff]
    %v218 = vld [vmem:[#allocation14 + $0xd0] sm:$0xff]
    %v219 = vld [vmem:[#allocation14 + $0xd8] sm:$0xff]
    %v220 = vld [vmem:[#allocation14 + $0xe0] sm:$0xff]
    %v221 = vld [vmem:[#allocation14 + $0xe8] sm:$0xff]
    %v222 = vld [vmem:[#allocation14 + $0xf0] sm:$0xff]
    %v223 = vld [vmem:[#allocation14 + $0xf8] sm:$0xff]
    %v224 = vld [vmem:[#allocation14 + $0x100] sm:$0xff]
    %v225 = vld [vmem:[#allocation14 + $0x108] sm:$0xff]
    %v226 = vld [vmem:[#allocation14 + $0x110] sm:$0xff]
    %v227 = vld [vmem:[#allocation14 + $0x118] sm:$0xff]
    %v228 = vld [vmem:[#allocation14 + $0x120] sm:$0xff]
    %v229 = vld [vmem:[#allocation14 + $0x128] sm:$0xff]
    %v230 = vld [vmem:[#allocation14 + $0x130] sm:$0xff]
    %v231 = vld [vmem:[#allocation14 + $0x138] sm:$0xff]
    %v232 = vld [vmem:[#allocation14 + $0x140] sm:$0xff]
    %v233 = vld [vmem:[#allocation14 + $0x148] sm:$0xff]
    %v234 = vld [vmem:[#allocation14 + $0x150] sm:$0xff]
    %v235 = vld [vmem:[#allocation14 + $0x158] sm:$0xff]
    %v236 = vld [vmem:[#allocation14 + $0x160] sm:$0xff]
    %v237 = vld [vmem:[#allocation14 + $0x168] sm:$0xff]
    %v238 = vld [vmem:[#allocation14 + $0x170] sm:$0xff]
    %v239 = vld [vmem:[#allocation14 + $0x178] sm:$0xff]
    %v240 = vld [vmem:[#allocation14 + $0x180] sm:$0xff]
    %v241 = vld [vmem:[#allocation14 + $0x188] sm:$0xff]
    %v242 = vld [vmem:[#allocation14 + $0x190] sm:$0xff]
    %v243 = vld [vmem:[#allocation14 + $0x198] sm:$0xff]
    %v244 = vld [vmem:[#allocation14 + $0x1a0] sm:$0xff]
    %v245 = vld [vmem:[#allocation14 + $0x1a8] sm:$0xff]
    %v246 = vld [vmem:[#allocation14 + $0x1b0] sm:$0xff]
    %v247 = vld [vmem:[#allocation14 + $0x1b8] sm:$0xff]
    %v248 = vld [vmem:[#allocation14 + $0x1c0] sm:$0xff]
    %v249 = vld [vmem:[#allocation14 + $0x1c8] sm:$0xff]
    %v250 = vld [vmem:[#allocation14 + $0x1d0] sm:$0xff]
    %v251 = vld [vmem:[#allocation14 + $0x1d8] sm:$0xff]
    %v252 = vld [vmem:[#allocation14 + $0x1e0] sm:$0xff]
    %v253 = vld [vmem:[#allocation14 + $0x1e8] sm:$0xff]
    %v254 = vld [vmem:[#allocation14 + $0x1f0] sm:$0xff]
    %v255 = vld [vmem:[#allocation14 + $0x1f8] sm:$0xff]
    %v256 = vld [vmem:[#allocation14 + $0x200] sm:$0xff]
    %v257 = vld [vmem:[#allocation14 + $0x208] sm:$0xff]
    %v258 = vld [vmem:[#allocation14 + $0x210] sm:$0xff]
    %v259 = vld [vmem:[#allocation14 + $0x218] sm:$0xff]
    %v260 = vld [vmem:[#allocation14 + $0x220] sm:$0xff]
    %v261 = vld [vmem:[#allocation14 + $0x228] sm:$0xff]
    %v262 = vld [vmem:[#allocation14 + $0x230] sm:$0xff]
    %v263 = vld [vmem:[#allocation14 + $0x238] sm:$0xff]
    %v264 = vld [vmem:[#allocation14 + $0x240] sm:$0xff]
    %v265 = vld [vmem:[#allocation14 + $0x248] sm:$0xff]
    %v266 = vld [vmem:[#allocation14 + $0x250] sm:$0xff]
    %v267 = vld [vmem:[#allocation14 + $0x258] sm:$0xff]
    %v268 = vld [vmem:[#allocation14 + $0x260] sm:$0xff]
    %v269 = vld [vmem:[#allocation14 + $0x268] sm:$0xff]
    %v270 = vld [vmem:[#allocation14 + $0x270] sm:$0xff]
    %v271 = vld [vmem:[#allocation14 + $0x278] sm:$0xff]
    %v272 = vld [vmem:[#allocation14 + $0x280] sm:$0xff]
    %v273 = vld [vmem:[#allocation14 + $0x288] sm:$0xff]
    %v274 = vld [vmem:[#allocation14 + $0x290] sm:$0xff]
    %v275 = vld [vmem:[#allocation14 + $0x298] sm:$0xff]
    %v276 = vld [vmem:[#allocation14 + $0x2a0] sm:$0xff]
    %v277 = vld [vmem:[#allocation14 + $0x2a8] sm:$0xff]
    %v278 = vld [vmem:[#allocation14 + $0x2b0] sm:$0xff]
    %v279 = vld [vmem:[#allocation14 + $0x2b8] sm:$0xff]
    %v280 = vld [vmem:[#allocation14 + $0x2c0] sm:$0xff]
    %v281 = vld [vmem:[#allocation14 + $0x2c8] sm:$0xff]
    %v282 = vld [vmem:[#allocation14 + $0x2d0] sm:$0xff]
    %v283 = vld [vmem:[#allocation14 + $0x2d8] sm:$0xff]
    %v284 = vld [vmem:[#allocation14 + $0x2e0] sm:$0xff]
    %v285 = vld [vmem:[#allocation14 + $0x2e8] sm:$0xff]
    %v286 = vld [vmem:[#allocation14 + $0x2f0] sm:$0xff]
    %v287 = vld [vmem:[#allocation14 + $0x2f8] sm:$0xff]
    %v288 = vld [vmem:[#allocation14 + $0x300] sm:$0xff]
    %v289 = vld [vmem:[#allocation14 + $0x308] sm:$0xff]
    %v290 = vld [vmem:[#allocation14 + $0x310] sm:$0xff]
    %v291 = vld [vmem:[#allocation14 + $0x318] sm:$0xff]
    %v292 = vld [vmem:[#allocation14 + $0x320] sm:$0xff]
    %v293 = vld [vmem:[#allocation14 + $0x328] sm:$0xff]
    %v294 = vld [vmem:[#allocation14 + $0x330] sm:$0xff]
    %v295 = vld [vmem:[#allocation14 + $0x338] sm:$0xff]
    %v400 = vunpack.c.l.b16 %v192
    %v401 = vunpack.c.h.b16 %v192
    %v402 = vunpack.c.l.b16 %v193
    %v403 = vunpack.c.h.b16 %v193
    %v404 = vunpack.c.l.b16 %v194
    %v405 = vunpack.c.h.b16 %v194
    %v406 = vunpack.c.l.b16 %v195
    %v407 = vunpack.c.h.b16 %v195
    %v408 = vunpack.c.l.b16 %v196
    %v409 = vunpack.c.h.b16 %v196
    %v410 = vunpack.c.l.b16 %v197
    %v411 = vunpack.c.h.b16 %v197
    %v412 = vunpack.c.l.b16 %v198
    %v413 = vunpack.c.h.b16 %v198
    %v414 = vunpack.c.l.b16 %v199
    %v415 = vunpack.c.h.b16 %v199
    %v416 = vunpack.c.l.b16 %v200
    %v417 = vunpack.c.h.b16 %v200
    %v418 = vunpack.c.l.b16 %v201
    %v419 = vunpack.c.h.b16 %v201
    %v420 = vunpack.c.l.b16 %v202
    %v421 = vunpack.c.h.b16 %v202
    %v422 = vunpack.c.l.b16 %v203
    %v423 = vunpack.c.h.b16 %v203
    %v424 = vunpack.c.l.b16 %v204
    %v425 = vunpack.c.h.b16 %v204
    %v426 = vunpack.c.l.b16 %v205
    %v427 = vunpack.c.h.b16 %v205
    %v428 = vunpack.c.l.b16 %v206
    %v429 = vunpack.c.h.b16 %v206
    %v430 = vunpack.c.l.b16 %v207
    %v431 = vunpack.c.h.b16 %v207
    %v432 = vunpack.c.l.b16 %v208
    %v433 = vunpack.c.h.b16 %v208
    %v434 = vunpack.c.l.b16 %v209
    %v435 = vunpack.c.h.b16 %v209
    %v436 = vunpack.c.l.b16 %v210
    %v437 = vunpack.c.h.b16 %v210
    %v438 = vunpack.c.l.b16 %v211
    %v439 = vunpack.c.h.b16 %v211
    %v440 = vunpack.c.l.b16 %v212
    %v441 = vunpack.c.h.b16 %v212
    %v442 = vunpack.c.l.b16 %v213
    %v443 = vunpack.c.h.b16 %v213
    %v444 = vunpack.c.l.b16 %v214
    %v445 = vunpack.c.h.b16 %v214
    %v446 = vunpack.c.l.b16 %v215
    %v447 = vunpack.c.h.b16 %v215
    %v448 = vunpack.c.l.b16 %v216
    %v449 = vunpack.c.h.b16 %v216
    %v450 = vunpack.c.l.b16 %v217
    %v451 = vunpack.c.h.b16 %v217
    %v452 = vunpack.c.l.b16 %v218
    %v453 = vunpack.c.h.b16 %v218
    %v454 = vunpack.c.l.b16 %v219
    %v455 = vunpack.c.h.b16 %v219
    %v456 = vunpack.c.l.b16 %v220
    %v457 = vunpack.c.h.b16 %v220
    %v458 = vunpack.c.l.b16 %v221
    %v459 = vunpack.c.h.b16 %v221
    %v460 = vunpack.c.l.b16 %v222
    %v461 = vunpack.c.h.b16 %v222
    %v462 = vunpack.c.l.b16 %v223
    %v463 = vunpack.c.h.b16 %v223
    %v464 = vunpack.c.l.b16 %v224
    %v465 = vunpack.c.h.b16 %v224
    %v466 = vunpack.c.l.b16 %v225
    %v467 = vunpack.c.h.b16 %v225
    %v468 = vunpack.c.l.b16 %v226
    %v469 = vunpack.c.h.b16 %v226
    %v470 = vunpack.c.l.b16 %v227
    %v471 = vunpack.c.h.b16 %v227
    %v472 = vunpack.c.l.b16 %v228
    %v473 = vunpack.c.h.b16 %v228
    %v474 = vunpack.c.l.b16 %v229
    %v475 = vunpack.c.h.b16 %v229
    %v476 = vunpack.c.l.b16 %v230
    %v477 = vunpack.c.h.b16 %v230
    %v478 = vunpack.c.l.b16 %v231
    %v479 = vunpack.c.h.b16 %v231
    %v480 = vunpack.c.l.b16 %v232
    %v481 = vunpack.c.h.b16 %v232
    %v482 = vunpack.c.l.b16 %v233
    %v483 = vunpack.c.h.b16 %v233
    %v484 = vunpack.c.l.b16 %v234
    %v485 = vunpack.c.h.b16 %v234
    %v486 = vunpack.c.l.b16 %v235
    %v487 = vunpack.c.h.b16 %v235
    %v488 = vunpack.c.l.b16 %v236
    %v489 = vunpack.c.h.b16 %v236
    %v490 = vunpack.c.l.b16 %v237
    %v491 = vunpack.c.h.b16 %v237
    %v492 = vunpack.c.l.b16 %v238
    %v493 = vunpack.c.h.b16 %v238
    %v494 = vunpack.c.l.b16 %v239
    %v495 = vunpack.c.h.b16 %v239
    %v496 = vunpack.c.l.b16 %v240
    %v497 = vunpack.c.h.b16 %v240
    %v498 = vunpack.c.l.b16 %v241
    %v499 = vunpack.c.h.b16 %v241
    %v500 = vunpack.c.l.b16 %v242
    %v501 = vunpack.c.h.b16 %v242
    %v502 = vunpack.c.l.b16 %v243
    %v503 = vunpack.c.h.b16 %v243
    %v504 = vunpack.c.l.b16 %v244
    %v505 = vunpack.c.h.b16 %v244
    %v506 = vunpack.c.l.b16 %v245
    %v507 = vunpack.c.h.b16 %v245
    %v508 = vunpack.c.l.b16 %v246
    %v509 = vunpack.c.h.b16 %v246
    %v510 = vunpack.c.l.b16 %v247
    %v511 = vunpack.c.h.b16 %v247
    %v512 = vunpack.c.l.b16 %v248
    %v513 = vunpack.c.h.b16 %v248
    %v514 = vunpack.c.l.b16 %v249
    %v515 = vunpack.c.h.b16 %v249
    %v516 = vunpack.c.l.b16 %v250
    %v517 = vunpack.c.h.b16 %v250
    %v518 = vunpack.c.l.b16 %v251
    %v519 = vunpack.c.h.b16 %v251
    %v520 = vunpack.c.l.b16 %v252
    %v521 = vunpack.c.h.b16 %v252
    %v522 = vunpack.c.l.b16 %v253
    %v523 = vunpack.c.h.b16 %v253
    %v524 = vunpack.c.l.b16 %v254
    %v525 = vunpack.c.h.b16 %v254
    %v526 = vunpack.c.l.b16 %v255
    %v527 = vunpack.c.h.b16 %v255
    %v528 = vunpack.c.l.b16 %v256
    %v529 = vunpack.c.h.b16 %v256
    %v530 = vunpack.c.l.b16 %v257
    %v531 = vunpack.c.h.b16 %v257
    %v532 = vunpack.c.l.b16 %v258
    %v533 = vunpack.c.h.b16 %v258
    %v534 = vunpack.c.l.b16 %v259
    %v535 = vunpack.c.h.b16 %v259
    %v536 = vunpack.c.l.b16 %v260
    %v537 = vunpack.c.h.b16 %v260
    %v538 = vunpack.c.l.b16 %v261
    %v539 = vunpack.c.h.b16 %v261
    %v540 = vunpack.c.l.b16 %v262
    %v541 = vunpack.c.h.b16 %v262
    %v542 = vunpack.c.l.b16 %v263
    %v543 = vunpack.c.h.b16 %v263
    %v544 = vunpack.c.l.b16 %v264
    %v545 = vunpack.c.h.b16 %v264
    %v546 = vunpack.c.l.b16 %v265
    %v547 = vunpack.c.h.b16 %v265
    %v548 = vunpack.c.l.b16 %v266
    %v549 = vunpack.c.h.b16 %v266
    %v550 = vunpack.c.l.b16 %v267
    %v551 = vunpack.c.h.b16 %v267
    %v552 = vunpack.c.l.b16 %v268
    %v553 = vunpack.c.h.b16 %v268
    %v554 = vunpack.c.l.b16 %v269
    %v555 = vunpack.c.h.b16 %v269
    %v556 = vunpack.c.l.b16 %v270
    %v557 = vunpack.c.h.b16 %v270
    %v558 = vunpack.c.l.b16 %v271
    %v559 = vunpack.c.h.b16 %v271
    %v560 = vunpack.c.l.b16 %v272
    %v561 = vunpack.c.h.b16 %v272
    %v562 = vunpack.c.l.b16 %v273
    %v563 = vunpack.c.h.b16 %v273
    %v564 = vunpack.c.l.b16 %v274
    %v565 = vunpack.c.h.b16 %v274
    %v566 = vunpack.c.l.b16 %v275
    %v567 = vunpack.c.h.b16 %v275
    %v568 = vunpack.c.l.b16 %v276
    %v569 = vunpack.c.h.b16 %v276
    %v570 = vunpack.c.l.b16 %v277
    %v571 = vunpack.c.h.b16 %v277
    %v572 = vunpack.c.l.b16 %v278
    %v573 = vunpack.c.h.b16 %v278
    %v574 = vunpack.c.l.b16 %v279
    %v575 = vunpack.c.h.b16 %v279
    %v576 = vunpack.c.l.b16 %v280
    %v577 = vunpack.c.h.b16 %v280
    %v578 = vunpack.c.l.b16 %v281
    %v579 = vunpack.c.h.b16 %v281
    %v580 = vunpack.c.l.b16 %v282
    %v581 = vunpack.c.h.b16 %v282
    %v582 = vunpack.c.l.b16 %v283
    %v583 = vunpack.c.h.b16 %v283
    %v584 = vunpack.c.l.b16 %v284
    %v585 = vunpack.c.h.b16 %v284
    %v586 = vunpack.c.l.b16 %v285
    %v587 = vunpack.c.h.b16 %v285
    %v588 = vunpack.c.l.b16 %v286
    %v589 = vunpack.c.h.b16 %v286
    %v590 = vunpack.c.l.b16 %v287
    %v591 = vunpack.c.h.b16 %v287
    %v592 = vunpack.c.l.b16 %v288
    %v593 = vunpack.c.h.b16 %v288
    %v594 = vunpack.c.l.b16 %v289
    %v595 = vunpack.c.h.b16 %v289
    %v596 = vunpack.c.l.b16 %v290
    %v597 = vunpack.c.h.b16 %v290
    %v598 = vunpack.c.l.b16 %v291
    %v599 = vunpack.c.h.b16 %v291
    %v600 = vunpack.c.l.b16 %v292
    %v601 = vunpack.c.h.b16 %v292
    %v602 = vunpack.c.l.b16 %v293
    %v603 = vunpack.c.h.b16 %v293
    %v604 = vunpack.c.l.b16 %v294
    %v605 = vunpack.c.h.b16 %v294
    %v606 = vunpack.c.l.b16 %v295
    %v607 = vunpack.c.h.b16 %v295
    %v608 = vpack.c.b16 %v408, %v400
    %v609 = vpack.c.b16 %v409, %v401
    %v610 = vpack.c.b16 %v410, %v402
    %v611 = vpack.c.b16 %v411, %v403
    %v612 = vpack.c.b16 %v412, %v404
    %v613 = vpack.c.b16 %v413, %v405
    %v614 = vpack.c.b16 %v414, %v406
    %v615 = vpack.c.b16 %v415, %v407
    %v616 = vpack.c.b16 %v424, %v416
    %v617 = vpack.c.b16 %v425, %v417
    %v618 = vpack.c.b16 %v426, %v418
    %v619 = vpack.c.b16 %v427, %v419
    %v620 = vpack.c.b16 %v428, %v420
    %v621 = vpack.c.b16 %v429, %v421
    %v622 = vpack.c.b16 %v430, %v422
    %v623 = vpack.c.b16 %v431, %v423
    %v624 = vpack.c.b16 %v440, %v432
    %v625 = vpack.c.b16 %v441, %v433
    %v626 = vpack.c.b16 %v442, %v434
    %v627 = vpack.c.b16 %v443, %v435
    %v628 = vpack.c.b16 %v444, %v436
    %v629 = vpack.c.b16 %v445, %v437
    %v630 = vpack.c.b16 %v446, %v438
    %v631 = vpack.c.b16 %v447, %v439
    %v632 = vpack.c.b16 %v456, %v448
    %v633 = vpack.c.b16 %v457, %v449
    %v634 = vpack.c.b16 %v458, %v450
    %v635 = vpack.c.b16 %v459, %v451
    %v636 = vpack.c.b16 %v460, %v452
    %v637 = vpack.c.b16 %v461, %v453
    %v638 = vpack.c.b16 %v462, %v454
    %v639 = vpack.c.b16 %v463, %v455
    %v640 = vpack.c.b16 %v472, %v464
    %v641 = vpack.c.b16 %v473, %v465
    %v642 = vpack.c.b16 %v474, %v466
    %v643 = vpack.c.b16 %v475, %v467
    %v644 = vpack.c.b16 %v476, %v468
    %v645 = vpack.c.b16 %v477, %v469
    %v646 = vpack.c.b16 %v478, %v470
    %v647 = vpack.c.b16 %v479, %v471
    %v648 = vpack.c.b16 %v488, %v480
    %v649 = vpack.c.b16 %v489, %v481
    %v650 = vpack.c.b16 %v490, %v482
    %v651 = vpack.c.b16 %v491, %v483
    %v652 = vpack.c.b16 %v492, %v484
    %v653 = vpack.c.b16 %v493, %v485
    %v654 = vpack.c.b16 %v494, %v486
    %v655 = vpack.c.b16 %v495, %v487
    %v656 = vpack.c.b16 %v504, %v496
    %v657 = vpack.c.b16 %v505, %v497
    %v658 = vpack.c.b16 %v506, %v498
    %v659 = vpack.c.b16 %v507, %v499
    %v660 = vpack.c.b16 %v508, %v500
    %v661 = vpack.c.b16 %v509, %v501
    %v662 = vpack.c.b16 %v510, %v502
    %v663 = vpack.c.b16 %v511, %v503
    %v664 = vpack.c.b16 %v520, %v512
    %v665 = vpack.c.b16 %v521, %v513
    %v666 = vpack.c.b16 %v522, %v514
    %v667 = vpack.c.b16 %v523, %v515
    %v668 = vpack.c.b16 %v524, %v516
    %v669 = vpack.c.b16 %v525, %v517
    %v670 = vpack.c.b16 %v526, %v518
    %v671 = vpack.c.b16 %v527, %v519
    %v672 = vpack.c.b16 %v536, %v528
    %v673 = vpack.c.b16 %v537, %v529
    %v674 = vpack.c.b16 %v538, %v530
    %v675 = vpack.c.b16 %v539, %v531
    %v676 = vpack.c.b16 %v540, %v532
    %v677 = vpack.c.b16 %v541, %v533
    %v678 = vpack.c.b16 %v542, %v534
    %v679 = vpack.c.b16 %v543, %v535
    %v680 = vpack.c.b16 %v552, %v544
    %v681 = vpack.c.b16 %v553, %v545
    %v682 = vpack.c.b16 %v554, %v546
    %v683 = vpack.c.b16 %v555, %v547
    %v684 = vpack.c.b16 %v556, %v548
    %v685 = vpack.c.b16 %v557, %v549
    %v686 = vpack.c.b16 %v558, %v550
    %v687 = vpack.c.b16 %v559, %v551
    %v688 = vpack.c.b16 %v568, %v560
    %v689 = vpack.c.b16 %v569, %v561
    %v690 = vpack.c.b16 %v570, %v562
    %v691 = vpack.c.b16 %v571, %v563
    %v692 = vpack.c.b16 %v572, %v564
    %v693 = vpack.c.b16 %v573, %v565
    %v694 = vpack.c.b16 %v574, %v566
    %v695 = vpack.c.b16 %v575, %v567
    %v696 = vpack.c.b16 %v584, %v576
    %v697 = vpack.c.b16 %v585, %v577
    %v698 = vpack.c.b16 %v586, %v578
    %v699 = vpack.c.b16 %v587, %v579
    %v700 = vpack.c.b16 %v588, %v580
    %v701 = vpack.c.b16 %v589, %v581
    %v702 = vpack.c.b16 %v590, %v582
    %v703 = vpack.c.b16 %v591, %v583
    %v704 = vpack.c.b16 %v600, %v592
    %v705 = vpack.c.b16 %v601, %v593
    %v706 = vpack.c.b16 %v602, %v594
    %v707 = vpack.c.b16 %v603, %v595
    %v708 = vpack.c.b16 %v604, %v596
    %v709 = vpack.c.b16 %v605, %v597
    %v710 = vpack.c.b16 %v606, %v598
    %v711 = vpack.c.b16 %v607, %v599
    %vm816 = vcmask 654336
    %v818 = vsel %vm816, %v191, 0
    %820 = vmatpush.bf16.msra.mxu0 %v664
    %821 = vmatpush.bf16.msra.mxu0 %v656
    %822 = vmatpush.bf16.msra.mxu0 %v648
    %823 = vmatpush.bf16.msra.mxu0 %v640
    %824 = vmatpush.bf16.msra.mxu0 %v632
    %825 = vmatpush.bf16.msra.mxu0 %v624
    %826 = vmatpush.bf16.msra.mxu0 %v616
    %827 = vmatpush.bf16.msra.mxu0 %v608
    %828 = vmatmul.bf16.gmra.mxu0 %v190
    %v829 = vpop.f32.mrf.mxu0
    %v830 = vadd.f32 0.0, %v829
    %v831 = vpop.f32.mrf.mxu0
    %832 = vdwg.mxu0
    %833 = vmatpush.bf16.msra.mxu0 0
    %834 = vmatpush.bf16.msra.mxu0 0
    %835 = vmatpush.bf16.msra.mxu0 0
    %836 = vmatpush.bf16.msra.mxu0 %v704
    %837 = vmatpush.bf16.msra.mxu0 %v696
    %838 = vmatpush.bf16.msra.mxu0 %v688
    %839 = vmatpush.bf16.msra.mxu0 %v680
    %840 = vmatpush.bf16.msra.mxu0 %v672
    %841 = vmatmul.bf16.gmra.mxu0 %v818
    %v842 = vpop.f32.mrf.mxu0
    %v843 = vadd.f32 %v830, %v842
    %v844 = vpop.f32.mrf.mxu0
    %845 = vdwg.mxu0
    %846 = vmatpush.bf16.msra.mxu0 %v665
    %847 = vmatpush.bf16.msra.mxu0 %v657
    %848 = vmatpush.bf16.msra.mxu0 %v649
    %849 = vmatpush.bf16.msra.mxu0 %v641
    %850 = vmatpush.bf16.msra.mxu0 %v633
    %851 = vmatpush.bf16.msra.mxu0 %v625
    %852 = vmatpush.bf16.msra.mxu0 %v617
    %853 = vmatpush.bf16.msra.mxu0 %v609
    %854 = vmatmul.bf16.gmra.mxu0 %v190
    %v855 = vpop.f32.mrf.mxu0
    %v856 = vadd.f32 0.0, %v855
    %v857 = vpop.f32.mrf.mxu0
    %858 = vdwg.mxu0
    %859 = vmatpush.bf16.msra.mxu0 0
    %860 = vmatpush.bf16.msra.mxu0 0
    %861 = vmatpush.bf16.msra.mxu0 0
    %862 = vmatpush.bf16.msra.mxu0 %v705
    %863 = vmatpush.bf16.msra.mxu0 %v697
    %864 = vmatpush.bf16.msra.mxu0 %v689
    %865 = vmatpush.bf16.msra.mxu0 %v681
    %866 = vmatpush.bf16.msra.mxu0 %v673
    %867 = vmatmul.bf16.gmra.mxu0 %v818
    %v868 = vpop.f32.mrf.mxu0
    %v869 = vadd.f32 %v856, %v868
    %v870 = vpop.f32.mrf.mxu0
    %871 = vdwg.mxu0
    %872 = vmatpush.bf16.msra.mxu0 %v666
    %873 = vmatpush.bf16.msra.mxu0 %v658
    %874 = vmatpush.bf16.msra.mxu0 %v650
    %875 = vmatpush.bf16.msra.mxu0 %v642
    %876 = vmatpush.bf16.msra.mxu0 %v634
    %877 = vmatpush.bf16.msra.mxu0 %v626
    %878 = vmatpush.bf16.msra.mxu0 %v618
    %879 = vmatpush.bf16.msra.mxu0 %v610
    %880 = vmatmul.bf16.gmra.mxu0 %v190
    %v881 = vpop.f32.mrf.mxu0
    %v882 = vadd.f32 0.0, %v881
    %v883 = vpop.f32.mrf.mxu0
    %884 = vdwg.mxu0
    %885 = vmatpush.bf16.msra.mxu0 0
    %886 = vmatpush.bf16.msra.mxu0 0
    %887 = vmatpush.bf16.msra.mxu0 0
    %888 = vmatpush.bf16.msra.mxu0 %v706
    %889 = vmatpush.bf16.msra.mxu0 %v698
    %890 = vmatpush.bf16.msra.mxu0 %v690
    %891 = vmatpush.bf16.msra.mxu0 %v682
    %892 = vmatpush.bf16.msra.mxu0 %v674
    %893 = vmatmul.bf16.gmra.mxu0 %v818
    %v894 = vpop.f32.mrf.mxu0
    %v895 = vadd.f32 %v882, %v894
    %v896 = vpop.f32.mrf.mxu0
    %897 = vdwg.mxu0
    %898 = vmatpush.bf16.msra.mxu0 %v667
    %899 = vmatpush.bf16.msra.mxu0 %v659
    %900 = vmatpush.bf16.msra.mxu0 %v651
    %901 = vmatpush.bf16.msra.mxu0 %v643
    %902 = vmatpush.bf16.msra.mxu0 %v635
    %903 = vmatpush.bf16.msra.mxu0 %v627
    %904 = vmatpush.bf16.msra.mxu0 %v619
    %905 = vmatpush.bf16.msra.mxu0 %v611
    %906 = vmatmul.bf16.gmra.mxu0 %v190
    %v907 = vpop.f32.mrf.mxu0
    %v908 = vadd.f32 0.0, %v907
    %v909 = vpop.f32.mrf.mxu0
    %910 = vdwg.mxu0
    %911 = vmatpush.bf16.msra.mxu0 0
    %912 = vmatpush.bf16.msra.mxu0 0
    %913 = vmatpush.bf16.msra.mxu0 0
    %914 = vmatpush.bf16.msra.mxu0 %v707
    %915 = vmatpush.bf16.msra.mxu0 %v699
    %916 = vmatpush.bf16.msra.mxu0 %v691
    %917 = vmatpush.bf16.msra.mxu0 %v683
    %918 = vmatpush.bf16.msra.mxu0 %v675
    %919 = vmatmul.bf16.gmra.mxu0 %v818
    %v920 = vpop.f32.mrf.mxu0
    %v921 = vadd.f32 %v908, %v920
    %v922 = vpop.f32.mrf.mxu0
    %923 = vdwg.mxu0
    %924 = vmatpush.bf16.msra.mxu0 %v668
    %925 = vmatpush.bf16.msra.mxu0 %v660
    %926 = vmatpush.bf16.msra.mxu0 %v652
    %927 = vmatpush.bf16.msra.mxu0 %v644
    %928 = vmatpush.bf16.msra.mxu0 %v636
    %929 = vmatpush.bf16.msra.mxu0 %v628
    %930 = vmatpush.bf16.msra.mxu0 %v620
    %931 = vmatpush.bf16.msra.mxu0 %v612
    %932 = vmatmul.bf16.gmra.mxu0 %v190
    %v933 = vpop.f32.mrf.mxu0
    %v934 = vadd.f32 0.0, %v933
    %v935 = vpop.f32.mrf.mxu0
    %936 = vdwg.mxu0
    %937 = vmatpush.bf16.msra.mxu0 0
    %938 = vmatpush.bf16.msra.mxu0 0
    %939 = vmatpush.bf16.msra.mxu0 0
    %940 = vmatpush.bf16.msra.mxu0 %v708
    %941 = vmatpush.bf16.msra.mxu0 %v700
    %942 = vmatpush.bf16.msra.mxu0 %v692
    %943 = vmatpush.bf16.msra.mxu0 %v684
    %944 = vmatpush.bf16.msra.mxu0 %v676
    %945 = vmatmul.bf16.gmra.mxu0 %v818
    %v946 = vpop.f32.mrf.mxu0
    %v947 = vadd.f32 %v934, %v946
    %v948 = vpop.f32.mrf.mxu0
    %949 = vdwg.mxu0
    %950 = vmatpush.bf16.msra.mxu0 %v669
    %951 = vmatpush.bf16.msra.mxu0 %v661
    %952 = vmatpush.bf16.msra.mxu0 %v653
    %953 = vmatpush.bf16.msra.mxu0 %v645
    %954 = vmatpush.bf16.msra.mxu0 %v637
    %955 = vmatpush.bf16.msra.mxu0 %v629
    %956 = vmatpush.bf16.msra.mxu0 %v621
    %957 = vmatpush.bf16.msra.mxu0 %v613
    %958 = vmatmul.bf16.gmra.mxu0 %v190
    %v959 = vpop.f32.mrf.mxu0
    %v960 = vadd.f32 0.0, %v959
    %v961 = vpop.f32.mrf.mxu0
    %962 = vdwg.mxu0
    %963 = vmatpush.bf16.msra.mxu0 0
    %964 = vmatpush.bf16.msra.mxu0 0
    %965 = vmatpush.bf16.msra.mxu0 0
    %966 = vmatpush.bf16.msra.mxu0 %v709
    %967 = vmatpush.bf16.msra.mxu0 %v701
    %968 = vmatpush.bf16.msra.mxu0 %v693
    %969 = vmatpush.bf16.msra.mxu0 %v685
    %970 = vmatpush.bf16.msra.mxu0 %v677
    %971 = vmatmul.bf16.gmra.mxu0 %v818
    %v972 = vpop.f32.mrf.mxu0
    %v973 = vadd.f32 %v960, %v972
    %v974 = vpop.f32.mrf.mxu0
    %975 = vdwg.mxu0
    %976 = vmatpush.bf16.msra.mxu0 %v670
    %977 = vmatpush.bf16.msra.mxu0 %v662
    %978 = vmatpush.bf16.msra.mxu0 %v654
    %979 = vmatpush.bf16.msra.mxu0 %v646
    %980 = vmatpush.bf16.msra.mxu0 %v638
    %981 = vmatpush.bf16.msra.mxu0 %v630
    %982 = vmatpush.bf16.msra.mxu0 %v622
    %983 = vmatpush.bf16.msra.mxu0 %v614
    %984 = vmatmul.bf16.gmra.mxu0 %v190
    %v985 = vpop.f32.mrf.mxu0
    %v986 = vadd.f32 0.0, %v985
    %v987 = vpop.f32.mrf.mxu0
    %988 = vdwg.mxu0
    %989 = vmatpush.bf16.msra.mxu0 0
    %990 = vmatpush.bf16.msra.mxu0 0
    %991 = vmatpush.bf16.msra.mxu0 0
    %992 = vmatpush.bf16.msra.mxu0 %v710
    %993 = vmatpush.bf16.msra.mxu0 %v702
    %994 = vmatpush.bf16.msra.mxu0 %v694
    %995 = vmatpush.bf16.msra.mxu0 %v686
    %996 = vmatpush.bf16.msra.mxu0 %v678
    %997 = vmatmul.bf16.gmra.mxu0 %v818
    %v998 = vpop.f32.mrf.mxu0
    %v999 = vadd.f32 %v986, %v998
    %v1000 = vpop.f32.mrf.mxu0
    %1001 = vdwg.mxu0
    %1002 = vmatpush.bf16.msra.mxu0 %v671
    %1003 = vmatpush.bf16.msra.mxu0 %v663
    %1004 = vmatpush.bf16.msra.mxu0 %v655
    %1005 = vmatpush.bf16.msra.mxu0 %v647
    %1006 = vmatpush.bf16.msra.mxu0 %v639
    %1007 = vmatpush.bf16.msra.mxu0 %v631
    %1008 = vmatpush.bf16.msra.mxu0 %v623
    %1009 = vmatpush.bf16.msra.mxu0 %v615
    %1010 = vmatmul.bf16.gmra.mxu0 %v190
    %v1011 = vpop.f32.mrf.mxu0
    %v1012 = vadd.f32 0.0, %v1011
    %v1013 = vpop.f32.mrf.mxu0
    %1014 = vdwg.mxu0
    %1015 = vmatpush.bf16.msra.mxu0 0
    %1016 = vmatpush.bf16.msra.mxu0 0
    %1017 = vmatpush.bf16.msra.mxu0 0
    %1018 = vmatpush.bf16.msra.mxu0 %v711
    %1019 = vmatpush.bf16.msra.mxu0 %v703
    %1020 = vmatpush.bf16.msra.mxu0 %v695
    %1021 = vmatpush.bf16.msra.mxu0 %v687
    %1022 = vmatpush.bf16.msra.mxu0 %v679
    %1023 = vmatmul.bf16.gmra.mxu0 %v818
    %v1024 = vpop.f32.mrf.mxu0
    %v1025 = vadd.f32 %v1012, %v1024
    %v1026 = vpop.f32.mrf.mxu0
    %1027 = vdwg.mxu0
    %v1028 = vmax.f32 %v843, 0.0
    %v1029 = vmax.f32 %v869, 0.0
    %v1030 = vmax.f32 %v895, 0.0
    %v1031 = vmax.f32 %v921, 0.0
    %v1032 = vmax.f32 %v947, 0.0
    %v1033 = vmax.f32 %v973, 0.0
    %v1034 = vmax.f32 %v999, 0.0
    %v1035 = vmax.f32 %v1025, 0.0
    %v1036 = vld [vmem:[#allocation2] sm:$0xff]
    %v1037 = vld [vmem:[#allocation2 + $0x8] sm:$0xff]
    %v1038 = vpack.c.bf16 %v1028, %v1028
    %v1039 = vpack.c.bf16 %v1029, %v1029
    %v1040 = vpack.c.bf16 %v1030, %v1030
    %v1041 = vpack.c.bf16 %v1031, %v1031
    %v1042 = vpack.c.bf16 %v1032, %v1032
    %v1043 = vpack.c.bf16 %v1033, %v1033
    %v1044 = vpack.c.bf16 %v1034, %v1034
    %v1045 = vpack.c.bf16 %v1035, %v1035
    %v1046 = vld [vmem:[#allocation16] sm:$0xff]
    %v1047 = vld [vmem:[#allocation16 + $0x8] sm:$0xff]
    %v1048 = vld [vmem:[#allocation16 + $0x10] sm:$0xff]
    %v1049 = vld [vmem:[#allocation16 + $0x18] sm:$0xff]
    %v1050 = vld [vmem:[#allocation16 + $0x20] sm:$0xff]
    %v1051 = vld [vmem:[#allocation16 + $0x28] sm:$0xff]
    %v1052 = vld [vmem:[#allocation16 + $0x30] sm:$0xff]
    %v1053 = vld [vmem:[#allocation16 + $0x38] sm:$0xff]
    %v1054 = vld [vmem:[#allocation16 + $0x40] sm:$0xff]
    %v1055 = vld [vmem:[#allocation16 + $0x48] sm:$0xff]
    %v1056 = vld [vmem:[#allocation16 + $0x50] sm:$0xff]
    %v1057 = vld [vmem:[#allocation16 + $0x58] sm:$0xff]
    %v1058 = vld [vmem:[#allocation16 + $0x60] sm:$0xff]
    %v1059 = vld [vmem:[#allocation16 + $0x68] sm:$0xff]
    %v1060 = vld [vmem:[#allocation16 + $0x70] sm:$0xff]
    %v1061 = vld [vmem:[#allocation16 + $0x78] sm:$0xff]
    %v1062 = vld [vmem:[#allocation16 + $0x80] sm:$0xff]
    %v1063 = vld [vmem:[#allocation16 + $0x88] sm:$0xff]
    %v1064 = vld [vmem:[#allocation16 + $0x90] sm:$0xff]
    %v1065 = vld [vmem:[#allocation16 + $0x98] sm:$0xff]
    %v1066 = vld [vmem:[#allocation16 + $0xa0] sm:$0xff]
    %v1067 = vld [vmem:[#allocation16 + $0xa8] sm:$0xff]
    %v1068 = vld [vmem:[#allocation16 + $0xb0] sm:$0xff]
    %v1069 = vld [vmem:[#allocation16 + $0xb8] sm:$0xff]
    %v1070 = vld [vmem:[#allocation16 + $0xc0] sm:$0xff]
    %v1071 = vld [vmem:[#allocation16 + $0xc8] sm:$0xff]
    %v1072 = vld [vmem:[#allocation16 + $0xd0] sm:$0xff]
    %v1073 = vld [vmem:[#allocation16 + $0xd8] sm:$0xff]
    %v1074 = vld [vmem:[#allocation16 + $0xe0] sm:$0xff]
    %v1075 = vld [vmem:[#allocation16 + $0xe8] sm:$0xff]
    %v1076 = vld [vmem:[#allocation16 + $0xf0] sm:$0xff]
    %v1077 = vld [vmem:[#allocation16 + $0xf8] sm:$0xff]
    %v1078 = vld [vmem:[#allocation16 + $0x100] sm:$0xff]
    %v1079 = vld [vmem:[#allocation16 + $0x108] sm:$0xff]
    %v1080 = vld [vmem:[#allocation16 + $0x110] sm:$0xff]
    %v1081 = vld [vmem:[#allocation16 + $0x118] sm:$0xff]
    %v1082 = vld [vmem:[#allocation16 + $0x120] sm:$0xff]
    %v1083 = vld [vmem:[#allocation16 + $0x128] sm:$0xff]
    %v1084 = vld [vmem:[#allocation16 + $0x130] sm:$0xff]
    %v1085 = vld [vmem:[#allocation16 + $0x138] sm:$0xff]
    %v1086 = vld [vmem:[#allocation16 + $0x140] sm:$0xff]
    %v1087 = vld [vmem:[#allocation16 + $0x148] sm:$0xff]
    %v1088 = vld [vmem:[#allocation16 + $0x150] sm:$0xff]
    %v1089 = vld [vmem:[#allocation16 + $0x158] sm:$0xff]
    %v1090 = vld [vmem:[#allocation16 + $0x160] sm:$0xff]
    %v1091 = vld [vmem:[#allocation16 + $0x168] sm:$0xff]
    %v1092 = vld [vmem:[#allocation16 + $0x170] sm:$0xff]
    %v1093 = vld [vmem:[#allocation16 + $0x178] sm:$0xff]
    %v1094 = vld [vmem:[#allocation16 + $0x180] sm:$0xff]
    %v1095 = vld [vmem:[#allocation16 + $0x188] sm:$0xff]
    %v1096 = vld [vmem:[#allocation16 + $0x190] sm:$0xff]
    %v1097 = vld [vmem:[#allocation16 + $0x198] sm:$0xff]
    %v1098 = vld [vmem:[#allocation16 + $0x1a0] sm:$0xff]
    %v1099 = vld [vmem:[#allocation16 + $0x1a8] sm:$0xff]
    %v1100 = vld [vmem:[#allocation16 + $0x1b0] sm:$0xff]
    %v1101 = vld [vmem:[#allocation16 + $0x1b8] sm:$0xff]
    %v1102 = vld [vmem:[#allocation16 + $0x1c0] sm:$0xff]
    %v1103 = vld [vmem:[#allocation16 + $0x1c8] sm:$0xff]
    %v1104 = vld [vmem:[#allocation16 + $0x1d0] sm:$0xff]
    %v1105 = vld [vmem:[#allocation16 + $0x1d8] sm:$0xff]
    %v1106 = vld [vmem:[#allocation16 + $0x1e0] sm:$0xff]
    %v1107 = vld [vmem:[#allocation16 + $0x1e8] sm:$0xff]
    %v1108 = vld [vmem:[#allocation16 + $0x1f0] sm:$0xff]
    %v1109 = vld [vmem:[#allocation16 + $0x1f8] sm:$0xff]
    %v1110 = vld [vmem:[#allocation16 + $0x200] sm:$0xff]
    %v1111 = vld [vmem:[#allocation16 + $0x208] sm:$0xff]
    %v1112 = vld [vmem:[#allocation16 + $0x210] sm:$0xff]
    %v1113 = vld [vmem:[#allocation16 + $0x218] sm:$0xff]
    %v1114 = vld [vmem:[#allocation16 + $0x220] sm:$0xff]
    %v1115 = vld [vmem:[#allocation16 + $0x228] sm:$0xff]
    %v1116 = vld [vmem:[#allocation16 + $0x230] sm:$0xff]
    %v1117 = vld [vmem:[#allocation16 + $0x238] sm:$0xff]
    %v1118 = vld [vmem:[#allocation16 + $0x240] sm:$0xff]
    %v1119 = vld [vmem:[#allocation16 + $0x248] sm:$0xff]
    %v1120 = vld [vmem:[#allocation16 + $0x250] sm:$0xff]
    %v1121 = vld [vmem:[#allocation16 + $0x258] sm:$0xff]
    %v1122 = vld [vmem:[#allocation16 + $0x260] sm:$0xff]
    %v1123 = vld [vmem:[#allocation16 + $0x268] sm:$0xff]
    %v1124 = vld [vmem:[#allocation16 + $0x270] sm:$0xff]
    %v1125 = vld [vmem:[#allocation16 + $0x278] sm:$0xff]
    %v1126 = vld [vmem:[#allocation16 + $0x280] sm:$0xff]
    %v1127 = vld [vmem:[#allocation16 + $0x288] sm:$0xff]
    %v1128 = vld [vmem:[#allocation16 + $0x290] sm:$0xff]
    %v1129 = vld [vmem:[#allocation16 + $0x298] sm:$0xff]
    %v1130 = vld [vmem:[#allocation16 + $0x2a0] sm:$0xff]
    %v1131 = vld [vmem:[#allocation16 + $0x2a8] sm:$0xff]
    %v1132 = vld [vmem:[#allocation16 + $0x2b0] sm:$0xff]
    %v1133 = vld [vmem:[#allocation16 + $0x2b8] sm:$0xff]
    %v1134 = vld [vmem:[#allocation16 + $0x2c0] sm:$0xff]
    %v1135 = vld [vmem:[#allocation16 + $0x2c8] sm:$0xff]
    %v1136 = vld [vmem:[#allocation16 + $0x2d0] sm:$0xff]
    %v1137 = vld [vmem:[#allocation16 + $0x2d8] sm:$0xff]
    %v1138 = vld [vmem:[#allocation16 + $0x2e0] sm:$0xff]
    %v1139 = vld [vmem:[#allocation16 + $0x2e8] sm:$0xff]
    %v1140 = vld [vmem:[#allocation16 + $0x2f0] sm:$0xff]
    %v1141 = vld [vmem:[#allocation16 + $0x2f8] sm:$0xff]
    %v1142 = vld [vmem:[#allocation16 + $0x300] sm:$0xff]
    %v1143 = vld [vmem:[#allocation16 + $0x308] sm:$0xff]
    %v1144 = vld [vmem:[#allocation16 + $0x310] sm:$0xff]
    %v1145 = vld [vmem:[#allocation16 + $0x318] sm:$0xff]
    %v1146 = vld [vmem:[#allocation16 + $0x320] sm:$0xff]
    %v1147 = vld [vmem:[#allocation16 + $0x328] sm:$0xff]
    %v1148 = vld [vmem:[#allocation16 + $0x330] sm:$0xff]
    %v1149 = vld [vmem:[#allocation16 + $0x338] sm:$0xff]
    %v1150 = vld [vmem:[#allocation16 + $0x340] sm:$0xff]
    %v1151 = vld [vmem:[#allocation16 + $0x348] sm:$0xff]
    %v1152 = vld [vmem:[#allocation16 + $0x350] sm:$0xff]
    %v1153 = vld [vmem:[#allocation16 + $0x358] sm:$0xff]
    %v1154 = vld [vmem:[#allocation16 + $0x360] sm:$0xff]
    %v1155 = vld [vmem:[#allocation16 + $0x368] sm:$0xff]
    %v1156 = vld [vmem:[#allocation16 + $0x370] sm:$0xff]
    %v1157 = vld [vmem:[#allocation16 + $0x378] sm:$0xff]
    %v1158 = vld [vmem:[#allocation16 + $0x380] sm:$0xff]
    %v1159 = vld [vmem:[#allocation16 + $0x388] sm:$0xff]
    %v1160 = vld [vmem:[#allocation16 + $0x390] sm:$0xff]
    %v1161 = vld [vmem:[#allocation16 + $0x398] sm:$0xff]
    %v1162 = vld [vmem:[#allocation16 + $0x3a0] sm:$0xff]
    %v1163 = vld [vmem:[#allocation16 + $0x3a8] sm:$0xff]
    %v1164 = vld [vmem:[#allocation16 + $0x3b0] sm:$0xff]
    %v1165 = vld [vmem:[#allocation16 + $0x3b8] sm:$0xff]
    %v1166 = vld [vmem:[#allocation16 + $0x3c0] sm:$0xff]
    %v1167 = vld [vmem:[#allocation16 + $0x3c8] sm:$0xff]
    %v1168 = vld [vmem:[#allocation16 + $0x3d0] sm:$0xff]
    %v1169 = vld [vmem:[#allocation16 + $0x3d8] sm:$0xff]
    %v1170 = vld [vmem:[#allocation16 + $0x3e0] sm:$0xff]
    %v1171 = vld [vmem:[#allocation16 + $0x3e8] sm:$0xff]
    %v1172 = vld [vmem:[#allocation16 + $0x3f0] sm:$0xff]
    %v1173 = vld [vmem:[#allocation16 + $0x3f8] sm:$0xff]
    %v1174 = vld [vmem:[#allocation16 + $0x400] sm:$0xff]
    %v1175 = vld [vmem:[#allocation16 + $0x408] sm:$0xff]
    %v1176 = vld [vmem:[#allocation16 + $0x410] sm:$0xff]
    %v1177 = vld [vmem:[#allocation16 + $0x418] sm:$0xff]
    %v1178 = vld [vmem:[#allocation16 + $0x420] sm:$0xff]
    %v1179 = vld [vmem:[#allocation16 + $0x428] sm:$0xff]
    %v1180 = vld [vmem:[#allocation16 + $0x430] sm:$0xff]
    %v1181 = vld [vmem:[#allocation16 + $0x438] sm:$0xff]
    %v1182 = vld [vmem:[#allocation16 + $0x440] sm:$0xff]
    %v1183 = vld [vmem:[#allocation16 + $0x448] sm:$0xff]
    %v1184 = vld [vmem:[#allocation16 + $0x450] sm:$0xff]
    %v1185 = vld [vmem:[#allocation16 + $0x458] sm:$0xff]
    %v1186 = vld [vmem:[#allocation16 + $0x460] sm:$0xff]
    %v1187 = vld [vmem:[#allocation16 + $0x468] sm:$0xff]
    %v1188 = vld [vmem:[#allocation16 + $0x470] sm:$0xff]
    %v1189 = vld [vmem:[#allocation16 + $0x478] sm:$0xff]
    %v1190 = vld [vmem:[#allocation16 + $0x480] sm:$0xff]
    %v1191 = vld [vmem:[#allocation16 + $0x488] sm:$0xff]
    %v1192 = vld [vmem:[#allocation16 + $0x490] sm:$0xff]
    %v1193 = vld [vmem:[#allocation16 + $0x498] sm:$0xff]
    %v1194 = vld [vmem:[#allocation16 + $0x4a0] sm:$0xff]
    %v1195 = vld [vmem:[#allocation16 + $0x4a8] sm:$0xff]
    %v1196 = vld [vmem:[#allocation16 + $0x4b0] sm:$0xff]
    %v1197 = vld [vmem:[#allocation16 + $0x4b8] sm:$0xff]
    %v1198 = vld [vmem:[#allocation16 + $0x4c0] sm:$0xff]
    %v1199 = vld [vmem:[#allocation16 + $0x4c8] sm:$0xff]
    %v1200 = vld [vmem:[#allocation16 + $0x4d0] sm:$0xff]
    %v1201 = vld [vmem:[#allocation16 + $0x4d8] sm:$0xff]
    %v1202 = vld [vmem:[#allocation16 + $0x4e0] sm:$0xff]
    %v1203 = vld [vmem:[#allocation16 + $0x4e8] sm:$0xff]
    %v1204 = vld [vmem:[#allocation16 + $0x4f0] sm:$0xff]
    %v1205 = vld [vmem:[#allocation16 + $0x4f8] sm:$0xff]
    %v1206 = vld [vmem:[#allocation16 + $0x500] sm:$0xff]
    %v1207 = vld [vmem:[#allocation16 + $0x508] sm:$0xff]
    %v1208 = vld [vmem:[#allocation16 + $0x510] sm:$0xff]
    %v1209 = vld [vmem:[#allocation16 + $0x518] sm:$0xff]
    %v1210 = vld [vmem:[#allocation16 + $0x520] sm:$0xff]
    %v1211 = vld [vmem:[#allocation16 + $0x528] sm:$0xff]
    %v1212 = vld [vmem:[#allocation16 + $0x530] sm:$0xff]
    %v1213 = vld [vmem:[#allocation16 + $0x538] sm:$0xff]
    %v1214 = vld [vmem:[#allocation16 + $0x540] sm:$0xff]
    %v1215 = vld [vmem:[#allocation16 + $0x548] sm:$0xff]
    %v1216 = vld [vmem:[#allocation16 + $0x550] sm:$0xff]
    %v1217 = vld [vmem:[#allocation16 + $0x558] sm:$0xff]
    %v1218 = vld [vmem:[#allocation16 + $0x560] sm:$0xff]
    %v1219 = vld [vmem:[#allocation16 + $0x568] sm:$0xff]
    %v1220 = vld [vmem:[#allocation16 + $0x570] sm:$0xff]
    %v1221 = vld [vmem:[#allocation16 + $0x578] sm:$0xff]
    %v1222 = vld [vmem:[#allocation16 + $0x580] sm:$0xff]
    %v1223 = vld [vmem:[#allocation16 + $0x588] sm:$0xff]
    %v1224 = vld [vmem:[#allocation16 + $0x590] sm:$0xff]
    %v1225 = vld [vmem:[#allocation16 + $0x598] sm:$0xff]
    %v1226 = vld [vmem:[#allocation16 + $0x5a0] sm:$0xff]
    %v1227 = vld [vmem:[#allocation16 + $0x5a8] sm:$0xff]
    %v1228 = vld [vmem:[#allocation16 + $0x5b0] sm:$0xff]
    %v1229 = vld [vmem:[#allocation16 + $0x5b8] sm:$0xff]
    %v1230 = vld [vmem:[#allocation16 + $0x5c0] sm:$0xff]
    %v1231 = vld [vmem:[#allocation16 + $0x5c8] sm:$0xff]
    %v1232 = vld [vmem:[#allocation16 + $0x5d0] sm:$0xff]
    %v1233 = vld [vmem:[#allocation16 + $0x5d8] sm:$0xff]
    %v1234 = vld [vmem:[#allocation16 + $0x5e0] sm:$0xff]
    %v1235 = vld [vmem:[#allocation16 + $0x5e8] sm:$0xff]
    %v1236 = vld [vmem:[#allocation16 + $0x5f0] sm:$0xff]
    %v1237 = vld [vmem:[#allocation16 + $0x5f8] sm:$0xff]
    %v1238 = vld [vmem:[#allocation16 + $0x600] sm:$0xff]
    %v1239 = vld [vmem:[#allocation16 + $0x608] sm:$0xff]
    %v1240 = vld [vmem:[#allocation16 + $0x610] sm:$0xff]
    %v1241 = vld [vmem:[#allocation16 + $0x618] sm:$0xff]
    %v1242 = vld [vmem:[#allocation16 + $0x620] sm:$0xff]
    %v1243 = vld [vmem:[#allocation16 + $0x628] sm:$0xff]
    %v1244 = vld [vmem:[#allocation16 + $0x630] sm:$0xff]
    %v1245 = vld [vmem:[#allocation16 + $0x638] sm:$0xff]
    %v1246 = vld [vmem:[#allocation16 + $0x640] sm:$0xff]
    %v1247 = vld [vmem:[#allocation16 + $0x648] sm:$0xff]
    %v1248 = vld [vmem:[#allocation16 + $0x650] sm:$0xff]
    %v1249 = vld [vmem:[#allocation16 + $0x658] sm:$0xff]
    %v1250 = vld [vmem:[#allocation16 + $0x660] sm:$0xff]
    %v1251 = vld [vmem:[#allocation16 + $0x668] sm:$0xff]
    %v1252 = vld [vmem:[#allocation16 + $0x670] sm:$0xff]
    %v1253 = vld [vmem:[#allocation16 + $0x678] sm:$0xff]
    %v1254 = vld [vmem:[#allocation16 + $0x680] sm:$0xff]
    %v1255 = vld [vmem:[#allocation16 + $0x688] sm:$0xff]
    %v1256 = vld [vmem:[#allocation16 + $0x690] sm:$0xff]
    %v1257 = vld [vmem:[#allocation16 + $0x698] sm:$0xff]
    %v1258 = vld [vmem:[#allocation16 + $0x6a0] sm:$0xff]
    %v1259 = vld [vmem:[#allocation16 + $0x6a8] sm:$0xff]
    %v1260 = vld [vmem:[#allocation16 + $0x6b0] sm:$0xff]
    %v1261 = vld [vmem:[#allocation16 + $0x6b8] sm:$0xff]
    %v1262 = vld [vmem:[#allocation16 + $0x6c0] sm:$0xff]
    %v1263 = vld [vmem:[#allocation16 + $0x6c8] sm:$0xff]
    %v1264 = vld [vmem:[#allocation16 + $0x6d0] sm:$0xff]
    %v1265 = vld [vmem:[#allocation16 + $0x6d8] sm:$0xff]
    %v1266 = vld [vmem:[#allocation16 + $0x6e0] sm:$0xff]
    %v1267 = vld [vmem:[#allocation16 + $0x6e8] sm:$0xff]
    %v1268 = vld [vmem:[#allocation16 + $0x6f0] sm:$0xff]
    %v1269 = vld [vmem:[#allocation16 + $0x6f8] sm:$0xff]
    %v1270 = vld [vmem:[#allocation16 + $0x700] sm:$0xff]
    %v1271 = vld [vmem:[#allocation16 + $0x708] sm:$0xff]
    %v1272 = vld [vmem:[#allocation16 + $0x710] sm:$0xff]
    %v1273 = vld [vmem:[#allocation16 + $0x718] sm:$0xff]
    %v1274 = vld [vmem:[#allocation16 + $0x720] sm:$0xff]
    %v1275 = vld [vmem:[#allocation16 + $0x728] sm:$0xff]
    %v1276 = vld [vmem:[#allocation16 + $0x730] sm:$0xff]
    %v1277 = vld [vmem:[#allocation16 + $0x738] sm:$0xff]
    %v1278 = vld [vmem:[#allocation16 + $0x740] sm:$0xff]
    %v1279 = vld [vmem:[#allocation16 + $0x748] sm:$0xff]
    %v1280 = vld [vmem:[#allocation16 + $0x750] sm:$0xff]
    %v1281 = vld [vmem:[#allocation16 + $0x758] sm:$0xff]
    %v1282 = vld [vmem:[#allocation16 + $0x760] sm:$0xff]
    %v1283 = vld [vmem:[#allocation16 + $0x768] sm:$0xff]
    %v1284 = vld [vmem:[#allocation16 + $0x770] sm:$0xff]
    %v1285 = vld [vmem:[#allocation16 + $0x778] sm:$0xff]
    %v1286 = vld [vmem:[#allocation16 + $0x780] sm:$0xff]
    %v1287 = vld [vmem:[#allocation16 + $0x788] sm:$0xff]
    %v1288 = vld [vmem:[#allocation16 + $0x790] sm:$0xff]
    %v1289 = vld [vmem:[#allocation16 + $0x798] sm:$0xff]
    %v1290 = vld [vmem:[#allocation16 + $0x7a0] sm:$0xff]
    %v1291 = vld [vmem:[#allocation16 + $0x7a8] sm:$0xff]
    %v1292 = vld [vmem:[#allocation16 + $0x7b0] sm:$0xff]
    %v1293 = vld [vmem:[#allocation16 + $0x7b8] sm:$0xff]
    %v1294 = vld [vmem:[#allocation16 + $0x7c0] sm:$0xff]
    %v1295 = vld [vmem:[#allocation16 + $0x7c8] sm:$0xff]
    %v1296 = vld [vmem:[#allocation16 + $0x7d0] sm:$0xff]
    %v1297 = vld [vmem:[#allocation16 + $0x7d8] sm:$0xff]
    %v1298 = vld [vmem:[#allocation16 + $0x7e0] sm:$0xff]
    %v1299 = vld [vmem:[#allocation16 + $0x7e8] sm:$0xff]
    %v1300 = vld [vmem:[#allocation16 + $0x7f0] sm:$0xff]
    %v1301 = vld [vmem:[#allocation16 + $0x7f8] sm:$0xff]
    %v1302 = vld [vmem:[#allocation16 + $0x800] sm:$0xff]
    %v1303 = vld [vmem:[#allocation16 + $0x808] sm:$0xff]
    %v1304 = vld [vmem:[#allocation16 + $0x810] sm:$0xff]
    %v1305 = vld [vmem:[#allocation16 + $0x818] sm:$0xff]
    %v1306 = vld [vmem:[#allocation16 + $0x820] sm:$0xff]
    %v1307 = vld [vmem:[#allocation16 + $0x828] sm:$0xff]
    %v1308 = vld [vmem:[#allocation16 + $0x830] sm:$0xff]
    %v1309 = vld [vmem:[#allocation16 + $0x838] sm:$0xff]
    %v1310 = vld [vmem:[#allocation16 + $0x840] sm:$0xff]
    %v1311 = vld [vmem:[#allocation16 + $0x848] sm:$0xff]
    %v1312 = vld [vmem:[#allocation16 + $0x850] sm:$0xff]
    %v1313 = vld [vmem:[#allocation16 + $0x858] sm:$0xff]
    %v1314 = vld [vmem:[#allocation16 + $0x860] sm:$0xff]
    %v1315 = vld [vmem:[#allocation16 + $0x868] sm:$0xff]
    %v1316 = vld [vmem:[#allocation16 + $0x870] sm:$0xff]
    %v1317 = vld [vmem:[#allocation16 + $0x878] sm:$0xff]
    %v1318 = vld [vmem:[#allocation16 + $0x880] sm:$0xff]
    %v1319 = vld [vmem:[#allocation16 + $0x888] sm:$0xff]
    %v1320 = vld [vmem:[#allocation16 + $0x890] sm:$0xff]
    %v1321 = vld [vmem:[#allocation16 + $0x898] sm:$0xff]
    %v1322 = vld [vmem:[#allocation16 + $0x8a0] sm:$0xff]
    %v1323 = vld [vmem:[#allocation16 + $0x8a8] sm:$0xff]
    %v1324 = vld [vmem:[#allocation16 + $0x8b0] sm:$0xff]
    %v1325 = vld [vmem:[#allocation16 + $0x8b8] sm:$0xff]
    %v1326 = vld [vmem:[#allocation16 + $0x8c0] sm:$0xff]
    %v1327 = vld [vmem:[#allocation16 + $0x8c8] sm:$0xff]
    %v1328 = vld [vmem:[#allocation16 + $0x8d0] sm:$0xff]
    %v1329 = vld [vmem:[#allocation16 + $0x8d8] sm:$0xff]
    %v1330 = vld [vmem:[#allocation16 + $0x8e0] sm:$0xff]
    %v1331 = vld [vmem:[#allocation16 + $0x8e8] sm:$0xff]
    %v1332 = vld [vmem:[#allocation16 + $0x8f0] sm:$0xff]
    %v1333 = vld [vmem:[#allocation16 + $0x8f8] sm:$0xff]
    %v1334 = vld [vmem:[#allocation16 + $0x900] sm:$0xff]
    %v1335 = vld [vmem:[#allocation16 + $0x908] sm:$0xff]
    %v1336 = vld [vmem:[#allocation16 + $0x910] sm:$0xff]
    %v1337 = vld [vmem:[#allocation16 + $0x918] sm:$0xff]
    %v1338 = vld [vmem:[#allocation16 + $0x920] sm:$0xff]
    %v1339 = vld [vmem:[#allocation16 + $0x928] sm:$0xff]
    %v1340 = vld [vmem:[#allocation16 + $0x930] sm:$0xff]
    %v1341 = vld [vmem:[#allocation16 + $0x938] sm:$0xff]
    %v1342 = vld [vmem:[#allocation16 + $0x940] sm:$0xff]
    %v1343 = vld [vmem:[#allocation16 + $0x948] sm:$0xff]
    %v1344 = vld [vmem:[#allocation16 + $0x950] sm:$0xff]
    %v1345 = vld [vmem:[#allocation16 + $0x958] sm:$0xff]
    %v1346 = vld [vmem:[#allocation16 + $0x960] sm:$0xff]
    %v1347 = vld [vmem:[#allocation16 + $0x968] sm:$0xff]
    %v1348 = vld [vmem:[#allocation16 + $0x970] sm:$0xff]
    %v1349 = vld [vmem:[#allocation16 + $0x978] sm:$0xff]
    %v1350 = vld [vmem:[#allocation16 + $0x980] sm:$0xff]
    %v1351 = vld [vmem:[#allocation16 + $0x988] sm:$0xff]
    %v1352 = vld [vmem:[#allocation16 + $0x990] sm:$0xff]
    %v1353 = vld [vmem:[#allocation16 + $0x998] sm:$0xff]
    %v1354 = vld [vmem:[#allocation16 + $0x9a0] sm:$0xff]
    %v1355 = vld [vmem:[#allocation16 + $0x9a8] sm:$0xff]
    %v1356 = vld [vmem:[#allocation16 + $0x9b0] sm:$0xff]
    %v1357 = vld [vmem:[#allocation16 + $0x9b8] sm:$0xff]
    %v1358 = vld [vmem:[#allocation16 + $0x9c0] sm:$0xff]
    %v1359 = vld [vmem:[#allocation16 + $0x9c8] sm:$0xff]
    %v1360 = vld [vmem:[#allocation16 + $0x9d0] sm:$0xff]
    %v1361 = vld [vmem:[#allocation16 + $0x9d8] sm:$0xff]
    %v1362 = vld [vmem:[#allocation16 + $0x9e0] sm:$0xff]
    %v1363 = vld [vmem:[#allocation16 + $0x9e8] sm:$0xff]
    %v1364 = vld [vmem:[#allocation16 + $0x9f0] sm:$0xff]
    %v1365 = vld [vmem:[#allocation16 + $0x9f8] sm:$0xff]
    %v1366 = vld [vmem:[#allocation16 + $0xa00] sm:$0xff]
    %v1367 = vld [vmem:[#allocation16 + $0xa08] sm:$0xff]
    %v1368 = vld [vmem:[#allocation16 + $0xa10] sm:$0xff]
    %v1369 = vld [vmem:[#allocation16 + $0xa18] sm:$0xff]
    %v1370 = vld [vmem:[#allocation16 + $0xa20] sm:$0xff]
    %v1371 = vld [vmem:[#allocation16 + $0xa28] sm:$0xff]
    %v1372 = vld [vmem:[#allocation16 + $0xa30] sm:$0xff]
    %v1373 = vld [vmem:[#allocation16 + $0xa38] sm:$0xff]
    %v1374 = vld [vmem:[#allocation16 + $0xa40] sm:$0xff]
    %v1375 = vld [vmem:[#allocation16 + $0xa48] sm:$0xff]
    %v1376 = vld [vmem:[#allocation16 + $0xa50] sm:$0xff]
    %v1377 = vld [vmem:[#allocation16 + $0xa58] sm:$0xff]
    %v1378 = vld [vmem:[#allocation16 + $0xa60] sm:$0xff]
    %v1379 = vld [vmem:[#allocation16 + $0xa68] sm:$0xff]
    %v1380 = vld [vmem:[#allocation16 + $0xa70] sm:$0xff]
    %v1381 = vld [vmem:[#allocation16 + $0xa78] sm:$0xff]
    %v1382 = vld [vmem:[#allocation16 + $0xa80] sm:$0xff]
    %v1383 = vld [vmem:[#allocation16 + $0xa88] sm:$0xff]
    %v1384 = vld [vmem:[#allocation16 + $0xa90] sm:$0xff]
    %v1385 = vld [vmem:[#allocation16 + $0xa98] sm:$0xff]
    %v1386 = vld [vmem:[#allocation16 + $0xaa0] sm:$0xff]
    %v1387 = vld [vmem:[#allocation16 + $0xaa8] sm:$0xff]
    %v1388 = vld [vmem:[#allocation16 + $0xab0] sm:$0xff]
    %v1389 = vld [vmem:[#allocation16 + $0xab8] sm:$0xff]
    %v1390 = vld [vmem:[#allocation16 + $0xac0] sm:$0xff]
    %v1391 = vld [vmem:[#allocation16 + $0xac8] sm:$0xff]
    %v1392 = vld [vmem:[#allocation16 + $0xad0] sm:$0xff]
    %v1393 = vld [vmem:[#allocation16 + $0xad8] sm:$0xff]
    %v1394 = vld [vmem:[#allocation16 + $0xae0] sm:$0xff]
    %v1395 = vld [vmem:[#allocation16 + $0xae8] sm:$0xff]
    %v1396 = vld [vmem:[#allocation16 + $0xaf0] sm:$0xff]
    %v1397 = vld [vmem:[#allocation16 + $0xaf8] sm:$0xff]
    %v1398 = vld [vmem:[#allocation16 + $0xb00] sm:$0xff]
    %v1399 = vld [vmem:[#allocation16 + $0xb08] sm:$0xff]
    %v1400 = vld [vmem:[#allocation16 + $0xb10] sm:$0xff]
    %v1401 = vld [vmem:[#allocation16 + $0xb18] sm:$0xff]
    %v1402 = vld [vmem:[#allocation16 + $0xb20] sm:$0xff]
    %v1403 = vld [vmem:[#allocation16 + $0xb28] sm:$0xff]
    %v1404 = vld [vmem:[#allocation16 + $0xb30] sm:$0xff]
    %v1405 = vld [vmem:[#allocation16 + $0xb38] sm:$0xff]
    %v1406 = vld [vmem:[#allocation16 + $0xb40] sm:$0xff]
    %v1407 = vld [vmem:[#allocation16 + $0xb48] sm:$0xff]
    %v1408 = vld [vmem:[#allocation16 + $0xb50] sm:$0xff]
    %v1409 = vld [vmem:[#allocation16 + $0xb58] sm:$0xff]
    %v1410 = vld [vmem:[#allocation16 + $0xb60] sm:$0xff]
    %v1411 = vld [vmem:[#allocation16 + $0xb68] sm:$0xff]
    %v1412 = vld [vmem:[#allocation16 + $0xb70] sm:$0xff]
    %v1413 = vld [vmem:[#allocation16 + $0xb78] sm:$0xff]
    %v1414 = vld [vmem:[#allocation16 + $0xb80] sm:$0xff]
    %v1415 = vld [vmem:[#allocation16 + $0xb88] sm:$0xff]
    %v1416 = vld [vmem:[#allocation16 + $0xb90] sm:$0xff]
    %v1417 = vld [vmem:[#allocation16 + $0xb98] sm:$0xff]
    %v1418 = vld [vmem:[#allocation16 + $0xba0] sm:$0xff]
    %v1419 = vld [vmem:[#allocation16 + $0xba8] sm:$0xff]
    %v1420 = vld [vmem:[#allocation16 + $0xbb0] sm:$0xff]
    %v1421 = vld [vmem:[#allocation16 + $0xbb8] sm:$0xff]
    %v1422 = vld [vmem:[#allocation16 + $0xbc0] sm:$0xff]
    %v1423 = vld [vmem:[#allocation16 + $0xbc8] sm:$0xff]
    %v1424 = vld [vmem:[#allocation16 + $0xbd0] sm:$0xff]
    %v1425 = vld [vmem:[#allocation16 + $0xbd8] sm:$0xff]
    %v1426 = vld [vmem:[#allocation16 + $0xbe0] sm:$0xff]
    %v1427 = vld [vmem:[#allocation16 + $0xbe8] sm:$0xff]
    %v1428 = vld [vmem:[#allocation16 + $0xbf0] sm:$0xff]
    %v1429 = vld [vmem:[#allocation16 + $0xbf8] sm:$0xff]
    %v1430 = vld [vmem:[#allocation16 + $0xc00] sm:$0xff]
    %v1431 = vld [vmem:[#allocation16 + $0xc08] sm:$0xff]
    %v1432 = vld [vmem:[#allocation16 + $0xc10] sm:$0xff]
    %v1433 = vld [vmem:[#allocation16 + $0xc18] sm:$0xff]
    %v1434 = vld [vmem:[#allocation16 + $0xc20] sm:$0xff]
    %v1435 = vld [vmem:[#allocation16 + $0xc28] sm:$0xff]
    %v1436 = vld [vmem:[#allocation16 + $0xc30] sm:$0xff]
    %v1437 = vld [vmem:[#allocation16 + $0xc38] sm:$0xff]
    %v1438 = vld [vmem:[#allocation16 + $0xc40] sm:$0xff]
    %v1439 = vld [vmem:[#allocation16 + $0xc48] sm:$0xff]
    %v1440 = vld [vmem:[#allocation16 + $0xc50] sm:$0xff]
    %v1441 = vld [vmem:[#allocation16 + $0xc58] sm:$0xff]
    %v1442 = vld [vmem:[#allocation16 + $0xc60] sm:$0xff]
    %v1443 = vld [vmem:[#allocation16 + $0xc68] sm:$0xff]
    %v1444 = vld [vmem:[#allocation16 + $0xc70] sm:$0xff]
    %v1445 = vld [vmem:[#allocation16 + $0xc78] sm:$0xff]
    %v1446 = vld [vmem:[#allocation16 + $0xc80] sm:$0xff]
    %v1447 = vld [vmem:[#allocation16 + $0xc88] sm:$0xff]
    %v1448 = vld [vmem:[#allocation16 + $0xc90] sm:$0xff]
    %v1449 = vld [vmem:[#allocation16 + $0xc98] sm:$0xff]
    %v1450 = vld [vmem:[#allocation16 + $0xca0] sm:$0xff]
    %v1451 = vld [vmem:[#allocation16 + $0xca8] sm:$0xff]
    %v1452 = vld [vmem:[#allocation16 + $0xcb0] sm:$0xff]
    %v1453 = vld [vmem:[#allocation16 + $0xcb8] sm:$0xff]
    %v1454 = vld [vmem:[#allocation16 + $0xcc0] sm:$0xff]
    %v1455 = vld [vmem:[#allocation16 + $0xcc8] sm:$0xff]
    %v1456 = vld [vmem:[#allocation16 + $0xcd0] sm:$0xff]
    %v1457 = vld [vmem:[#allocation16 + $0xcd8] sm:$0xff]
    %v1458 = vld [vmem:[#allocation16 + $0xce0] sm:$0xff]
    %v1459 = vld [vmem:[#allocation16 + $0xce8] sm:$0xff]
    %v1460 = vld [vmem:[#allocation16 + $0xcf0] sm:$0xff]
    %v1461 = vld [vmem:[#allocation16 + $0xcf8] sm:$0xff]
    %v1462 = vld [vmem:[#allocation16 + $0xd00] sm:$0xff]
    %v1463 = vld [vmem:[#allocation16 + $0xd08] sm:$0xff]
    %v1464 = vld [vmem:[#allocation16 + $0xd10] sm:$0xff]
    %v1465 = vld [vmem:[#allocation16 + $0xd18] sm:$0xff]
    %v1466 = vld [vmem:[#allocation16 + $0xd20] sm:$0xff]
    %v1467 = vld [vmem:[#allocation16 + $0xd28] sm:$0xff]
    %v1468 = vld [vmem:[#allocation16 + $0xd30] sm:$0xff]
    %v1469 = vld [vmem:[#allocation16 + $0xd38] sm:$0xff]
    %v1470 = vld [vmem:[#allocation16 + $0xd40] sm:$0xff]
    %v1471 = vld [vmem:[#allocation16 + $0xd48] sm:$0xff]
    %v1472 = vld [vmem:[#allocation16 + $0xd50] sm:$0xff]
    %v1473 = vld [vmem:[#allocation16 + $0xd58] sm:$0xff]
    %v1474 = vld [vmem:[#allocation16 + $0xd60] sm:$0xff]
    %v1475 = vld [vmem:[#allocation16 + $0xd68] sm:$0xff]
    %v1476 = vld [vmem:[#allocation16 + $0xd70] sm:$0xff]
    %v1477 = vld [vmem:[#allocation16 + $0xd78] sm:$0xff]
    %v1478 = vld [vmem:[#allocation16 + $0xd80] sm:$0xff]
    %v1479 = vld [vmem:[#allocation16 + $0xd88] sm:$0xff]
    %v1480 = vld [vmem:[#allocation16 + $0xd90] sm:$0xff]
    %v1481 = vld [vmem:[#allocation16 + $0xd98] sm:$0xff]
    %v1482 = vld [vmem:[#allocation16 + $0xda0] sm:$0xff]
    %v1483 = vld [vmem:[#allocation16 + $0xda8] sm:$0xff]
    %v1484 = vld [vmem:[#allocation16 + $0xdb0] sm:$0xff]
    %v1485 = vld [vmem:[#allocation16 + $0xdb8] sm:$0xff]
    %v1486 = vld [vmem:[#allocation16 + $0xdc0] sm:$0xff]
    %v1487 = vld [vmem:[#allocation16 + $0xdc8] sm:$0xff]
    %v1488 = vld [vmem:[#allocation16 + $0xdd0] sm:$0xff]
    %v1489 = vld [vmem:[#allocation16 + $0xdd8] sm:$0xff]
    %v1490 = vld [vmem:[#allocation16 + $0xde0] sm:$0xff]
    %v1491 = vld [vmem:[#allocation16 + $0xde8] sm:$0xff]
    %v1492 = vld [vmem:[#allocation16 + $0xdf0] sm:$0xff]
    %v1493 = vld [vmem:[#allocation16 + $0xdf8] sm:$0xff]
    %v1494 = vld [vmem:[#allocation16 + $0xe00] sm:$0xff]
    %v1495 = vld [vmem:[#allocation16 + $0xe08] sm:$0xff]
    %v1496 = vld [vmem:[#allocation16 + $0xe10] sm:$0xff]
    %v1497 = vld [vmem:[#allocation16 + $0xe18] sm:$0xff]
    %v1498 = vld [vmem:[#allocation16 + $0xe20] sm:$0xff]
    %v1499 = vld [vmem:[#allocation16 + $0xe28] sm:$0xff]
    %v1500 = vld [vmem:[#allocation16 + $0xe30] sm:$0xff]
    %v1501 = vld [vmem:[#allocation16 + $0xe38] sm:$0xff]
    %v1502 = vld [vmem:[#allocation16 + $0xe40] sm:$0xff]
    %v1503 = vld [vmem:[#allocation16 + $0xe48] sm:$0xff]
    %v1504 = vld [vmem:[#allocation16 + $0xe50] sm:$0xff]
    %v1505 = vld [vmem:[#allocation16 + $0xe58] sm:$0xff]
    %v1506 = vld [vmem:[#allocation16 + $0xe60] sm:$0xff]
    %v1507 = vld [vmem:[#allocation16 + $0xe68] sm:$0xff]
    %v1508 = vld [vmem:[#allocation16 + $0xe70] sm:$0xff]
    %v1509 = vld [vmem:[#allocation16 + $0xe78] sm:$0xff]
    %v1510 = vld [vmem:[#allocation16 + $0xe80] sm:$0xff]
    %v1511 = vld [vmem:[#allocation16 + $0xe88] sm:$0xff]
    %v1512 = vld [vmem:[#allocation16 + $0xe90] sm:$0xff]
    %v1513 = vld [vmem:[#allocation16 + $0xe98] sm:$0xff]
    %v1514 = vld [vmem:[#allocation16 + $0xea0] sm:$0xff]
    %v1515 = vld [vmem:[#allocation16 + $0xea8] sm:$0xff]
    %v1516 = vld [vmem:[#allocation16 + $0xeb0] sm:$0xff]
    %v1517 = vld [vmem:[#allocation16 + $0xeb8] sm:$0xff]
    %v1518 = vld [vmem:[#allocation16 + $0xec0] sm:$0xff]
    %v1519 = vld [vmem:[#allocation16 + $0xec8] sm:$0xff]
    %v1520 = vld [vmem:[#allocation16 + $0xed0] sm:$0xff]
    %v1521 = vld [vmem:[#allocation16 + $0xed8] sm:$0xff]
    %v1522 = vld [vmem:[#allocation16 + $0xee0] sm:$0xff]
    %v1523 = vld [vmem:[#allocation16 + $0xee8] sm:$0xff]
    %v1524 = vld [vmem:[#allocation16 + $0xef0] sm:$0xff]
    %v1525 = vld [vmem:[#allocation16 + $0xef8] sm:$0xff]
    %v1526 = vld [vmem:[#allocation16 + $0xf00] sm:$0xff]
    %v1527 = vld [vmem:[#allocation16 + $0xf08] sm:$0xff]
    %v1528 = vld [vmem:[#allocation16 + $0xf10] sm:$0xff]
    %v1529 = vld [vmem:[#allocation16 + $0xf18] sm:$0xff]
    %v1530 = vld [vmem:[#allocation16 + $0xf20] sm:$0xff]
    %v1531 = vld [vmem:[#allocation16 + $0xf28] sm:$0xff]
    %v1532 = vld [vmem:[#allocation16 + $0xf30] sm:$0xff]
    %v1533 = vld [vmem:[#allocation16 + $0xf38] sm:$0xff]
    %v1534 = vld [vmem:[#allocation16 + $0xf40] sm:$0xff]
    %v1535 = vld [vmem:[#allocation16 + $0xf48] sm:$0xff]
    %v1536 = vld [vmem:[#allocation16 + $0xf50] sm:$0xff]
    %v1537 = vld [vmem:[#allocation16 + $0xf58] sm:$0xff]
    %v1538 = vld [vmem:[#allocation16 + $0xf60] sm:$0xff]
    %v1539 = vld [vmem:[#allocation16 + $0xf68] sm:$0xff]
    %v1540 = vld [vmem:[#allocation16 + $0xf70] sm:$0xff]
    %v1541 = vld [vmem:[#allocation16 + $0xf78] sm:$0xff]
    %v1542 = vld [vmem:[#allocation16 + $0xf80] sm:$0xff]
    %v1543 = vld [vmem:[#allocation16 + $0xf88] sm:$0xff]
    %v1544 = vld [vmem:[#allocation16 + $0xf90] sm:$0xff]
    %v1545 = vld [vmem:[#allocation16 + $0xf98] sm:$0xff]
    %v1546 = vld [vmem:[#allocation16 + $0xfa0] sm:$0xff]
    %v1547 = vld [vmem:[#allocation16 + $0xfa8] sm:$0xff]
    %v1548 = vld [vmem:[#allocation16 + $0xfb0] sm:$0xff]
    %v1549 = vld [vmem:[#allocation16 + $0xfb8] sm:$0xff]
    %v1550 = vld [vmem:[#allocation16 + $0xfc0] sm:$0xff]
    %v1551 = vld [vmem:[#allocation16 + $0xfc8] sm:$0xff]
    %v1552 = vld [vmem:[#allocation16 + $0xfd0] sm:$0xff]
    %v1553 = vld [vmem:[#allocation16 + $0xfd8] sm:$0xff]
    %v1554 = vld [vmem:[#allocation16 + $0xfe0] sm:$0xff]
    %v1555 = vld [vmem:[#allocation16 + $0xfe8] sm:$0xff]
    %v1556 = vld [vmem:[#allocation16 + $0xff0] sm:$0xff]
    %v1557 = vld [vmem:[#allocation16 + $0xff8] sm:$0xff]
    %v2070 = vunpack.c.l.b16 %v1046
    %v2071 = vunpack.c.h.b16 %v1046
    %v2072 = vunpack.c.l.b16 %v1047
    %v2073 = vunpack.c.h.b16 %v1047
    %v2074 = vunpack.c.l.b16 %v1048
    %v2075 = vunpack.c.h.b16 %v1048
    %v2076 = vunpack.c.l.b16 %v1049
    %v2077 = vunpack.c.h.b16 %v1049
    %v2078 = vunpack.c.l.b16 %v1050
    %v2079 = vunpack.c.h.b16 %v1050
    %v2080 = vunpack.c.l.b16 %v1051
    %v2081 = vunpack.c.h.b16 %v1051
    %v2082 = vunpack.c.l.b16 %v1052
    %v2083 = vunpack.c.h.b16 %v1052
    %v2084 = vunpack.c.l.b16 %v1053
    %v2085 = vunpack.c.h.b16 %v1053
    %v2086 = vunpack.c.l.b16 %v1054
    %v2087 = vunpack.c.h.b16 %v1054
    %v2088 = vunpack.c.l.b16 %v1055
    %v2089 = vunpack.c.h.b16 %v1055
    %v2090 = vunpack.c.l.b16 %v1056
    %v2091 = vunpack.c.h.b16 %v1056
    %v2092 = vunpack.c.l.b16 %v1057
    %v2093 = vunpack.c.h.b16 %v1057
    %v2094 = vunpack.c.l.b16 %v1058
    %v2095 = vunpack.c.h.b16 %v1058
    %v2096 = vunpack.c.l.b16 %v1059
    %v2097 = vunpack.c.h.b16 %v1059
    %v2098 = vunpack.c.l.b16 %v1060
    %v2099 = vunpack.c.h.b16 %v1060
    %v2100 = vunpack.c.l.b16 %v1061
    %v2101 = vunpack.c.h.b16 %v1061
    %v2102 = vunpack.c.l.b16 %v1062
    %v2103 = vunpack.c.h.b16 %v1062
    %v2104 = vunpack.c.l.b16 %v1063
    %v2105 = vunpack.c.h.b16 %v1063
    %v2106 = vunpack.c.l.b16 %v1064
    %v2107 = vunpack.c.h.b16 %v1064
    %v2108 = vunpack.c.l.b16 %v1065
    %v2109 = vunpack.c.h.b16 %v1065
    %v2110 = vunpack.c.l.b16 %v1066
    %v2111 = vunpack.c.h.b16 %v1066
    %v2112 = vunpack.c.l.b16 %v1067
    %v2113 = vunpack.c.h.b16 %v1067
    %v2114 = vunpack.c.l.b16 %v1068
    %v2115 = vunpack.c.h.b16 %v1068
    %v2116 = vunpack.c.l.b16 %v1069
    %v2117 = vunpack.c.h.b16 %v1069
    %v2118 = vunpack.c.l.b16 %v1070
    %v2119 = vunpack.c.h.b16 %v1070
    %v2120 = vunpack.c.l.b16 %v1071
    %v2121 = vunpack.c.h.b16 %v1071
    %v2122 = vunpack.c.l.b16 %v1072
    %v2123 = vunpack.c.h.b16 %v1072
    %v2124 = vunpack.c.l.b16 %v1073
    %v2125 = vunpack.c.h.b16 %v1073
    %v2126 = vunpack.c.l.b16 %v1074
    %v2127 = vunpack.c.h.b16 %v1074
    %v2128 = vunpack.c.l.b16 %v1075
    %v2129 = vunpack.c.h.b16 %v1075
    %v2130 = vunpack.c.l.b16 %v1076
    %v2131 = vunpack.c.h.b16 %v1076
    %v2132 = vunpack.c.l.b16 %v1077
    %v2133 = vunpack.c.h.b16 %v1077
    %v2134 = vunpack.c.l.b16 %v1078
    %v2135 = vunpack.c.h.b16 %v1078
    %v2136 = vunpack.c.l.b16 %v1079
    %v2137 = vunpack.c.h.b16 %v1079
    %v2138 = vunpack.c.l.b16 %v1080
    %v2139 = vunpack.c.h.b16 %v1080
    %v2140 = vunpack.c.l.b16 %v1081
    %v2141 = vunpack.c.h.b16 %v1081
    %v2142 = vunpack.c.l.b16 %v1082
    %v2143 = vunpack.c.h.b16 %v1082
    %v2144 = vunpack.c.l.b16 %v1083
    %v2145 = vunpack.c.h.b16 %v1083
    %v2146 = vunpack.c.l.b16 %v1084
    %v2147 = vunpack.c.h.b16 %v1084
    %v2148 = vunpack.c.l.b16 %v1085
    %v2149 = vunpack.c.h.b16 %v1085
    %v2150 = vunpack.c.l.b16 %v1086
    %v2151 = vunpack.c.h.b16 %v1086
    %v2152 = vunpack.c.l.b16 %v1087
    %v2153 = vunpack.c.h.b16 %v1087
    %v2154 = vunpack.c.l.b16 %v1088
    %v2155 = vunpack.c.h.b16 %v1088
    %v2156 = vunpack.c.l.b16 %v1089
    %v2157 = vunpack.c.h.b16 %v1089
    %v2158 = vunpack.c.l.b16 %v1090
    %v2159 = vunpack.c.h.b16 %v1090
    %v2160 = vunpack.c.l.b16 %v1091
    %v2161 = vunpack.c.h.b16 %v1091
    %v2162 = vunpack.c.l.b16 %v1092
    %v2163 = vunpack.c.h.b16 %v1092
    %v2164 = vunpack.c.l.b16 %v1093
    %v2165 = vunpack.c.h.b16 %v1093
    %v2166 = vunpack.c.l.b16 %v1094
    %v2167 = vunpack.c.h.b16 %v1094
    %v2168 = vunpack.c.l.b16 %v1095
    %v2169 = vunpack.c.h.b16 %v1095
    %v2170 = vunpack.c.l.b16 %v1096
    %v2171 = vunpack.c.h.b16 %v1096
    %v2172 = vunpack.c.l.b16 %v1097
    %v2173 = vunpack.c.h.b16 %v1097
    %v2174 = vunpack.c.l.b16 %v1098
    %v2175 = vunpack.c.h.b16 %v1098
    %v2176 = vunpack.c.l.b16 %v1099
    %v2177 = vunpack.c.h.b16 %v1099
    %v2178 = vunpack.c.l.b16 %v1100
    %v2179 = vunpack.c.h.b16 %v1100
    %v2180 = vunpack.c.l.b16 %v1101
    %v2181 = vunpack.c.h.b16 %v1101
    %v2182 = vunpack.c.l.b16 %v1102
    %v2183 = vunpack.c.h.b16 %v1102
    %v2184 = vunpack.c.l.b16 %v1103
    %v2185 = vunpack.c.h.b16 %v1103
    %v2186 = vunpack.c.l.b16 %v1104
    %v2187 = vunpack.c.h.b16 %v1104
    %v2188 = vunpack.c.l.b16 %v1105
    %v2189 = vunpack.c.h.b16 %v1105
    %v2190 = vunpack.c.l.b16 %v1106
    %v2191 = vunpack.c.h.b16 %v1106
    %v2192 = vunpack.c.l.b16 %v1107
    %v2193 = vunpack.c.h.b16 %v1107
    %v2194 = vunpack.c.l.b16 %v1108
    %v2195 = vunpack.c.h.b16 %v1108
    %v2196 = vunpack.c.l.b16 %v1109
    %v2197 = vunpack.c.h.b16 %v1109
    %v2198 = vunpack.c.l.b16 %v1110
    %v2199 = vunpack.c.h.b16 %v1110
    %v2200 = vunpack.c.l.b16 %v1111
    %v2201 = vunpack.c.h.b16 %v1111
    %v2202 = vunpack.c.l.b16 %v1112
    %v2203 = vunpack.c.h.b16 %v1112
    %v2204 = vunpack.c.l.b16 %v1113
    %v2205 = vunpack.c.h.b16 %v1113
    %v2206 = vunpack.c.l.b16 %v1114
    %v2207 = vunpack.c.h.b16 %v1114
    %v2208 = vunpack.c.l.b16 %v1115
    %v2209 = vunpack.c.h.b16 %v1115
    %v2210 = vunpack.c.l.b16 %v1116
    %v2211 = vunpack.c.h.b16 %v1116
    %v2212 = vunpack.c.l.b16 %v1117
    %v2213 = vunpack.c.h.b16 %v1117
    %v2214 = vunpack.c.l.b16 %v1118
    %v2215 = vunpack.c.h.b16 %v1118
    %v2216 = vunpack.c.l.b16 %v1119
    %v2217 = vunpack.c.h.b16 %v1119
    %v2218 = vunpack.c.l.b16 %v1120
    %v2219 = vunpack.c.h.b16 %v1120
    %v2220 = vunpack.c.l.b16 %v1121
    %v2221 = vunpack.c.h.b16 %v1121
    %v2222 = vunpack.c.l.b16 %v1122
    %v2223 = vunpack.c.h.b16 %v1122
    %v2224 = vunpack.c.l.b16 %v1123
    %v2225 = vunpack.c.h.b16 %v1123
    %v2226 = vunpack.c.l.b16 %v1124
    %v2227 = vunpack.c.h.b16 %v1124
    %v2228 = vunpack.c.l.b16 %v1125
    %v2229 = vunpack.c.h.b16 %v1125
    %v2230 = vunpack.c.l.b16 %v1126
    %v2231 = vunpack.c.h.b16 %v1126
    %v2232 = vunpack.c.l.b16 %v1127
    %v2233 = vunpack.c.h.b16 %v1127
    %v2234 = vunpack.c.l.b16 %v1128
    %v2235 = vunpack.c.h.b16 %v1128
    %v2236 = vunpack.c.l.b16 %v1129
    %v2237 = vunpack.c.h.b16 %v1129
    %v2238 = vunpack.c.l.b16 %v1130
    %v2239 = vunpack.c.h.b16 %v1130
    %v2240 = vunpack.c.l.b16 %v1131
    %v2241 = vunpack.c.h.b16 %v1131
    %v2242 = vunpack.c.l.b16 %v1132
    %v2243 = vunpack.c.h.b16 %v1132
    %v2244 = vunpack.c.l.b16 %v1133
    %v2245 = vunpack.c.h.b16 %v1133
    %v2246 = vunpack.c.l.b16 %v1134
    %v2247 = vunpack.c.h.b16 %v1134
    %v2248 = vunpack.c.l.b16 %v1135
    %v2249 = vunpack.c.h.b16 %v1135
    %v2250 = vunpack.c.l.b16 %v1136
    %v2251 = vunpack.c.h.b16 %v1136
    %v2252 = vunpack.c.l.b16 %v1137
    %v2253 = vunpack.c.h.b16 %v1137
    %v2254 = vunpack.c.l.b16 %v1138
    %v2255 = vunpack.c.h.b16 %v1138
    %v2256 = vunpack.c.l.b16 %v1139
    %v2257 = vunpack.c.h.b16 %v1139
    %v2258 = vunpack.c.l.b16 %v1140
    %v2259 = vunpack.c.h.b16 %v1140
    %v2260 = vunpack.c.l.b16 %v1141
    %v2261 = vunpack.c.h.b16 %v1141
    %v2262 = vunpack.c.l.b16 %v1142
    %v2263 = vunpack.c.h.b16 %v1142
    %v2264 = vunpack.c.l.b16 %v1143
    %v2265 = vunpack.c.h.b16 %v1143
    %v2266 = vunpack.c.l.b16 %v1144
    %v2267 = vunpack.c.h.b16 %v1144
    %v2268 = vunpack.c.l.b16 %v1145
    %v2269 = vunpack.c.h.b16 %v1145
    %v2270 = vunpack.c.l.b16 %v1146
    %v2271 = vunpack.c.h.b16 %v1146
    %v2272 = vunpack.c.l.b16 %v1147
    %v2273 = vunpack.c.h.b16 %v1147
    %v2274 = vunpack.c.l.b16 %v1148
    %v2275 = vunpack.c.h.b16 %v1148
    %v2276 = vunpack.c.l.b16 %v1149
    %v2277 = vunpack.c.h.b16 %v1149
    %v2278 = vunpack.c.l.b16 %v1150
    %v2279 = vunpack.c.h.b16 %v1150
    %v2280 = vunpack.c.l.b16 %v1151
    %v2281 = vunpack.c.h.b16 %v1151
    %v2282 = vunpack.c.l.b16 %v1152
    %v2283 = vunpack.c.h.b16 %v1152
    %v2284 = vunpack.c.l.b16 %v1153
    %v2285 = vunpack.c.h.b16 %v1153
    %v2286 = vunpack.c.l.b16 %v1154
    %v2287 = vunpack.c.h.b16 %v1154
    %v2288 = vunpack.c.l.b16 %v1155
    %v2289 = vunpack.c.h.b16 %v1155
    %v2290 = vunpack.c.l.b16 %v1156
    %v2291 = vunpack.c.h.b16 %v1156
    %v2292 = vunpack.c.l.b16 %v1157
    %v2293 = vunpack.c.h.b16 %v1157
    %v2294 = vunpack.c.l.b16 %v1158
    %v2295 = vunpack.c.h.b16 %v1158
    %v2296 = vunpack.c.l.b16 %v1159
    %v2297 = vunpack.c.h.b16 %v1159
    %v2298 = vunpack.c.l.b16 %v1160
    %v2299 = vunpack.c.h.b16 %v1160
    %v2300 = vunpack.c.l.b16 %v1161
    %v2301 = vunpack.c.h.b16 %v1161
    %v2302 = vunpack.c.l.b16 %v1162
    %v2303 = vunpack.c.h.b16 %v1162
    %v2304 = vunpack.c.l.b16 %v1163
    %v2305 = vunpack.c.h.b16 %v1163
    %v2306 = vunpack.c.l.b16 %v1164
    %v2307 = vunpack.c.h.b16 %v1164
    %v2308 = vunpack.c.l.b16 %v1165
    %v2309 = vunpack.c.h.b16 %v1165
    %v2310 = vunpack.c.l.b16 %v1166
    %v2311 = vunpack.c.h.b16 %v1166
    %v2312 = vunpack.c.l.b16 %v1167
    %v2313 = vunpack.c.h.b16 %v1167
    %v2314 = vunpack.c.l.b16 %v1168
    %v2315 = vunpack.c.h.b16 %v1168
    %v2316 = vunpack.c.l.b16 %v1169
    %v2317 = vunpack.c.h.b16 %v1169
    %v2318 = vunpack.c.l.b16 %v1170
    %v2319 = vunpack.c.h.b16 %v1170
    %v2320 = vunpack.c.l.b16 %v1171
    %v2321 = vunpack.c.h.b16 %v1171
    %v2322 = vunpack.c.l.b16 %v1172
    %v2323 = vunpack.c.h.b16 %v1172
    %v2324 = vunpack.c.l.b16 %v1173
    %v2325 = vunpack.c.h.b16 %v1173
    %v2326 = vunpack.c.l.b16 %v1174
    %v2327 = vunpack.c.h.b16 %v1174
    %v2328 = vunpack.c.l.b16 %v1175
    %v2329 = vunpack.c.h.b16 %v1175
    %v2330 = vunpack.c.l.b16 %v1176
    %v2331 = vunpack.c.h.b16 %v1176
    %v2332 = vunpack.c.l.b16 %v1177
    %v2333 = vunpack.c.h.b16 %v1177
    %v2334 = vunpack.c.l.b16 %v1178
    %v2335 = vunpack.c.h.b16 %v1178
    %v2336 = vunpack.c.l.b16 %v1179
    %v2337 = vunpack.c.h.b16 %v1179
    %v2338 = vunpack.c.l.b16 %v1180
    %v2339 = vunpack.c.h.b16 %v1180
    %v2340 = vunpack.c.l.b16 %v1181
    %v2341 = vunpack.c.h.b16 %v1181
    %v2342 = vunpack.c.l.b16 %v1182
    %v2343 = vunpack.c.h.b16 %v1182
    %v2344 = vunpack.c.l.b16 %v1183
    %v2345 = vunpack.c.h.b16 %v1183
    %v2346 = vunpack.c.l.b16 %v1184
    %v2347 = vunpack.c.h.b16 %v1184
    %v2348 = vunpack.c.l.b16 %v1185
    %v2349 = vunpack.c.h.b16 %v1185
    %v2350 = vunpack.c.l.b16 %v1186
    %v2351 = vunpack.c.h.b16 %v1186
    %v2352 = vunpack.c.l.b16 %v1187
    %v2353 = vunpack.c.h.b16 %v1187
    %v2354 = vunpack.c.l.b16 %v1188
    %v2355 = vunpack.c.h.b16 %v1188
    %v2356 = vunpack.c.l.b16 %v1189
    %v2357 = vunpack.c.h.b16 %v1189
    %v2358 = vunpack.c.l.b16 %v1190
    %v2359 = vunpack.c.h.b16 %v1190
    %v2360 = vunpack.c.l.b16 %v1191
    %v2361 = vunpack.c.h.b16 %v1191
    %v2362 = vunpack.c.l.b16 %v1192
    %v2363 = vunpack.c.h.b16 %v1192
    %v2364 = vunpack.c.l.b16 %v1193
    %v2365 = vunpack.c.h.b16 %v1193
    %v2366 = vunpack.c.l.b16 %v1194
    %v2367 = vunpack.c.h.b16 %v1194
    %v2368 = vunpack.c.l.b16 %v1195
    %v2369 = vunpack.c.h.b16 %v1195
    %v2370 = vunpack.c.l.b16 %v1196
    %v2371 = vunpack.c.h.b16 %v1196
    %v2372 = vunpack.c.l.b16 %v1197
    %v2373 = vunpack.c.h.b16 %v1197
    %v2374 = vunpack.c.l.b16 %v1198
    %v2375 = vunpack.c.h.b16 %v1198
    %v2376 = vunpack.c.l.b16 %v1199
    %v2377 = vunpack.c.h.b16 %v1199
    %v2378 = vunpack.c.l.b16 %v1200
    %v2379 = vunpack.c.h.b16 %v1200
    %v2380 = vunpack.c.l.b16 %v1201
    %v2381 = vunpack.c.h.b16 %v1201
    %v2382 = vunpack.c.l.b16 %v1202
    %v2383 = vunpack.c.h.b16 %v1202
    %v2384 = vunpack.c.l.b16 %v1203
    %v2385 = vunpack.c.h.b16 %v1203
    %v2386 = vunpack.c.l.b16 %v1204
    %v2387 = vunpack.c.h.b16 %v1204
    %v2388 = vunpack.c.l.b16 %v1205
    %v2389 = vunpack.c.h.b16 %v1205
    %v2390 = vunpack.c.l.b16 %v1206
    %v2391 = vunpack.c.h.b16 %v1206
    %v2392 = vunpack.c.l.b16 %v1207
    %v2393 = vunpack.c.h.b16 %v1207
    %v2394 = vunpack.c.l.b16 %v1208
    %v2395 = vunpack.c.h.b16 %v1208
    %v2396 = vunpack.c.l.b16 %v1209
    %v2397 = vunpack.c.h.b16 %v1209
    %v2398 = vunpack.c.l.b16 %v1210
    %v2399 = vunpack.c.h.b16 %v1210
    %v2400 = vunpack.c.l.b16 %v1211
    %v2401 = vunpack.c.h.b16 %v1211
    %v2402 = vunpack.c.l.b16 %v1212
    %v2403 = vunpack.c.h.b16 %v1212
    %v2404 = vunpack.c.l.b16 %v1213
    %v2405 = vunpack.c.h.b16 %v1213
    %v2406 = vunpack.c.l.b16 %v1214
    %v2407 = vunpack.c.h.b16 %v1214
    %v2408 = vunpack.c.l.b16 %v1215
    %v2409 = vunpack.c.h.b16 %v1215
    %v2410 = vunpack.c.l.b16 %v1216
    %v2411 = vunpack.c.h.b16 %v1216
    %v2412 = vunpack.c.l.b16 %v1217
    %v2413 = vunpack.c.h.b16 %v1217
    %v2414 = vunpack.c.l.b16 %v1218
    %v2415 = vunpack.c.h.b16 %v1218
    %v2416 = vunpack.c.l.b16 %v1219
    %v2417 = vunpack.c.h.b16 %v1219
    %v2418 = vunpack.c.l.b16 %v1220
    %v2419 = vunpack.c.h.b16 %v1220
    %v2420 = vunpack.c.l.b16 %v1221
    %v2421 = vunpack.c.h.b16 %v1221
    %v2422 = vunpack.c.l.b16 %v1222
    %v2423 = vunpack.c.h.b16 %v1222
    %v2424 = vunpack.c.l.b16 %v1223
    %v2425 = vunpack.c.h.b16 %v1223
    %v2426 = vunpack.c.l.b16 %v1224
    %v2427 = vunpack.c.h.b16 %v1224
    %v2428 = vunpack.c.l.b16 %v1225
    %v2429 = vunpack.c.h.b16 %v1225
    %v2430 = vunpack.c.l.b16 %v1226
    %v2431 = vunpack.c.h.b16 %v1226
    %v2432 = vunpack.c.l.b16 %v1227
    %v2433 = vunpack.c.h.b16 %v1227
    %v2434 = vunpack.c.l.b16 %v1228
    %v2435 = vunpack.c.h.b16 %v1228
    %v2436 = vunpack.c.l.b16 %v1229
    %v2437 = vunpack.c.h.b16 %v1229
    %v2438 = vunpack.c.l.b16 %v1230
    %v2439 = vunpack.c.h.b16 %v1230
    %v2440 = vunpack.c.l.b16 %v1231
    %v2441 = vunpack.c.h.b16 %v1231
    %v2442 = vunpack.c.l.b16 %v1232
    %v2443 = vunpack.c.h.b16 %v1232
    %v2444 = vunpack.c.l.b16 %v1233
    %v2445 = vunpack.c.h.b16 %v1233
    %v2446 = vunpack.c.l.b16 %v1234
    %v2447 = vunpack.c.h.b16 %v1234
    %v2448 = vunpack.c.l.b16 %v1235
    %v2449 = vunpack.c.h.b16 %v1235
    %v2450 = vunpack.c.l.b16 %v1236
    %v2451 = vunpack.c.h.b16 %v1236
    %v2452 = vunpack.c.l.b16 %v1237
    %v2453 = vunpack.c.h.b16 %v1237
    %v2454 = vunpack.c.l.b16 %v1238
    %v2455 = vunpack.c.h.b16 %v1238
    %v2456 = vunpack.c.l.b16 %v1239
    %v2457 = vunpack.c.h.b16 %v1239
    %v2458 = vunpack.c.l.b16 %v1240
    %v2459 = vunpack.c.h.b16 %v1240
    %v2460 = vunpack.c.l.b16 %v1241
    %v2461 = vunpack.c.h.b16 %v1241
    %v2462 = vunpack.c.l.b16 %v1242
    %v2463 = vunpack.c.h.b16 %v1242
    %v2464 = vunpack.c.l.b16 %v1243
    %v2465 = vunpack.c.h.b16 %v1243
    %v2466 = vunpack.c.l.b16 %v1244
    %v2467 = vunpack.c.h.b16 %v1244
    %v2468 = vunpack.c.l.b16 %v1245
    %v2469 = vunpack.c.h.b16 %v1245
    %v2470 = vunpack.c.l.b16 %v1246
    %v2471 = vunpack.c.h.b16 %v1246
    %v2472 = vunpack.c.l.b16 %v1247
    %v2473 = vunpack.c.h.b16 %v1247
    %v2474 = vunpack.c.l.b16 %v1248
    %v2475 = vunpack.c.h.b16 %v1248
    %v2476 = vunpack.c.l.b16 %v1249
    %v2477 = vunpack.c.h.b16 %v1249
    %v2478 = vunpack.c.l.b16 %v1250
    %v2479 = vunpack.c.h.b16 %v1250
    %v2480 = vunpack.c.l.b16 %v1251
    %v2481 = vunpack.c.h.b16 %v1251
    %v2482 = vunpack.c.l.b16 %v1252
    %v2483 = vunpack.c.h.b16 %v1252
    %v2484 = vunpack.c.l.b16 %v1253
    %v2485 = vunpack.c.h.b16 %v1253
    %v2486 = vunpack.c.l.b16 %v1254
    %v2487 = vunpack.c.h.b16 %v1254
    %v2488 = vunpack.c.l.b16 %v1255
    %v2489 = vunpack.c.h.b16 %v1255
    %v2490 = vunpack.c.l.b16 %v1256
    %v2491 = vunpack.c.h.b16 %v1256
    %v2492 = vunpack.c.l.b16 %v1257
    %v2493 = vunpack.c.h.b16 %v1257
    %v2494 = vunpack.c.l.b16 %v1258
    %v2495 = vunpack.c.h.b16 %v1258
    %v2496 = vunpack.c.l.b16 %v1259
    %v2497 = vunpack.c.h.b16 %v1259
    %v2498 = vunpack.c.l.b16 %v1260
    %v2499 = vunpack.c.h.b16 %v1260
    %v2500 = vunpack.c.l.b16 %v1261
    %v2501 = vunpack.c.h.b16 %v1261
    %v2502 = vunpack.c.l.b16 %v1262
    %v2503 = vunpack.c.h.b16 %v1262
    %v2504 = vunpack.c.l.b16 %v1263
    %v2505 = vunpack.c.h.b16 %v1263
    %v2506 = vunpack.c.l.b16 %v1264
    %v2507 = vunpack.c.h.b16 %v1264
    %v2508 = vunpack.c.l.b16 %v1265
    %v2509 = vunpack.c.h.b16 %v1265
    %v2510 = vunpack.c.l.b16 %v1266
    %v2511 = vunpack.c.h.b16 %v1266
    %v2512 = vunpack.c.l.b16 %v1267
    %v2513 = vunpack.c.h.b16 %v1267
    %v2514 = vunpack.c.l.b16 %v1268
    %v2515 = vunpack.c.h.b16 %v1268
    %v2516 = vunpack.c.l.b16 %v1269
    %v2517 = vunpack.c.h.b16 %v1269
    %v2518 = vunpack.c.l.b16 %v1270
    %v2519 = vunpack.c.h.b16 %v1270
    %v2520 = vunpack.c.l.b16 %v1271
    %v2521 = vunpack.c.h.b16 %v1271
    %v2522 = vunpack.c.l.b16 %v1272
    %v2523 = vunpack.c.h.b16 %v1272
    %v2524 = vunpack.c.l.b16 %v1273
    %v2525 = vunpack.c.h.b16 %v1273
    %v2526 = vunpack.c.l.b16 %v1274
    %v2527 = vunpack.c.h.b16 %v1274
    %v2528 = vunpack.c.l.b16 %v1275
    %v2529 = vunpack.c.h.b16 %v1275
    %v2530 = vunpack.c.l.b16 %v1276
    %v2531 = vunpack.c.h.b16 %v1276
    %v2532 = vunpack.c.l.b16 %v1277
    %v2533 = vunpack.c.h.b16 %v1277
    %v2534 = vunpack.c.l.b16 %v1278
    %v2535 = vunpack.c.h.b16 %v1278
    %v2536 = vunpack.c.l.b16 %v1279
    %v2537 = vunpack.c.h.b16 %v1279
    %v2538 = vunpack.c.l.b16 %v1280
    %v2539 = vunpack.c.h.b16 %v1280
    %v2540 = vunpack.c.l.b16 %v1281
    %v2541 = vunpack.c.h.b16 %v1281
    %v2542 = vunpack.c.l.b16 %v1282
    %v2543 = vunpack.c.h.b16 %v1282
    %v2544 = vunpack.c.l.b16 %v1283
    %v2545 = vunpack.c.h.b16 %v1283
    %v2546 = vunpack.c.l.b16 %v1284
    %v2547 = vunpack.c.h.b16 %v1284
    %v2548 = vunpack.c.l.b16 %v1285
    %v2549 = vunpack.c.h.b16 %v1285
    %v2550 = vunpack.c.l.b16 %v1286
    %v2551 = vunpack.c.h.b16 %v1286
    %v2552 = vunpack.c.l.b16 %v1287
    %v2553 = vunpack.c.h.b16 %v1287
    %v2554 = vunpack.c.l.b16 %v1288
    %v2555 = vunpack.c.h.b16 %v1288
    %v2556 = vunpack.c.l.b16 %v1289
    %v2557 = vunpack.c.h.b16 %v1289
    %v2558 = vunpack.c.l.b16 %v1290
    %v2559 = vunpack.c.h.b16 %v1290
    %v2560 = vunpack.c.l.b16 %v1291
    %v2561 = vunpack.c.h.b16 %v1291
    %v2562 = vunpack.c.l.b16 %v1292
    %v2563 = vunpack.c.h.b16 %v1292
    %v2564 = vunpack.c.l.b16 %v1293
    %v2565 = vunpack.c.h.b16 %v1293
    %v2566 = vunpack.c.l.b16 %v1294
    %v2567 = vunpack.c.h.b16 %v1294
    %v2568 = vunpack.c.l.b16 %v1295
    %v2569 = vunpack.c.h.b16 %v1295
    %v2570 = vunpack.c.l.b16 %v1296
    %v2571 = vunpack.c.h.b16 %v1296
    %v2572 = vunpack.c.l.b16 %v1297
    %v2573 = vunpack.c.h.b16 %v1297
    %v2574 = vunpack.c.l.b16 %v1298
    %v2575 = vunpack.c.h.b16 %v1298
    %v2576 = vunpack.c.l.b16 %v1299
    %v2577 = vunpack.c.h.b16 %v1299
    %v2578 = vunpack.c.l.b16 %v1300
    %v2579 = vunpack.c.h.b16 %v1300
    %v2580 = vunpack.c.l.b16 %v1301
    %v2581 = vunpack.c.h.b16 %v1301
    %v2582 = vunpack.c.l.b16 %v1302
    %v2583 = vunpack.c.h.b16 %v1302
    %v2584 = vunpack.c.l.b16 %v1303
    %v2585 = vunpack.c.h.b16 %v1303
    %v2586 = vunpack.c.l.b16 %v1304
    %v2587 = vunpack.c.h.b16 %v1304
    %v2588 = vunpack.c.l.b16 %v1305
    %v2589 = vunpack.c.h.b16 %v1305
    %v2590 = vunpack.c.l.b16 %v1306
    %v2591 = vunpack.c.h.b16 %v1306
    %v2592 = vunpack.c.l.b16 %v1307
    %v2593 = vunpack.c.h.b16 %v1307
    %v2594 = vunpack.c.l.b16 %v1308
    %v2595 = vunpack.c.h.b16 %v1308
    %v2596 = vunpack.c.l.b16 %v1309
    %v2597 = vunpack.c.h.b16 %v1309
    %v2598 = vunpack.c.l.b16 %v1310
    %v2599 = vunpack.c.h.b16 %v1310
    %v2600 = vunpack.c.l.b16 %v1311
    %v2601 = vunpack.c.h.b16 %v1311
    %v2602 = vunpack.c.l.b16 %v1312
    %v2603 = vunpack.c.h.b16 %v1312
    %v2604 = vunpack.c.l.b16 %v1313
    %v2605 = vunpack.c.h.b16 %v1313
    %v2606 = vunpack.c.l.b16 %v1314
    %v2607 = vunpack.c.h.b16 %v1314
    %v2608 = vunpack.c.l.b16 %v1315
    %v2609 = vunpack.c.h.b16 %v1315
    %v2610 = vunpack.c.l.b16 %v1316
    %v2611 = vunpack.c.h.b16 %v1316
    %v2612 = vunpack.c.l.b16 %v1317
    %v2613 = vunpack.c.h.b16 %v1317
    %v2614 = vunpack.c.l.b16 %v1318
    %v2615 = vunpack.c.h.b16 %v1318
    %v2616 = vunpack.c.l.b16 %v1319
    %v2617 = vunpack.c.h.b16 %v1319
    %v2618 = vunpack.c.l.b16 %v1320
    %v2619 = vunpack.c.h.b16 %v1320
    %v2620 = vunpack.c.l.b16 %v1321
    %v2621 = vunpack.c.h.b16 %v1321
    %v2622 = vunpack.c.l.b16 %v1322
    %v2623 = vunpack.c.h.b16 %v1322
    %v2624 = vunpack.c.l.b16 %v1323
    %v2625 = vunpack.c.h.b16 %v1323
    %v2626 = vunpack.c.l.b16 %v1324
    %v2627 = vunpack.c.h.b16 %v1324
    %v2628 = vunpack.c.l.b16 %v1325
    %v2629 = vunpack.c.h.b16 %v1325
    %v2630 = vunpack.c.l.b16 %v1326
    %v2631 = vunpack.c.h.b16 %v1326
    %v2632 = vunpack.c.l.b16 %v1327
    %v2633 = vunpack.c.h.b16 %v1327
    %v2634 = vunpack.c.l.b16 %v1328
    %v2635 = vunpack.c.h.b16 %v1328
    %v2636 = vunpack.c.l.b16 %v1329
    %v2637 = vunpack.c.h.b16 %v1329
    %v2638 = vunpack.c.l.b16 %v1330
    %v2639 = vunpack.c.h.b16 %v1330
    %v2640 = vunpack.c.l.b16 %v1331
    %v2641 = vunpack.c.h.b16 %v1331
    %v2642 = vunpack.c.l.b16 %v1332
    %v2643 = vunpack.c.h.b16 %v1332
    %v2644 = vunpack.c.l.b16 %v1333
    %v2645 = vunpack.c.h.b16 %v1333
    %v2646 = vunpack.c.l.b16 %v1334
    %v2647 = vunpack.c.h.b16 %v1334
    %v2648 = vunpack.c.l.b16 %v1335
    %v2649 = vunpack.c.h.b16 %v1335
    %v2650 = vunpack.c.l.b16 %v1336
    %v2651 = vunpack.c.h.b16 %v1336
    %v2652 = vunpack.c.l.b16 %v1337
    %v2653 = vunpack.c.h.b16 %v1337
    %v2654 = vunpack.c.l.b16 %v1338
    %v2655 = vunpack.c.h.b16 %v1338
    %v2656 = vunpack.c.l.b16 %v1339
    %v2657 = vunpack.c.h.b16 %v1339
    %v2658 = vunpack.c.l.b16 %v1340
    %v2659 = vunpack.c.h.b16 %v1340
    %v2660 = vunpack.c.l.b16 %v1341
    %v2661 = vunpack.c.h.b16 %v1341
    %v2662 = vunpack.c.l.b16 %v1342
    %v2663 = vunpack.c.h.b16 %v1342
    %v2664 = vunpack.c.l.b16 %v1343
    %v2665 = vunpack.c.h.b16 %v1343
    %v2666 = vunpack.c.l.b16 %v1344
    %v2667 = vunpack.c.h.b16 %v1344
    %v2668 = vunpack.c.l.b16 %v1345
    %v2669 = vunpack.c.h.b16 %v1345
    %v2670 = vunpack.c.l.b16 %v1346
    %v2671 = vunpack.c.h.b16 %v1346
    %v2672 = vunpack.c.l.b16 %v1347
    %v2673 = vunpack.c.h.b16 %v1347
    %v2674 = vunpack.c.l.b16 %v1348
    %v2675 = vunpack.c.h.b16 %v1348
    %v2676 = vunpack.c.l.b16 %v1349
    %v2677 = vunpack.c.h.b16 %v1349
    %v2678 = vunpack.c.l.b16 %v1350
    %v2679 = vunpack.c.h.b16 %v1350
    %v2680 = vunpack.c.l.b16 %v1351
    %v2681 = vunpack.c.h.b16 %v1351
    %v2682 = vunpack.c.l.b16 %v1352
    %v2683 = vunpack.c.h.b16 %v1352
    %v2684 = vunpack.c.l.b16 %v1353
    %v2685 = vunpack.c.h.b16 %v1353
    %v2686 = vunpack.c.l.b16 %v1354
    %v2687 = vunpack.c.h.b16 %v1354
    %v2688 = vunpack.c.l.b16 %v1355
    %v2689 = vunpack.c.h.b16 %v1355
    %v2690 = vunpack.c.l.b16 %v1356
    %v2691 = vunpack.c.h.b16 %v1356
    %v2692 = vunpack.c.l.b16 %v1357
    %v2693 = vunpack.c.h.b16 %v1357
    %v2694 = vunpack.c.l.b16 %v1358
    %v2695 = vunpack.c.h.b16 %v1358
    %v2696 = vunpack.c.l.b16 %v1359
    %v2697 = vunpack.c.h.b16 %v1359
    %v2698 = vunpack.c.l.b16 %v1360
    %v2699 = vunpack.c.h.b16 %v1360
    %v2700 = vunpack.c.l.b16 %v1361
    %v2701 = vunpack.c.h.b16 %v1361
    %v2702 = vunpack.c.l.b16 %v1362
    %v2703 = vunpack.c.h.b16 %v1362
    %v2704 = vunpack.c.l.b16 %v1363
    %v2705 = vunpack.c.h.b16 %v1363
    %v2706 = vunpack.c.l.b16 %v1364
    %v2707 = vunpack.c.h.b16 %v1364
    %v2708 = vunpack.c.l.b16 %v1365
    %v2709 = vunpack.c.h.b16 %v1365
    %v2710 = vunpack.c.l.b16 %v1366
    %v2711 = vunpack.c.h.b16 %v1366
    %v2712 = vunpack.c.l.b16 %v1367
    %v2713 = vunpack.c.h.b16 %v1367
    %v2714 = vunpack.c.l.b16 %v1368
    %v2715 = vunpack.c.h.b16 %v1368
    %v2716 = vunpack.c.l.b16 %v1369
    %v2717 = vunpack.c.h.b16 %v1369
    %v2718 = vunpack.c.l.b16 %v1370
    %v2719 = vunpack.c.h.b16 %v1370
    %v2720 = vunpack.c.l.b16 %v1371
    %v2721 = vunpack.c.h.b16 %v1371
    %v2722 = vunpack.c.l.b16 %v1372
    %v2723 = vunpack.c.h.b16 %v1372
    %v2724 = vunpack.c.l.b16 %v1373
    %v2725 = vunpack.c.h.b16 %v1373
    %v2726 = vunpack.c.l.b16 %v1374
    %v2727 = vunpack.c.h.b16 %v1374
    %v2728 = vunpack.c.l.b16 %v1375
    %v2729 = vunpack.c.h.b16 %v1375
    %v2730 = vunpack.c.l.b16 %v1376
    %v2731 = vunpack.c.h.b16 %v1376
    %v2732 = vunpack.c.l.b16 %v1377
    %v2733 = vunpack.c.h.b16 %v1377
    %v2734 = vunpack.c.l.b16 %v1378
    %v2735 = vunpack.c.h.b16 %v1378
    %v2736 = vunpack.c.l.b16 %v1379
    %v2737 = vunpack.c.h.b16 %v1379
    %v2738 = vunpack.c.l.b16 %v1380
    %v2739 = vunpack.c.h.b16 %v1380
    %v2740 = vunpack.c.l.b16 %v1381
    %v2741 = vunpack.c.h.b16 %v1381
    %v2742 = vunpack.c.l.b16 %v1382
    %v2743 = vunpack.c.h.b16 %v1382
    %v2744 = vunpack.c.l.b16 %v1383
    %v2745 = vunpack.c.h.b16 %v1383
    %v2746 = vunpack.c.l.b16 %v1384
    %v2747 = vunpack.c.h.b16 %v1384
    %v2748 = vunpack.c.l.b16 %v1385
    %v2749 = vunpack.c.h.b16 %v1385
    %v2750 = vunpack.c.l.b16 %v1386
    %v2751 = vunpack.c.h.b16 %v1386
    %v2752 = vunpack.c.l.b16 %v1387
    %v2753 = vunpack.c.h.b16 %v1387
    %v2754 = vunpack.c.l.b16 %v1388
    %v2755 = vunpack.c.h.b16 %v1388
    %v2756 = vunpack.c.l.b16 %v1389
    %v2757 = vunpack.c.h.b16 %v1389
    %v2758 = vunpack.c.l.b16 %v1390
    %v2759 = vunpack.c.h.b16 %v1390
    %v2760 = vunpack.c.l.b16 %v1391
    %v2761 = vunpack.c.h.b16 %v1391
    %v2762 = vunpack.c.l.b16 %v1392
    %v2763 = vunpack.c.h.b16 %v1392
    %v2764 = vunpack.c.l.b16 %v1393
    %v2765 = vunpack.c.h.b16 %v1393
    %v2766 = vunpack.c.l.b16 %v1394
    %v2767 = vunpack.c.h.b16 %v1394
    %v2768 = vunpack.c.l.b16 %v1395
    %v2769 = vunpack.c.h.b16 %v1395
    %v2770 = vunpack.c.l.b16 %v1396
    %v2771 = vunpack.c.h.b16 %v1396
    %v2772 = vunpack.c.l.b16 %v1397
    %v2773 = vunpack.c.h.b16 %v1397
    %v2774 = vunpack.c.l.b16 %v1398
    %v2775 = vunpack.c.h.b16 %v1398
    %v2776 = vunpack.c.l.b16 %v1399
    %v2777 = vunpack.c.h.b16 %v1399
    %v2778 = vunpack.c.l.b16 %v1400
    %v2779 = vunpack.c.h.b16 %v1400
    %v2780 = vunpack.c.l.b16 %v1401
    %v2781 = vunpack.c.h.b16 %v1401
    %v2782 = vunpack.c.l.b16 %v1402
    %v2783 = vunpack.c.h.b16 %v1402
    %v2784 = vunpack.c.l.b16 %v1403
    %v2785 = vunpack.c.h.b16 %v1403
    %v2786 = vunpack.c.l.b16 %v1404
    %v2787 = vunpack.c.h.b16 %v1404
    %v2788 = vunpack.c.l.b16 %v1405
    %v2789 = vunpack.c.h.b16 %v1405
    %v2790 = vunpack.c.l.b16 %v1406
    %v2791 = vunpack.c.h.b16 %v1406
    %v2792 = vunpack.c.l.b16 %v1407
    %v2793 = vunpack.c.h.b16 %v1407
    %v2794 = vunpack.c.l.b16 %v1408
    %v2795 = vunpack.c.h.b16 %v1408
    %v2796 = vunpack.c.l.b16 %v1409
    %v2797 = vunpack.c.h.b16 %v1409
    %v2798 = vunpack.c.l.b16 %v1410
    %v2799 = vunpack.c.h.b16 %v1410
    %v2800 = vunpack.c.l.b16 %v1411
    %v2801 = vunpack.c.h.b16 %v1411
    %v2802 = vunpack.c.l.b16 %v1412
    %v2803 = vunpack.c.h.b16 %v1412
    %v2804 = vunpack.c.l.b16 %v1413
    %v2805 = vunpack.c.h.b16 %v1413
    %v2806 = vunpack.c.l.b16 %v1414
    %v2807 = vunpack.c.h.b16 %v1414
    %v2808 = vunpack.c.l.b16 %v1415
    %v2809 = vunpack.c.h.b16 %v1415
    %v2810 = vunpack.c.l.b16 %v1416
    %v2811 = vunpack.c.h.b16 %v1416
    %v2812 = vunpack.c.l.b16 %v1417
    %v2813 = vunpack.c.h.b16 %v1417
    %v2814 = vunpack.c.l.b16 %v1418
    %v2815 = vunpack.c.h.b16 %v1418
    %v2816 = vunpack.c.l.b16 %v1419
    %v2817 = vunpack.c.h.b16 %v1419
    %v2818 = vunpack.c.l.b16 %v1420
    %v2819 = vunpack.c.h.b16 %v1420
    %v2820 = vunpack.c.l.b16 %v1421
    %v2821 = vunpack.c.h.b16 %v1421
    %v2822 = vunpack.c.l.b16 %v1422
    %v2823 = vunpack.c.h.b16 %v1422
    %v2824 = vunpack.c.l.b16 %v1423
    %v2825 = vunpack.c.h.b16 %v1423
    %v2826 = vunpack.c.l.b16 %v1424
    %v2827 = vunpack.c.h.b16 %v1424
    %v2828 = vunpack.c.l.b16 %v1425
    %v2829 = vunpack.c.h.b16 %v1425
    %v2830 = vunpack.c.l.b16 %v1426
    %v2831 = vunpack.c.h.b16 %v1426
    %v2832 = vunpack.c.l.b16 %v1427
    %v2833 = vunpack.c.h.b16 %v1427
    %v2834 = vunpack.c.l.b16 %v1428
    %v2835 = vunpack.c.h.b16 %v1428
    %v2836 = vunpack.c.l.b16 %v1429
    %v2837 = vunpack.c.h.b16 %v1429
    %v2838 = vunpack.c.l.b16 %v1430
    %v2839 = vunpack.c.h.b16 %v1430
    %v2840 = vunpack.c.l.b16 %v1431
    %v2841 = vunpack.c.h.b16 %v1431
    %v2842 = vunpack.c.l.b16 %v1432
    %v2843 = vunpack.c.h.b16 %v1432
    %v2844 = vunpack.c.l.b16 %v1433
    %v2845 = vunpack.c.h.b16 %v1433
    %v2846 = vunpack.c.l.b16 %v1434
    %v2847 = vunpack.c.h.b16 %v1434
    %v2848 = vunpack.c.l.b16 %v1435
    %v2849 = vunpack.c.h.b16 %v1435
    %v2850 = vunpack.c.l.b16 %v1436
    %v2851 = vunpack.c.h.b16 %v1436
    %v2852 = vunpack.c.l.b16 %v1437
    %v2853 = vunpack.c.h.b16 %v1437
    %v2854 = vunpack.c.l.b16 %v1438
    %v2855 = vunpack.c.h.b16 %v1438
    %v2856 = vunpack.c.l.b16 %v1439
    %v2857 = vunpack.c.h.b16 %v1439
    %v2858 = vunpack.c.l.b16 %v1440
    %v2859 = vunpack.c.h.b16 %v1440
    %v2860 = vunpack.c.l.b16 %v1441
    %v2861 = vunpack.c.h.b16 %v1441
    %v2862 = vunpack.c.l.b16 %v1442
    %v2863 = vunpack.c.h.b16 %v1442
    %v2864 = vunpack.c.l.b16 %v1443
    %v2865 = vunpack.c.h.b16 %v1443
    %v2866 = vunpack.c.l.b16 %v1444
    %v2867 = vunpack.c.h.b16 %v1444
    %v2868 = vunpack.c.l.b16 %v1445
    %v2869 = vunpack.c.h.b16 %v1445
    %v2870 = vunpack.c.l.b16 %v1446
    %v2871 = vunpack.c.h.b16 %v1446
    %v2872 = vunpack.c.l.b16 %v1447
    %v2873 = vunpack.c.h.b16 %v1447
    %v2874 = vunpack.c.l.b16 %v1448
    %v2875 = vunpack.c.h.b16 %v1448
    %v2876 = vunpack.c.l.b16 %v1449
    %v2877 = vunpack.c.h.b16 %v1449
    %v2878 = vunpack.c.l.b16 %v1450
    %v2879 = vunpack.c.h.b16 %v1450
    %v2880 = vunpack.c.l.b16 %v1451
    %v2881 = vunpack.c.h.b16 %v1451
    %v2882 = vunpack.c.l.b16 %v1452
    %v2883 = vunpack.c.h.b16 %v1452
    %v2884 = vunpack.c.l.b16 %v1453
    %v2885 = vunpack.c.h.b16 %v1453
    %v2886 = vunpack.c.l.b16 %v1454
    %v2887 = vunpack.c.h.b16 %v1454
    %v2888 = vunpack.c.l.b16 %v1455
    %v2889 = vunpack.c.h.b16 %v1455
    %v2890 = vunpack.c.l.b16 %v1456
    %v2891 = vunpack.c.h.b16 %v1456
    %v2892 = vunpack.c.l.b16 %v1457
    %v2893 = vunpack.c.h.b16 %v1457
    %v2894 = vunpack.c.l.b16 %v1458
    %v2895 = vunpack.c.h.b16 %v1458
    %v2896 = vunpack.c.l.b16 %v1459
    %v2897 = vunpack.c.h.b16 %v1459
    %v2898 = vunpack.c.l.b16 %v1460
    %v2899 = vunpack.c.h.b16 %v1460
    %v2900 = vunpack.c.l.b16 %v1461
    %v2901 = vunpack.c.h.b16 %v1461
    %v2902 = vunpack.c.l.b16 %v1462
    %v2903 = vunpack.c.h.b16 %v1462
    %v2904 = vunpack.c.l.b16 %v1463
    %v2905 = vunpack.c.h.b16 %v1463
    %v2906 = vunpack.c.l.b16 %v1464
    %v2907 = vunpack.c.h.b16 %v1464
    %v2908 = vunpack.c.l.b16 %v1465
    %v2909 = vunpack.c.h.b16 %v1465
    %v2910 = vunpack.c.l.b16 %v1466
    %v2911 = vunpack.c.h.b16 %v1466
    %v2912 = vunpack.c.l.b16 %v1467
    %v2913 = vunpack.c.h.b16 %v1467
    %v2914 = vunpack.c.l.b16 %v1468
    %v2915 = vunpack.c.h.b16 %v1468
    %v2916 = vunpack.c.l.b16 %v1469
    %v2917 = vunpack.c.h.b16 %v1469
    %v2918 = vunpack.c.l.b16 %v1470
    %v2919 = vunpack.c.h.b16 %v1470
    %v2920 = vunpack.c.l.b16 %v1471
    %v2921 = vunpack.c.h.b16 %v1471
    %v2922 = vunpack.c.l.b16 %v1472
    %v2923 = vunpack.c.h.b16 %v1472
    %v2924 = vunpack.c.l.b16 %v1473
    %v2925 = vunpack.c.h.b16 %v1473
    %v2926 = vunpack.c.l.b16 %v1474
    %v2927 = vunpack.c.h.b16 %v1474
    %v2928 = vunpack.c.l.b16 %v1475
    %v2929 = vunpack.c.h.b16 %v1475
    %v2930 = vunpack.c.l.b16 %v1476
    %v2931 = vunpack.c.h.b16 %v1476
    %v2932 = vunpack.c.l.b16 %v1477
    %v2933 = vunpack.c.h.b16 %v1477
    %v2934 = vunpack.c.l.b16 %v1478
    %v2935 = vunpack.c.h.b16 %v1478
    %v2936 = vunpack.c.l.b16 %v1479
    %v2937 = vunpack.c.h.b16 %v1479
    %v2938 = vunpack.c.l.b16 %v1480
    %v2939 = vunpack.c.h.b16 %v1480
    %v2940 = vunpack.c.l.b16 %v1481
    %v2941 = vunpack.c.h.b16 %v1481
    %v2942 = vunpack.c.l.b16 %v1482
    %v2943 = vunpack.c.h.b16 %v1482
    %v2944 = vunpack.c.l.b16 %v1483
    %v2945 = vunpack.c.h.b16 %v1483
    %v2946 = vunpack.c.l.b16 %v1484
    %v2947 = vunpack.c.h.b16 %v1484
    %v2948 = vunpack.c.l.b16 %v1485
    %v2949 = vunpack.c.h.b16 %v1485
    %v2950 = vunpack.c.l.b16 %v1486
    %v2951 = vunpack.c.h.b16 %v1486
    %v2952 = vunpack.c.l.b16 %v1487
    %v2953 = vunpack.c.h.b16 %v1487
    %v2954 = vunpack.c.l.b16 %v1488
    %v2955 = vunpack.c.h.b16 %v1488
    %v2956 = vunpack.c.l.b16 %v1489
    %v2957 = vunpack.c.h.b16 %v1489
    %v2958 = vunpack.c.l.b16 %v1490
    %v2959 = vunpack.c.h.b16 %v1490
    %v2960 = vunpack.c.l.b16 %v1491
    %v2961 = vunpack.c.h.b16 %v1491
    %v2962 = vunpack.c.l.b16 %v1492
    %v2963 = vunpack.c.h.b16 %v1492
    %v2964 = vunpack.c.l.b16 %v1493
    %v2965 = vunpack.c.h.b16 %v1493
    %v2966 = vunpack.c.l.b16 %v1494
    %v2967 = vunpack.c.h.b16 %v1494
    %v2968 = vunpack.c.l.b16 %v1495
    %v2969 = vunpack.c.h.b16 %v1495
    %v2970 = vunpack.c.l.b16 %v1496
    %v2971 = vunpack.c.h.b16 %v1496
    %v2972 = vunpack.c.l.b16 %v1497
    %v2973 = vunpack.c.h.b16 %v1497
    %v2974 = vunpack.c.l.b16 %v1498
    %v2975 = vunpack.c.h.b16 %v1498
    %v2976 = vunpack.c.l.b16 %v1499
    %v2977 = vunpack.c.h.b16 %v1499
    %v2978 = vunpack.c.l.b16 %v1500
    %v2979 = vunpack.c.h.b16 %v1500
    %v2980 = vunpack.c.l.b16 %v1501
    %v2981 = vunpack.c.h.b16 %v1501
    %v2982 = vunpack.c.l.b16 %v1502
    %v2983 = vunpack.c.h.b16 %v1502
    %v2984 = vunpack.c.l.b16 %v1503
    %v2985 = vunpack.c.h.b16 %v1503
    %v2986 = vunpack.c.l.b16 %v1504
    %v2987 = vunpack.c.h.b16 %v1504
    %v2988 = vunpack.c.l.b16 %v1505
    %v2989 = vunpack.c.h.b16 %v1505
    %v2990 = vunpack.c.l.b16 %v1506
    %v2991 = vunpack.c.h.b16 %v1506
    %v2992 = vunpack.c.l.b16 %v1507
    %v2993 = vunpack.c.h.b16 %v1507
    %v2994 = vunpack.c.l.b16 %v1508
    %v2995 = vunpack.c.h.b16 %v1508
    %v2996 = vunpack.c.l.b16 %v1509
    %v2997 = vunpack.c.h.b16 %v1509
    %v2998 = vunpack.c.l.b16 %v1510
    %v2999 = vunpack.c.h.b16 %v1510
    %v3000 = vunpack.c.l.b16 %v1511
    %v3001 = vunpack.c.h.b16 %v1511
    %v3002 = vunpack.c.l.b16 %v1512
    %v3003 = vunpack.c.h.b16 %v1512
    %v3004 = vunpack.c.l.b16 %v1513
    %v3005 = vunpack.c.h.b16 %v1513
    %v3006 = vunpack.c.l.b16 %v1514
    %v3007 = vunpack.c.h.b16 %v1514
    %v3008 = vunpack.c.l.b16 %v1515
    %v3009 = vunpack.c.h.b16 %v1515
    %v3010 = vunpack.c.l.b16 %v1516
    %v3011 = vunpack.c.h.b16 %v1516
    %v3012 = vunpack.c.l.b16 %v1517
    %v3013 = vunpack.c.h.b16 %v1517
    %v3014 = vunpack.c.l.b16 %v1518
    %v3015 = vunpack.c.h.b16 %v1518
    %v3016 = vunpack.c.l.b16 %v1519
    %v3017 = vunpack.c.h.b16 %v1519
    %v3018 = vunpack.c.l.b16 %v1520
    %v3019 = vunpack.c.h.b16 %v1520
    %v3020 = vunpack.c.l.b16 %v1521
    %v3021 = vunpack.c.h.b16 %v1521
    %v3022 = vunpack.c.l.b16 %v1522
    %v3023 = vunpack.c.h.b16 %v1522
    %v3024 = vunpack.c.l.b16 %v1523
    %v3025 = vunpack.c.h.b16 %v1523
    %v3026 = vunpack.c.l.b16 %v1524
    %v3027 = vunpack.c.h.b16 %v1524
    %v3028 = vunpack.c.l.b16 %v1525
    %v3029 = vunpack.c.h.b16 %v1525
    %v3030 = vunpack.c.l.b16 %v1526
    %v3031 = vunpack.c.h.b16 %v1526
    %v3032 = vunpack.c.l.b16 %v1527
    %v3033 = vunpack.c.h.b16 %v1527
    %v3034 = vunpack.c.l.b16 %v1528
    %v3035 = vunpack.c.h.b16 %v1528
    %v3036 = vunpack.c.l.b16 %v1529
    %v3037 = vunpack.c.h.b16 %v1529
    %v3038 = vunpack.c.l.b16 %v1530
    %v3039 = vunpack.c.h.b16 %v1530
    %v3040 = vunpack.c.l.b16 %v1531
    %v3041 = vunpack.c.h.b16 %v1531
    %v3042 = vunpack.c.l.b16 %v1532
    %v3043 = vunpack.c.h.b16 %v1532
    %v3044 = vunpack.c.l.b16 %v1533
    %v3045 = vunpack.c.h.b16 %v1533
    %v3046 = vunpack.c.l.b16 %v1534
    %v3047 = vunpack.c.h.b16 %v1534
    %v3048 = vunpack.c.l.b16 %v1535
    %v3049 = vunpack.c.h.b16 %v1535
    %v3050 = vunpack.c.l.b16 %v1536
    %v3051 = vunpack.c.h.b16 %v1536
    %v3052 = vunpack.c.l.b16 %v1537
    %v3053 = vunpack.c.h.b16 %v1537
    %v3054 = vunpack.c.l.b16 %v1538
    %v3055 = vunpack.c.h.b16 %v1538
    %v3056 = vunpack.c.l.b16 %v1539
    %v3057 = vunpack.c.h.b16 %v1539
    %v3058 = vunpack.c.l.b16 %v1540
    %v3059 = vunpack.c.h.b16 %v1540
    %v3060 = vunpack.c.l.b16 %v1541
    %v3061 = vunpack.c.h.b16 %v1541
    %v3062 = vunpack.c.l.b16 %v1542
    %v3063 = vunpack.c.h.b16 %v1542
    %v3064 = vunpack.c.l.b16 %v1543
    %v3065 = vunpack.c.h.b16 %v1543
    %v3066 = vunpack.c.l.b16 %v1544
    %v3067 = vunpack.c.h.b16 %v1544
    %v3068 = vunpack.c.l.b16 %v1545
    %v3069 = vunpack.c.h.b16 %v1545
    %v3070 = vunpack.c.l.b16 %v1546
    %v3071 = vunpack.c.h.b16 %v1546
    %v3072 = vunpack.c.l.b16 %v1547
    %v3073 = vunpack.c.h.b16 %v1547
    %v3074 = vunpack.c.l.b16 %v1548
    %v3075 = vunpack.c.h.b16 %v1548
    %v3076 = vunpack.c.l.b16 %v1549
    %v3077 = vunpack.c.h.b16 %v1549
    %v3078 = vunpack.c.l.b16 %v1550
    %v3079 = vunpack.c.h.b16 %v1550
    %v3080 = vunpack.c.l.b16 %v1551
    %v3081 = vunpack.c.h.b16 %v1551
    %v3082 = vunpack.c.l.b16 %v1552
    %v3083 = vunpack.c.h.b16 %v1552
    %v3084 = vunpack.c.l.b16 %v1553
    %v3085 = vunpack.c.h.b16 %v1553
    %v3086 = vunpack.c.l.b16 %v1554
    %v3087 = vunpack.c.h.b16 %v1554
    %v3088 = vunpack.c.l.b16 %v1555
    %v3089 = vunpack.c.h.b16 %v1555
    %v3090 = vunpack.c.l.b16 %v1556
    %v3091 = vunpack.c.h.b16 %v1556
    %v3092 = vunpack.c.l.b16 %v1557
    %v3093 = vunpack.c.h.b16 %v1557
    %v3094 = vpack.c.b16 %v2078, %v2070
    %v3095 = vpack.c.b16 %v2079, %v2071
    %v3096 = vpack.c.b16 %v2080, %v2072
    %v3097 = vpack.c.b16 %v2081, %v2073
    %v3098 = vpack.c.b16 %v2082, %v2074
    %v3099 = vpack.c.b16 %v2083, %v2075
    %v3100 = vpack.c.b16 %v2084, %v2076
    %v3101 = vpack.c.b16 %v2085, %v2077
    %v3102 = vpack.c.b16 %v2094, %v2086
    %v3103 = vpack.c.b16 %v2095, %v2087
    %v3104 = vpack.c.b16 %v2096, %v2088
    %v3105 = vpack.c.b16 %v2097, %v2089
    %v3106 = vpack.c.b16 %v2098, %v2090
    %v3107 = vpack.c.b16 %v2099, %v2091
    %v3108 = vpack.c.b16 %v2100, %v2092
    %v3109 = vpack.c.b16 %v2101, %v2093
    %v3110 = vpack.c.b16 %v2110, %v2102
    %v3111 = vpack.c.b16 %v2111, %v2103
    %v3112 = vpack.c.b16 %v2112, %v2104
    %v3113 = vpack.c.b16 %v2113, %v2105
    %v3114 = vpack.c.b16 %v2114, %v2106
    %v3115 = vpack.c.b16 %v2115, %v2107
    %v3116 = vpack.c.b16 %v2116, %v2108
    %v3117 = vpack.c.b16 %v2117, %v2109
    %v3118 = vpack.c.b16 %v2126, %v2118
    %v3119 = vpack.c.b16 %v2127, %v2119
    %v3120 = vpack.c.b16 %v2128, %v2120
    %v3121 = vpack.c.b16 %v2129, %v2121
    %v3122 = vpack.c.b16 %v2130, %v2122
    %v3123 = vpack.c.b16 %v2131, %v2123
    %v3124 = vpack.c.b16 %v2132, %v2124
    %v3125 = vpack.c.b16 %v2133, %v2125
    %v3126 = vpack.c.b16 %v2142, %v2134
    %v3127 = vpack.c.b16 %v2143, %v2135
    %v3128 = vpack.c.b16 %v2144, %v2136
    %v3129 = vpack.c.b16 %v2145, %v2137
    %v3130 = vpack.c.b16 %v2146, %v2138
    %v3131 = vpack.c.b16 %v2147, %v2139
    %v3132 = vpack.c.b16 %v2148, %v2140
    %v3133 = vpack.c.b16 %v2149, %v2141
    %v3134 = vpack.c.b16 %v2158, %v2150
    %v3135 = vpack.c.b16 %v2159, %v2151
    %v3136 = vpack.c.b16 %v2160, %v2152
    %v3137 = vpack.c.b16 %v2161, %v2153
    %v3138 = vpack.c.b16 %v2162, %v2154
    %v3139 = vpack.c.b16 %v2163, %v2155
    %v3140 = vpack.c.b16 %v2164, %v2156
    %v3141 = vpack.c.b16 %v2165, %v2157
    %v3142 = vpack.c.b16 %v2174, %v2166
    %v3143 = vpack.c.b16 %v2175, %v2167
    %v3144 = vpack.c.b16 %v2176, %v2168
    %v3145 = vpack.c.b16 %v2177, %v2169
    %v3146 = vpack.c.b16 %v2178, %v2170
    %v3147 = vpack.c.b16 %v2179, %v2171
    %v3148 = vpack.c.b16 %v2180, %v2172
    %v3149 = vpack.c.b16 %v2181, %v2173
    %v3150 = vpack.c.b16 %v2190, %v2182
    %v3151 = vpack.c.b16 %v2191, %v2183
    %v3152 = vpack.c.b16 %v2192, %v2184
    %v3153 = vpack.c.b16 %v2193, %v2185
    %v3154 = vpack.c.b16 %v2194, %v2186
    %v3155 = vpack.c.b16 %v2195, %v2187
    %v3156 = vpack.c.b16 %v2196, %v2188
    %v3157 = vpack.c.b16 %v2197, %v2189
    %v3158 = vpack.c.b16 %v2206, %v2198
    %v3159 = vpack.c.b16 %v2207, %v2199
    %v3160 = vpack.c.b16 %v2208, %v2200
    %v3161 = vpack.c.b16 %v2209, %v2201
    %v3162 = vpack.c.b16 %v2210, %v2202
    %v3163 = vpack.c.b16 %v2211, %v2203
    %v3164 = vpack.c.b16 %v2212, %v2204
    %v3165 = vpack.c.b16 %v2213, %v2205
    %v3166 = vpack.c.b16 %v2222, %v2214
    %v3167 = vpack.c.b16 %v2223, %v2215
    %v3168 = vpack.c.b16 %v2224, %v2216
    %v3169 = vpack.c.b16 %v2225, %v2217
    %v3170 = vpack.c.b16 %v2226, %v2218
    %v3171 = vpack.c.b16 %v2227, %v2219
    %v3172 = vpack.c.b16 %v2228, %v2220
    %v3173 = vpack.c.b16 %v2229, %v2221
    %v3174 = vpack.c.b16 %v2238, %v2230
    %v3175 = vpack.c.b16 %v2239, %v2231
    %v3176 = vpack.c.b16 %v2240, %v2232
    %v3177 = vpack.c.b16 %v2241, %v2233
    %v3178 = vpack.c.b16 %v2242, %v2234
    %v3179 = vpack.c.b16 %v2243, %v2235
    %v3180 = vpack.c.b16 %v2244, %v2236
    %v3181 = vpack.c.b16 %v2245, %v2237
    %v3182 = vpack.c.b16 %v2254, %v2246
    %v3183 = vpack.c.b16 %v2255, %v2247
    %v3184 = vpack.c.b16 %v2256, %v2248
    %v3185 = vpack.c.b16 %v2257, %v2249
    %v3186 = vpack.c.b16 %v2258, %v2250
    %v3187 = vpack.c.b16 %v2259, %v2251
    %v3188 = vpack.c.b16 %v2260, %v2252
    %v3189 = vpack.c.b16 %v2261, %v2253
    %v3190 = vpack.c.b16 %v2270, %v2262
    %v3191 = vpack.c.b16 %v2271, %v2263
    %v3192 = vpack.c.b16 %v2272, %v2264
    %v3193 = vpack.c.b16 %v2273, %v2265
    %v3194 = vpack.c.b16 %v2274, %v2266
    %v3195 = vpack.c.b16 %v2275, %v2267
    %v3196 = vpack.c.b16 %v2276, %v2268
    %v3197 = vpack.c.b16 %v2277, %v2269
    %v3198 = vpack.c.b16 %v2286, %v2278
    %v3199 = vpack.c.b16 %v2287, %v2279
    %v3200 = vpack.c.b16 %v2288, %v2280
    %v3201 = vpack.c.b16 %v2289, %v2281
    %v3202 = vpack.c.b16 %v2290, %v2282
    %v3203 = vpack.c.b16 %v2291, %v2283
    %v3204 = vpack.c.b16 %v2292, %v2284
    %v3205 = vpack.c.b16 %v2293, %v2285
    %v3206 = vpack.c.b16 %v2302, %v2294
    %v3207 = vpack.c.b16 %v2303, %v2295
    %v3208 = vpack.c.b16 %v2304, %v2296
    %v3209 = vpack.c.b16 %v2305, %v2297
    %v3210 = vpack.c.b16 %v2306, %v2298
    %v3211 = vpack.c.b16 %v2307, %v2299
    %v3212 = vpack.c.b16 %v2308, %v2300
    %v3213 = vpack.c.b16 %v2309, %v2301
    %v3214 = vpack.c.b16 %v2318, %v2310
    %v3215 = vpack.c.b16 %v2319, %v2311
    %v3216 = vpack.c.b16 %v2320, %v2312
    %v3217 = vpack.c.b16 %v2321, %v2313
    %v3218 = vpack.c.b16 %v2322, %v2314
    %v3219 = vpack.c.b16 %v2323, %v2315
    %v3220 = vpack.c.b16 %v2324, %v2316
    %v3221 = vpack.c.b16 %v2325, %v2317
    %v3222 = vpack.c.b16 %v2334, %v2326
    %v3223 = vpack.c.b16 %v2335, %v2327
    %v3224 = vpack.c.b16 %v2336, %v2328
    %v3225 = vpack.c.b16 %v2337, %v2329
    %v3226 = vpack.c.b16 %v2338, %v2330
    %v3227 = vpack.c.b16 %v2339, %v2331
    %v3228 = vpack.c.b16 %v2340, %v2332
    %v3229 = vpack.c.b16 %v2341, %v2333
    %v3230 = vpack.c.b16 %v2350, %v2342
    %v3231 = vpack.c.b16 %v2351, %v2343
    %v3232 = vpack.c.b16 %v2352, %v2344
    %v3233 = vpack.c.b16 %v2353, %v2345
    %v3234 = vpack.c.b16 %v2354, %v2346
    %v3235 = vpack.c.b16 %v2355, %v2347
    %v3236 = vpack.c.b16 %v2356, %v2348
    %v3237 = vpack.c.b16 %v2357, %v2349
    %v3238 = vpack.c.b16 %v2366, %v2358
    %v3239 = vpack.c.b16 %v2367, %v2359
    %v3240 = vpack.c.b16 %v2368, %v2360
    %v3241 = vpack.c.b16 %v2369, %v2361
    %v3242 = vpack.c.b16 %v2370, %v2362
    %v3243 = vpack.c.b16 %v2371, %v2363
    %v3244 = vpack.c.b16 %v2372, %v2364
    %v3245 = vpack.c.b16 %v2373, %v2365
    %v3246 = vpack.c.b16 %v2382, %v2374
    %v3247 = vpack.c.b16 %v2383, %v2375
    %v3248 = vpack.c.b16 %v2384, %v2376
    %v3249 = vpack.c.b16 %v2385, %v2377
    %v3250 = vpack.c.b16 %v2386, %v2378
    %v3251 = vpack.c.b16 %v2387, %v2379
    %v3252 = vpack.c.b16 %v2388, %v2380
    %v3253 = vpack.c.b16 %v2389, %v2381
    %v3254 = vpack.c.b16 %v2398, %v2390
    %v3255 = vpack.c.b16 %v2399, %v2391
    %v3256 = vpack.c.b16 %v2400, %v2392
    %v3257 = vpack.c.b16 %v2401, %v2393
    %v3258 = vpack.c.b16 %v2402, %v2394
    %v3259 = vpack.c.b16 %v2403, %v2395
    %v3260 = vpack.c.b16 %v2404, %v2396
    %v3261 = vpack.c.b16 %v2405, %v2397
    %v3262 = vpack.c.b16 %v2414, %v2406
    %v3263 = vpack.c.b16 %v2415, %v2407
    %v3264 = vpack.c.b16 %v2416, %v2408
    %v3265 = vpack.c.b16 %v2417, %v2409
    %v3266 = vpack.c.b16 %v2418, %v2410
    %v3267 = vpack.c.b16 %v2419, %v2411
    %v3268 = vpack.c.b16 %v2420, %v2412
    %v3269 = vpack.c.b16 %v2421, %v2413
    %v3270 = vpack.c.b16 %v2430, %v2422
    %v3271 = vpack.c.b16 %v2431, %v2423
    %v3272 = vpack.c.b16 %v2432, %v2424
    %v3273 = vpack.c.b16 %v2433, %v2425
    %v3274 = vpack.c.b16 %v2434, %v2426
    %v3275 = vpack.c.b16 %v2435, %v2427
    %v3276 = vpack.c.b16 %v2436, %v2428
    %v3277 = vpack.c.b16 %v2437, %v2429
    %v3278 = vpack.c.b16 %v2446, %v2438
    %v3279 = vpack.c.b16 %v2447, %v2439
    %v3280 = vpack.c.b16 %v2448, %v2440
    %v3281 = vpack.c.b16 %v2449, %v2441
    %v3282 = vpack.c.b16 %v2450, %v2442
    %v3283 = vpack.c.b16 %v2451, %v2443
    %v3284 = vpack.c.b16 %v2452, %v2444
    %v3285 = vpack.c.b16 %v2453, %v2445
    %v3286 = vpack.c.b16 %v2462, %v2454
    %v3287 = vpack.c.b16 %v2463, %v2455
    %v3288 = vpack.c.b16 %v2464, %v2456
    %v3289 = vpack.c.b16 %v2465, %v2457
    %v3290 = vpack.c.b16 %v2466, %v2458
    %v3291 = vpack.c.b16 %v2467, %v2459
    %v3292 = vpack.c.b16 %v2468, %v2460
    %v3293 = vpack.c.b16 %v2469, %v2461
    %v3294 = vpack.c.b16 %v2478, %v2470
    %v3295 = vpack.c.b16 %v2479, %v2471
    %v3296 = vpack.c.b16 %v2480, %v2472
    %v3297 = vpack.c.b16 %v2481, %v2473
    %v3298 = vpack.c.b16 %v2482, %v2474
    %v3299 = vpack.c.b16 %v2483, %v2475
    %v3300 = vpack.c.b16 %v2484, %v2476
    %v3301 = vpack.c.b16 %v2485, %v2477
    %v3302 = vpack.c.b16 %v2494, %v2486
    %v3303 = vpack.c.b16 %v2495, %v2487
    %v3304 = vpack.c.b16 %v2496, %v2488
    %v3305 = vpack.c.b16 %v2497, %v2489
    %v3306 = vpack.c.b16 %v2498, %v2490
    %v3307 = vpack.c.b16 %v2499, %v2491
    %v3308 = vpack.c.b16 %v2500, %v2492
    %v3309 = vpack.c.b16 %v2501, %v2493
    %v3310 = vpack.c.b16 %v2510, %v2502
    %v3311 = vpack.c.b16 %v2511, %v2503
    %v3312 = vpack.c.b16 %v2512, %v2504
    %v3313 = vpack.c.b16 %v2513, %v2505
    %v3314 = vpack.c.b16 %v2514, %v2506
    %v3315 = vpack.c.b16 %v2515, %v2507
    %v3316 = vpack.c.b16 %v2516, %v2508
    %v3317 = vpack.c.b16 %v2517, %v2509
    %v3318 = vpack.c.b16 %v2526, %v2518
    %v3319 = vpack.c.b16 %v2527, %v2519
    %v3320 = vpack.c.b16 %v2528, %v2520
    %v3321 = vpack.c.b16 %v2529, %v2521
    %v3322 = vpack.c.b16 %v2530, %v2522
    %v3323 = vpack.c.b16 %v2531, %v2523
    %v3324 = vpack.c.b16 %v2532, %v2524
    %v3325 = vpack.c.b16 %v2533, %v2525
    %v3326 = vpack.c.b16 %v2542, %v2534
    %v3327 = vpack.c.b16 %v2543, %v2535
    %v3328 = vpack.c.b16 %v2544, %v2536
    %v3329 = vpack.c.b16 %v2545, %v2537
    %v3330 = vpack.c.b16 %v2546, %v2538
    %v3331 = vpack.c.b16 %v2547, %v2539
    %v3332 = vpack.c.b16 %v2548, %v2540
    %v3333 = vpack.c.b16 %v2549, %v2541
    %v3334 = vpack.c.b16 %v2558, %v2550
    %v3335 = vpack.c.b16 %v2559, %v2551
    %v3336 = vpack.c.b16 %v2560, %v2552
    %v3337 = vpack.c.b16 %v2561, %v2553
    %v3338 = vpack.c.b16 %v2562, %v2554
    %v3339 = vpack.c.b16 %v2563, %v2555
    %v3340 = vpack.c.b16 %v2564, %v2556
    %v3341 = vpack.c.b16 %v2565, %v2557
    %v3342 = vpack.c.b16 %v2574, %v2566
    %v3343 = vpack.c.b16 %v2575, %v2567
    %v3344 = vpack.c.b16 %v2576, %v2568
    %v3345 = vpack.c.b16 %v2577, %v2569
    %v3346 = vpack.c.b16 %v2578, %v2570
    %v3347 = vpack.c.b16 %v2579, %v2571
    %v3348 = vpack.c.b16 %v2580, %v2572
    %v3349 = vpack.c.b16 %v2581, %v2573
    %v3350 = vpack.c.b16 %v2590, %v2582
    %v3351 = vpack.c.b16 %v2591, %v2583
    %v3352 = vpack.c.b16 %v2592, %v2584
    %v3353 = vpack.c.b16 %v2593, %v2585
    %v3354 = vpack.c.b16 %v2594, %v2586
    %v3355 = vpack.c.b16 %v2595, %v2587
    %v3356 = vpack.c.b16 %v2596, %v2588
    %v3357 = vpack.c.b16 %v2597, %v2589
    %v3358 = vpack.c.b16 %v2606, %v2598
    %v3359 = vpack.c.b16 %v2607, %v2599
    %v3360 = vpack.c.b16 %v2608, %v2600
    %v3361 = vpack.c.b16 %v2609, %v2601
    %v3362 = vpack.c.b16 %v2610, %v2602
    %v3363 = vpack.c.b16 %v2611, %v2603
    %v3364 = vpack.c.b16 %v2612, %v2604
    %v3365 = vpack.c.b16 %v2613, %v2605
    %v3366 = vpack.c.b16 %v2622, %v2614
    %v3367 = vpack.c.b16 %v2623, %v2615
    %v3368 = vpack.c.b16 %v2624, %v2616
    %v3369 = vpack.c.b16 %v2625, %v2617
    %v3370 = vpack.c.b16 %v2626, %v2618
    %v3371 = vpack.c.b16 %v2627, %v2619
    %v3372 = vpack.c.b16 %v2628, %v2620
    %v3373 = vpack.c.b16 %v2629, %v2621
    %v3374 = vpack.c.b16 %v2638, %v2630
    %v3375 = vpack.c.b16 %v2639, %v2631
    %v3376 = vpack.c.b16 %v2640, %v2632
    %v3377 = vpack.c.b16 %v2641, %v2633
    %v3378 = vpack.c.b16 %v2642, %v2634
    %v3379 = vpack.c.b16 %v2643, %v2635
    %v3380 = vpack.c.b16 %v2644, %v2636
    %v3381 = vpack.c.b16 %v2645, %v2637
    %v3382 = vpack.c.b16 %v2654, %v2646
    %v3383 = vpack.c.b16 %v2655, %v2647
    %v3384 = vpack.c.b16 %v2656, %v2648
    %v3385 = vpack.c.b16 %v2657, %v2649
    %v3386 = vpack.c.b16 %v2658, %v2650
    %v3387 = vpack.c.b16 %v2659, %v2651
    %v3388 = vpack.c.b16 %v2660, %v2652
    %v3389 = vpack.c.b16 %v2661, %v2653
    %v3390 = vpack.c.b16 %v2670, %v2662
    %v3391 = vpack.c.b16 %v2671, %v2663
    %v3392 = vpack.c.b16 %v2672, %v2664
    %v3393 = vpack.c.b16 %v2673, %v2665
    %v3394 = vpack.c.b16 %v2674, %v2666
    %v3395 = vpack.c.b16 %v2675, %v2667
    %v3396 = vpack.c.b16 %v2676, %v2668
    %v3397 = vpack.c.b16 %v2677, %v2669
    %v3398 = vpack.c.b16 %v2686, %v2678
    %v3399 = vpack.c.b16 %v2687, %v2679
    %v3400 = vpack.c.b16 %v2688, %v2680
    %v3401 = vpack.c.b16 %v2689, %v2681
    %v3402 = vpack.c.b16 %v2690, %v2682
    %v3403 = vpack.c.b16 %v2691, %v2683
    %v3404 = vpack.c.b16 %v2692, %v2684
    %v3405 = vpack.c.b16 %v2693, %v2685
    %v3406 = vpack.c.b16 %v2702, %v2694
    %v3407 = vpack.c.b16 %v2703, %v2695
    %v3408 = vpack.c.b16 %v2704, %v2696
    %v3409 = vpack.c.b16 %v2705, %v2697
    %v3410 = vpack.c.b16 %v2706, %v2698
    %v3411 = vpack.c.b16 %v2707, %v2699
    %v3412 = vpack.c.b16 %v2708, %v2700
    %v3413 = vpack.c.b16 %v2709, %v2701
    %v3414 = vpack.c.b16 %v2718, %v2710
    %v3415 = vpack.c.b16 %v2719, %v2711
    %v3416 = vpack.c.b16 %v2720, %v2712
    %v3417 = vpack.c.b16 %v2721, %v2713
    %v3418 = vpack.c.b16 %v2722, %v2714
    %v3419 = vpack.c.b16 %v2723, %v2715
    %v3420 = vpack.c.b16 %v2724, %v2716
    %v3421 = vpack.c.b16 %v2725, %v2717
    %v3422 = vpack.c.b16 %v2734, %v2726
    %v3423 = vpack.c.b16 %v2735, %v2727
    %v3424 = vpack.c.b16 %v2736, %v2728
    %v3425 = vpack.c.b16 %v2737, %v2729
    %v3426 = vpack.c.b16 %v2738, %v2730
    %v3427 = vpack.c.b16 %v2739, %v2731
    %v3428 = vpack.c.b16 %v2740, %v2732
    %v3429 = vpack.c.b16 %v2741, %v2733
    %v3430 = vpack.c.b16 %v2750, %v2742
    %v3431 = vpack.c.b16 %v2751, %v2743
    %v3432 = vpack.c.b16 %v2752, %v2744
    %v3433 = vpack.c.b16 %v2753, %v2745
    %v3434 = vpack.c.b16 %v2754, %v2746
    %v3435 = vpack.c.b16 %v2755, %v2747
    %v3436 = vpack.c.b16 %v2756, %v2748
    %v3437 = vpack.c.b16 %v2757, %v2749
    %v3438 = vpack.c.b16 %v2766, %v2758
    %v3439 = vpack.c.b16 %v2767, %v2759
    %v3440 = vpack.c.b16 %v2768, %v2760
    %v3441 = vpack.c.b16 %v2769, %v2761
    %v3442 = vpack.c.b16 %v2770, %v2762
    %v3443 = vpack.c.b16 %v2771, %v2763
    %v3444 = vpack.c.b16 %v2772, %v2764
    %v3445 = vpack.c.b16 %v2773, %v2765
    %v3446 = vpack.c.b16 %v2782, %v2774
    %v3447 = vpack.c.b16 %v2783, %v2775
    %v3448 = vpack.c.b16 %v2784, %v2776
    %v3449 = vpack.c.b16 %v2785, %v2777
    %v3450 = vpack.c.b16 %v2786, %v2778
    %v3451 = vpack.c.b16 %v2787, %v2779
    %v3452 = vpack.c.b16 %v2788, %v2780
    %v3453 = vpack.c.b16 %v2789, %v2781
    %v3454 = vpack.c.b16 %v2798, %v2790
    %v3455 = vpack.c.b16 %v2799, %v2791
    %v3456 = vpack.c.b16 %v2800, %v2792
    %v3457 = vpack.c.b16 %v2801, %v2793
    %v3458 = vpack.c.b16 %v2802, %v2794
    %v3459 = vpack.c.b16 %v2803, %v2795
    %v3460 = vpack.c.b16 %v2804, %v2796
    %v3461 = vpack.c.b16 %v2805, %v2797
    %v3462 = vpack.c.b16 %v2814, %v2806
    %v3463 = vpack.c.b16 %v2815, %v2807
    %v3464 = vpack.c.b16 %v2816, %v2808
    %v3465 = vpack.c.b16 %v2817, %v2809
    %v3466 = vpack.c.b16 %v2818, %v2810
    %v3467 = vpack.c.b16 %v2819, %v2811
    %v3468 = vpack.c.b16 %v2820, %v2812
    %v3469 = vpack.c.b16 %v2821, %v2813
    %v3470 = vpack.c.b16 %v2830, %v2822
    %v3471 = vpack.c.b16 %v2831, %v2823
    %v3472 = vpack.c.b16 %v2832, %v2824
    %v3473 = vpack.c.b16 %v2833, %v2825
    %v3474 = vpack.c.b16 %v2834, %v2826
    %v3475 = vpack.c.b16 %v2835, %v2827
    %v3476 = vpack.c.b16 %v2836, %v2828
    %v3477 = vpack.c.b16 %v2837, %v2829
    %v3478 = vpack.c.b16 %v2846, %v2838
    %v3479 = vpack.c.b16 %v2847, %v2839
    %v3480 = vpack.c.b16 %v2848, %v2840
    %v3481 = vpack.c.b16 %v2849, %v2841
    %v3482 = vpack.c.b16 %v2850, %v2842
    %v3483 = vpack.c.b16 %v2851, %v2843
    %v3484 = vpack.c.b16 %v2852, %v2844
    %v3485 = vpack.c.b16 %v2853, %v2845
    %v3486 = vpack.c.b16 %v2862, %v2854
    %v3487 = vpack.c.b16 %v2863, %v2855
    %v3488 = vpack.c.b16 %v2864, %v2856
    %v3489 = vpack.c.b16 %v2865, %v2857
    %v3490 = vpack.c.b16 %v2866, %v2858
    %v3491 = vpack.c.b16 %v2867, %v2859
    %v3492 = vpack.c.b16 %v2868, %v2860
    %v3493 = vpack.c.b16 %v2869, %v2861
    %v3494 = vpack.c.b16 %v2878, %v2870
    %v3495 = vpack.c.b16 %v2879, %v2871
    %v3496 = vpack.c.b16 %v2880, %v2872
    %v3497 = vpack.c.b16 %v2881, %v2873
    %v3498 = vpack.c.b16 %v2882, %v2874
    %v3499 = vpack.c.b16 %v2883, %v2875
    %v3500 = vpack.c.b16 %v2884, %v2876
    %v3501 = vpack.c.b16 %v2885, %v2877
    %v3502 = vpack.c.b16 %v2894, %v2886
    %v3503 = vpack.c.b16 %v2895, %v2887
    %v3504 = vpack.c.b16 %v2896, %v2888
    %v3505 = vpack.c.b16 %v2897, %v2889
    %v3506 = vpack.c.b16 %v2898, %v2890
    %v3507 = vpack.c.b16 %v2899, %v2891
    %v3508 = vpack.c.b16 %v2900, %v2892
    %v3509 = vpack.c.b16 %v2901, %v2893
    %v3510 = vpack.c.b16 %v2910, %v2902
    %v3511 = vpack.c.b16 %v2911, %v2903
    %v3512 = vpack.c.b16 %v2912, %v2904
    %v3513 = vpack.c.b16 %v2913, %v2905
    %v3514 = vpack.c.b16 %v2914, %v2906
    %v3515 = vpack.c.b16 %v2915, %v2907
    %v3516 = vpack.c.b16 %v2916, %v2908
    %v3517 = vpack.c.b16 %v2917, %v2909
    %v3518 = vpack.c.b16 %v2926, %v2918
    %v3519 = vpack.c.b16 %v2927, %v2919
    %v3520 = vpack.c.b16 %v2928, %v2920
    %v3521 = vpack.c.b16 %v2929, %v2921
    %v3522 = vpack.c.b16 %v2930, %v2922
    %v3523 = vpack.c.b16 %v2931, %v2923
    %v3524 = vpack.c.b16 %v2932, %v2924
    %v3525 = vpack.c.b16 %v2933, %v2925
    %v3526 = vpack.c.b16 %v2942, %v2934
    %v3527 = vpack.c.b16 %v2943, %v2935
    %v3528 = vpack.c.b16 %v2944, %v2936
    %v3529 = vpack.c.b16 %v2945, %v2937
    %v3530 = vpack.c.b16 %v2946, %v2938
    %v3531 = vpack.c.b16 %v2947, %v2939
    %v3532 = vpack.c.b16 %v2948, %v2940
    %v3533 = vpack.c.b16 %v2949, %v2941
    %v3534 = vpack.c.b16 %v2958, %v2950
    %v3535 = vpack.c.b16 %v2959, %v2951
    %v3536 = vpack.c.b16 %v2960, %v2952
    %v3537 = vpack.c.b16 %v2961, %v2953
    %v3538 = vpack.c.b16 %v2962, %v2954
    %v3539 = vpack.c.b16 %v2963, %v2955
    %v3540 = vpack.c.b16 %v2964, %v2956
    %v3541 = vpack.c.b16 %v2965, %v2957
    %v3542 = vpack.c.b16 %v2974, %v2966
    %v3543 = vpack.c.b16 %v2975, %v2967
    %v3544 = vpack.c.b16 %v2976, %v2968
    %v3545 = vpack.c.b16 %v2977, %v2969
    %v3546 = vpack.c.b16 %v2978, %v2970
    %v3547 = vpack.c.b16 %v2979, %v2971
    %v3548 = vpack.c.b16 %v2980, %v2972
    %v3549 = vpack.c.b16 %v2981, %v2973
    %v3550 = vpack.c.b16 %v2990, %v2982
    %v3551 = vpack.c.b16 %v2991, %v2983
    %v3552 = vpack.c.b16 %v2992, %v2984
    %v3553 = vpack.c.b16 %v2993, %v2985
    %v3554 = vpack.c.b16 %v2994, %v2986
    %v3555 = vpack.c.b16 %v2995, %v2987
    %v3556 = vpack.c.b16 %v2996, %v2988
    %v3557 = vpack.c.b16 %v2997, %v2989
    %v3558 = vpack.c.b16 %v3006, %v2998
    %v3559 = vpack.c.b16 %v3007, %v2999
    %v3560 = vpack.c.b16 %v3008, %v3000
    %v3561 = vpack.c.b16 %v3009, %v3001
    %v3562 = vpack.c.b16 %v3010, %v3002
    %v3563 = vpack.c.b16 %v3011, %v3003
    %v3564 = vpack.c.b16 %v3012, %v3004
    %v3565 = vpack.c.b16 %v3013, %v3005
    %v3566 = vpack.c.b16 %v3022, %v3014
    %v3567 = vpack.c.b16 %v3023, %v3015
    %v3568 = vpack.c.b16 %v3024, %v3016
    %v3569 = vpack.c.b16 %v3025, %v3017
    %v3570 = vpack.c.b16 %v3026, %v3018
    %v3571 = vpack.c.b16 %v3027, %v3019
    %v3572 = vpack.c.b16 %v3028, %v3020
    %v3573 = vpack.c.b16 %v3029, %v3021
    %v3574 = vpack.c.b16 %v3038, %v3030
    %v3575 = vpack.c.b16 %v3039, %v3031
    %v3576 = vpack.c.b16 %v3040, %v3032
    %v3577 = vpack.c.b16 %v3041, %v3033
    %v3578 = vpack.c.b16 %v3042, %v3034
    %v3579 = vpack.c.b16 %v3043, %v3035
    %v3580 = vpack.c.b16 %v3044, %v3036
    %v3581 = vpack.c.b16 %v3045, %v3037
    %v3582 = vpack.c.b16 %v3054, %v3046
    %v3583 = vpack.c.b16 %v3055, %v3047
    %v3584 = vpack.c.b16 %v3056, %v3048
    %v3585 = vpack.c.b16 %v3057, %v3049
    %v3586 = vpack.c.b16 %v3058, %v3050
    %v3587 = vpack.c.b16 %v3059, %v3051
    %v3588 = vpack.c.b16 %v3060, %v3052
    %v3589 = vpack.c.b16 %v3061, %v3053
    %v3590 = vpack.c.b16 %v3070, %v3062
    %v3591 = vpack.c.b16 %v3071, %v3063
    %v3592 = vpack.c.b16 %v3072, %v3064
    %v3593 = vpack.c.b16 %v3073, %v3065
    %v3594 = vpack.c.b16 %v3074, %v3066
    %v3595 = vpack.c.b16 %v3075, %v3067
    %v3596 = vpack.c.b16 %v3076, %v3068
    %v3597 = vpack.c.b16 %v3077, %v3069
    %v3598 = vpack.c.b16 %v3086, %v3078
    %v3599 = vpack.c.b16 %v3087, %v3079
    %v3600 = vpack.c.b16 %v3088, %v3080
    %v3601 = vpack.c.b16 %v3089, %v3081
    %v3602 = vpack.c.b16 %v3090, %v3082
    %v3603 = vpack.c.b16 %v3091, %v3083
    %v3604 = vpack.c.b16 %v3092, %v3084
    %v3605 = vpack.c.b16 %v3093, %v3085
    %4118 = vmatpush.bf16.msra.mxu0 %v3150
    %4119 = vmatpush.bf16.msra.mxu0 %v3142
    %4120 = vmatpush.bf16.msra.mxu0 %v3134
    %4121 = vmatpush.bf16.msra.mxu0 %v3126
    %4122 = vmatpush.bf16.msra.mxu0 %v3118
    %4123 = vmatpush.bf16.msra.mxu0 %v3110
    %4124 = vmatpush.bf16.msra.mxu0 %v3102
    %4125 = vmatpush.bf16.msra.mxu0 %v3094
    %4126 = vmatmul.bf16.gmra.mxu0 %v1038
    %v4127 = vpop.f32.mrf.mxu0
    %v4128 = vadd.f32 0.0, %v4127
    %v4129 = vpop.f32.mrf.mxu0
    %4130 = vdwg.mxu0
    %4131 = vmatpush.bf16.msra.mxu0 %v3214
    %4132 = vmatpush.bf16.msra.mxu0 %v3206
    %4133 = vmatpush.bf16.msra.mxu0 %v3198
    %4134 = vmatpush.bf16.msra.mxu0 %v3190
    %4135 = vmatpush.bf16.msra.mxu0 %v3182
    %4136 = vmatpush.bf16.msra.mxu0 %v3174
    %4137 = vmatpush.bf16.msra.mxu0 %v3166
    %4138 = vmatpush.bf16.msra.mxu0 %v3158
    %4139 = vmatmul.bf16.gmra.mxu0 %v1039
    %v4140 = vpop.f32.mrf.mxu0
    %v4141 = vadd.f32 %v4128, %v4140
    %v4142 = vpop.f32.mrf.mxu0
    %4143 = vdwg.mxu0
    %4144 = vmatpush.bf16.msra.mxu0 %v3278
    %4145 = vmatpush.bf16.msra.mxu0 %v3270
    %4146 = vmatpush.bf16.msra.mxu0 %v3262
    %4147 = vmatpush.bf16.msra.mxu0 %v3254
    %4148 = vmatpush.bf16.msra.mxu0 %v3246
    %4149 = vmatpush.bf16.msra.mxu0 %v3238
    %4150 = vmatpush.bf16.msra.mxu0 %v3230
    %4151 = vmatpush.bf16.msra.mxu0 %v3222
    %4152 = vmatmul.bf16.gmra.mxu0 %v1040
    %v4153 = vpop.f32.mrf.mxu0
    %v4154 = vadd.f32 %v4141, %v4153
    %v4155 = vpop.f32.mrf.mxu0
    %4156 = vdwg.mxu0
    %4157 = vmatpush.bf16.msra.mxu0 %v3342
    %4158 = vmatpush.bf16.msra.mxu0 %v3334
    %4159 = vmatpush.bf16.msra.mxu0 %v3326
    %4160 = vmatpush.bf16.msra.mxu0 %v3318
    %4161 = vmatpush.bf16.msra.mxu0 %v3310
    %4162 = vmatpush.bf16.msra.mxu0 %v3302
    %4163 = vmatpush.bf16.msra.mxu0 %v3294
    %4164 = vmatpush.bf16.msra.mxu0 %v3286
    %4165 = vmatmul.bf16.gmra.mxu0 %v1041
    %v4166 = vpop.f32.mrf.mxu0
    %v4167 = vadd.f32 %v4154, %v4166
    %v4168 = vpop.f32.mrf.mxu0
    %4169 = vdwg.mxu0
    %4170 = vmatpush.bf16.msra.mxu0 %v3406
    %4171 = vmatpush.bf16.msra.mxu0 %v3398
    %4172 = vmatpush.bf16.msra.mxu0 %v3390
    %4173 = vmatpush.bf16.msra.mxu0 %v3382
    %4174 = vmatpush.bf16.msra.mxu0 %v3374
    %4175 = vmatpush.bf16.msra.mxu0 %v3366
    %4176 = vmatpush.bf16.msra.mxu0 %v3358
    %4177 = vmatpush.bf16.msra.mxu0 %v3350
    %4178 = vmatmul.bf16.gmra.mxu0 %v1042
    %v4179 = vpop.f32.mrf.mxu0
    %v4180 = vadd.f32 %v4167, %v4179
    %v4181 = vpop.f32.mrf.mxu0
    %4182 = vdwg.mxu0
    %4183 = vmatpush.bf16.msra.mxu0 %v3470
    %4184 = vmatpush.bf16.msra.mxu0 %v3462
    %4185 = vmatpush.bf16.msra.mxu0 %v3454
    %4186 = vmatpush.bf16.msra.mxu0 %v3446
    %4187 = vmatpush.bf16.msra.mxu0 %v3438
    %4188 = vmatpush.bf16.msra.mxu0 %v3430
    %4189 = vmatpush.bf16.msra.mxu0 %v3422
    %4190 = vmatpush.bf16.msra.mxu0 %v3414
    %4191 = vmatmul.bf16.gmra.mxu0 %v1043
    %v4192 = vpop.f32.mrf.mxu0
    %v4193 = vadd.f32 %v4180, %v4192
    %v4194 = vpop.f32.mrf.mxu0
    %4195 = vdwg.mxu0
    %4196 = vmatpush.bf16.msra.mxu0 %v3534
    %4197 = vmatpush.bf16.msra.mxu0 %v3526
    %4198 = vmatpush.bf16.msra.mxu0 %v3518
    %4199 = vmatpush.bf16.msra.mxu0 %v3510
    %4200 = vmatpush.bf16.msra.mxu0 %v3502
    %4201 = vmatpush.bf16.msra.mxu0 %v3494
    %4202 = vmatpush.bf16.msra.mxu0 %v3486
    %4203 = vmatpush.bf16.msra.mxu0 %v3478
    %4204 = vmatmul.bf16.gmra.mxu0 %v1044
    %v4205 = vpop.f32.mrf.mxu0
    %v4206 = vadd.f32 %v4193, %v4205
    %v4207 = vpop.f32.mrf.mxu0
    %4208 = vdwg.mxu0
    %4209 = vmatpush.bf16.msra.mxu0 %v3598
    %4210 = vmatpush.bf16.msra.mxu0 %v3590
    %4211 = vmatpush.bf16.msra.mxu0 %v3582
    %4212 = vmatpush.bf16.msra.mxu0 %v3574
    %4213 = vmatpush.bf16.msra.mxu0 %v3566
    %4214 = vmatpush.bf16.msra.mxu0 %v3558
    %4215 = vmatpush.bf16.msra.mxu0 %v3550
    %4216 = vmatpush.bf16.msra.mxu0 %v3542
    %4217 = vmatmul.bf16.gmra.mxu0 %v1045
    %v4218 = vpop.f32.mrf.mxu0
    %v4219 = vadd.f32 %v4206, %v4218
    %v4220 = vpop.f32.mrf.mxu0
    %4221 = vdwg.mxu0
    %4222 = vmatpush.bf16.msra.mxu0 %v3151
    %4223 = vmatpush.bf16.msra.mxu0 %v3143
    %4224 = vmatpush.bf16.msra.mxu0 %v3135
    %4225 = vmatpush.bf16.msra.mxu0 %v3127
    %4226 = vmatpush.bf16.msra.mxu0 %v3119
    %4227 = vmatpush.bf16.msra.mxu0 %v3111
    %4228 = vmatpush.bf16.msra.mxu0 %v3103
    %4229 = vmatpush.bf16.msra.mxu0 %v3095
    %4230 = vmatmul.bf16.gmra.mxu0 %v1038
    %v4231 = vpop.f32.mrf.mxu0
    %v4232 = vadd.f32 0.0, %v4231
    %v4233 = vpop.f32.mrf.mxu0
    %4234 = vdwg.mxu0
    %4235 = vmatpush.bf16.msra.mxu0 %v3215
    %4236 = vmatpush.bf16.msra.mxu0 %v3207
    %4237 = vmatpush.bf16.msra.mxu0 %v3199
    %4238 = vmatpush.bf16.msra.mxu0 %v3191
    %4239 = vmatpush.bf16.msra.mxu0 %v3183
    %4240 = vmatpush.bf16.msra.mxu0 %v3175
    %4241 = vmatpush.bf16.msra.mxu0 %v3167
    %4242 = vmatpush.bf16.msra.mxu0 %v3159
    %4243 = vmatmul.bf16.gmra.mxu0 %v1039
    %v4244 = vpop.f32.mrf.mxu0
    %v4245 = vadd.f32 %v4232, %v4244
    %v4246 = vpop.f32.mrf.mxu0
    %4247 = vdwg.mxu0
    %4248 = vmatpush.bf16.msra.mxu0 %v3279
    %4249 = vmatpush.bf16.msra.mxu0 %v3271
    %4250 = vmatpush.bf16.msra.mxu0 %v3263
    %4251 = vmatpush.bf16.msra.mxu0 %v3255
    %4252 = vmatpush.bf16.msra.mxu0 %v3247
    %4253 = vmatpush.bf16.msra.mxu0 %v3239
    %4254 = vmatpush.bf16.msra.mxu0 %v3231
    %4255 = vmatpush.bf16.msra.mxu0 %v3223
    %4256 = vmatmul.bf16.gmra.mxu0 %v1040
    %v4257 = vpop.f32.mrf.mxu0
    %v4258 = vadd.f32 %v4245, %v4257
    %v4259 = vpop.f32.mrf.mxu0
    %4260 = vdwg.mxu0
    %4261 = vmatpush.bf16.msra.mxu0 %v3343
    %4262 = vmatpush.bf16.msra.mxu0 %v3335
    %4263 = vmatpush.bf16.msra.mxu0 %v3327
    %4264 = vmatpush.bf16.msra.mxu0 %v3319
    %4265 = vmatpush.bf16.msra.mxu0 %v3311
    %4266 = vmatpush.bf16.msra.mxu0 %v3303
    %4267 = vmatpush.bf16.msra.mxu0 %v3295
    %4268 = vmatpush.bf16.msra.mxu0 %v3287
    %4269 = vmatmul.bf16.gmra.mxu0 %v1041
    %v4270 = vpop.f32.mrf.mxu0
    %v4271 = vadd.f32 %v4258, %v4270
    %v4272 = vpop.f32.mrf.mxu0
    %4273 = vdwg.mxu0
    %4274 = vmatpush.bf16.msra.mxu0 %v3407
    %4275 = vmatpush.bf16.msra.mxu0 %v3399
    %4276 = vmatpush.bf16.msra.mxu0 %v3391
    %4277 = vmatpush.bf16.msra.mxu0 %v3383
    %4278 = vmatpush.bf16.msra.mxu0 %v3375
    %4279 = vmatpush.bf16.msra.mxu0 %v3367
    %4280 = vmatpush.bf16.msra.mxu0 %v3359
    %4281 = vmatpush.bf16.msra.mxu0 %v3351
    %4282 = vmatmul.bf16.gmra.mxu0 %v1042
    %v4283 = vpop.f32.mrf.mxu0
    %v4284 = vadd.f32 %v4271, %v4283
    %v4285 = vpop.f32.mrf.mxu0
    %4286 = vdwg.mxu0
    %4287 = vmatpush.bf16.msra.mxu0 %v3471
    %4288 = vmatpush.bf16.msra.mxu0 %v3463
    %4289 = vmatpush.bf16.msra.mxu0 %v3455
    %4290 = vmatpush.bf16.msra.mxu0 %v3447
    %4291 = vmatpush.bf16.msra.mxu0 %v3439
    %4292 = vmatpush.bf16.msra.mxu0 %v3431
    %4293 = vmatpush.bf16.msra.mxu0 %v3423
    %4294 = vmatpush.bf16.msra.mxu0 %v3415
    %4295 = vmatmul.bf16.gmra.mxu0 %v1043
    %v4296 = vpop.f32.mrf.mxu0
    %v4297 = vadd.f32 %v4284, %v4296
    %v4298 = vpop.f32.mrf.mxu0
    %4299 = vdwg.mxu0
    %4300 = vmatpush.bf16.msra.mxu0 %v3535
    %4301 = vmatpush.bf16.msra.mxu0 %v3527
    %4302 = vmatpush.bf16.msra.mxu0 %v3519
    %4303 = vmatpush.bf16.msra.mxu0 %v3511
    %4304 = vmatpush.bf16.msra.mxu0 %v3503
    %4305 = vmatpush.bf16.msra.mxu0 %v3495
    %4306 = vmatpush.bf16.msra.mxu0 %v3487
    %4307 = vmatpush.bf16.msra.mxu0 %v3479
    %4308 = vmatmul.bf16.gmra.mxu0 %v1044
    %v4309 = vpop.f32.mrf.mxu0
    %v4310 = vadd.f32 %v4297, %v4309
    %v4311 = vpop.f32.mrf.mxu0
    %4312 = vdwg.mxu0
    %4313 = vmatpush.bf16.msra.mxu0 %v3599
    %4314 = vmatpush.bf16.msra.mxu0 %v3591
    %4315 = vmatpush.bf16.msra.mxu0 %v3583
    %4316 = vmatpush.bf16.msra.mxu0 %v3575
    %4317 = vmatpush.bf16.msra.mxu0 %v3567
    %4318 = vmatpush.bf16.msra.mxu0 %v3559
    %4319 = vmatpush.bf16.msra.mxu0 %v3551
    %4320 = vmatpush.bf16.msra.mxu0 %v3543
    %4321 = vmatmul.bf16.gmra.mxu0 %v1045
    %v4322 = vpop.f32.mrf.mxu0
    %v4323 = vadd.f32 %v4310, %v4322
    %v4324 = vpop.f32.mrf.mxu0
    %4325 = vdwg.mxu0
    %4326 = vmatpush.bf16.msra.mxu0 %v3152
    %4327 = vmatpush.bf16.msra.mxu0 %v3144
    %4328 = vmatpush.bf16.msra.mxu0 %v3136
    %4329 = vmatpush.bf16.msra.mxu0 %v3128
    %4330 = vmatpush.bf16.msra.mxu0 %v3120
    %4331 = vmatpush.bf16.msra.mxu0 %v3112
    %4332 = vmatpush.bf16.msra.mxu0 %v3104
    %4333 = vmatpush.bf16.msra.mxu0 %v3096
    %4334 = vmatmul.bf16.gmra.mxu0 %v1038
    %v4335 = vpop.f32.mrf.mxu0
    %v4336 = vadd.f32 0.0, %v4335
    %v4337 = vpop.f32.mrf.mxu0
    %4338 = vdwg.mxu0
    %4339 = vmatpush.bf16.msra.mxu0 %v3216
    %4340 = vmatpush.bf16.msra.mxu0 %v3208
    %4341 = vmatpush.bf16.msra.mxu0 %v3200
    %4342 = vmatpush.bf16.msra.mxu0 %v3192
    %4343 = vmatpush.bf16.msra.mxu0 %v3184
    %4344 = vmatpush.bf16.msra.mxu0 %v3176
    %4345 = vmatpush.bf16.msra.mxu0 %v3168
    %4346 = vmatpush.bf16.msra.mxu0 %v3160
    %4347 = vmatmul.bf16.gmra.mxu0 %v1039
    %v4348 = vpop.f32.mrf.mxu0
    %v4349 = vadd.f32 %v4336, %v4348
    %v4350 = vpop.f32.mrf.mxu0
    %4351 = vdwg.mxu0
    %4352 = vmatpush.bf16.msra.mxu0 %v3280
    %4353 = vmatpush.bf16.msra.mxu0 %v3272
    %4354 = vmatpush.bf16.msra.mxu0 %v3264
    %4355 = vmatpush.bf16.msra.mxu0 %v3256
    %4356 = vmatpush.bf16.msra.mxu0 %v3248
    %4357 = vmatpush.bf16.msra.mxu0 %v3240
    %4358 = vmatpush.bf16.msra.mxu0 %v3232
    %4359 = vmatpush.bf16.msra.mxu0 %v3224
    %4360 = vmatmul.bf16.gmra.mxu0 %v1040
    %v4361 = vpop.f32.mrf.mxu0
    %v4362 = vadd.f32 %v4349, %v4361
    %v4363 = vpop.f32.mrf.mxu0
    %4364 = vdwg.mxu0
    %4365 = vmatpush.bf16.msra.mxu0 %v3344
    %4366 = vmatpush.bf16.msra.mxu0 %v3336
    %4367 = vmatpush.bf16.msra.mxu0 %v3328
    %4368 = vmatpush.bf16.msra.mxu0 %v3320
    %4369 = vmatpush.bf16.msra.mxu0 %v3312
    %4370 = vmatpush.bf16.msra.mxu0 %v3304
    %4371 = vmatpush.bf16.msra.mxu0 %v3296
    %4372 = vmatpush.bf16.msra.mxu0 %v3288
    %4373 = vmatmul.bf16.gmra.mxu0 %v1041
    %v4374 = vpop.f32.mrf.mxu0
    %v4375 = vadd.f32 %v4362, %v4374
    %v4376 = vpop.f32.mrf.mxu0
    %4377 = vdwg.mxu0
    %4378 = vmatpush.bf16.msra.mxu0 %v3408
    %4379 = vmatpush.bf16.msra.mxu0 %v3400
    %4380 = vmatpush.bf16.msra.mxu0 %v3392
    %4381 = vmatpush.bf16.msra.mxu0 %v3384
    %4382 = vmatpush.bf16.msra.mxu0 %v3376
    %4383 = vmatpush.bf16.msra.mxu0 %v3368
    %4384 = vmatpush.bf16.msra.mxu0 %v3360
    %4385 = vmatpush.bf16.msra.mxu0 %v3352
    %4386 = vmatmul.bf16.gmra.mxu0 %v1042
    %v4387 = vpop.f32.mrf.mxu0
    %v4388 = vadd.f32 %v4375, %v4387
    %v4389 = vpop.f32.mrf.mxu0
    %4390 = vdwg.mxu0
    %4391 = vmatpush.bf16.msra.mxu0 %v3472
    %4392 = vmatpush.bf16.msra.mxu0 %v3464
    %4393 = vmatpush.bf16.msra.mxu0 %v3456
    %4394 = vmatpush.bf16.msra.mxu0 %v3448
    %4395 = vmatpush.bf16.msra.mxu0 %v3440
    %4396 = vmatpush.bf16.msra.mxu0 %v3432
    %4397 = vmatpush.bf16.msra.mxu0 %v3424
    %4398 = vmatpush.bf16.msra.mxu0 %v3416
    %4399 = vmatmul.bf16.gmra.mxu0 %v1043
    %v4400 = vpop.f32.mrf.mxu0
    %v4401 = vadd.f32 %v4388, %v4400
    %v4402 = vpop.f32.mrf.mxu0
    %4403 = vdwg.mxu0
    %4404 = vmatpush.bf16.msra.mxu0 %v3536
    %4405 = vmatpush.bf16.msra.mxu0 %v3528
    %4406 = vmatpush.bf16.msra.mxu0 %v3520
    %4407 = vmatpush.bf16.msra.mxu0 %v3512
    %4408 = vmatpush.bf16.msra.mxu0 %v3504
    %4409 = vmatpush.bf16.msra.mxu0 %v3496
    %4410 = vmatpush.bf16.msra.mxu0 %v3488
    %4411 = vmatpush.bf16.msra.mxu0 %v3480
    %4412 = vmatmul.bf16.gmra.mxu0 %v1044
    %v4413 = vpop.f32.mrf.mxu0
    %v4414 = vadd.f32 %v4401, %v4413
    %v4415 = vpop.f32.mrf.mxu0
    %4416 = vdwg.mxu0
    %4417 = vmatpush.bf16.msra.mxu0 %v3600
    %4418 = vmatpush.bf16.msra.mxu0 %v3592
    %4419 = vmatpush.bf16.msra.mxu0 %v3584
    %4420 = vmatpush.bf16.msra.mxu0 %v3576
    %4421 = vmatpush.bf16.msra.mxu0 %v3568
    %4422 = vmatpush.bf16.msra.mxu0 %v3560
    %4423 = vmatpush.bf16.msra.mxu0 %v3552
    %4424 = vmatpush.bf16.msra.mxu0 %v3544
    %4425 = vmatmul.bf16.gmra.mxu0 %v1045
    %v4426 = vpop.f32.mrf.mxu0
    %v4427 = vadd.f32 %v4414, %v4426
    %v4428 = vpop.f32.mrf.mxu0
    %4429 = vdwg.mxu0
    %4430 = vmatpush.bf16.msra.mxu0 %v3153
    %4431 = vmatpush.bf16.msra.mxu0 %v3145
    %4432 = vmatpush.bf16.msra.mxu0 %v3137
    %4433 = vmatpush.bf16.msra.mxu0 %v3129
    %4434 = vmatpush.bf16.msra.mxu0 %v3121
    %4435 = vmatpush.bf16.msra.mxu0 %v3113
    %4436 = vmatpush.bf16.msra.mxu0 %v3105
    %4437 = vmatpush.bf16.msra.mxu0 %v3097
    %4438 = vmatmul.bf16.gmra.mxu0 %v1038
    %v4439 = vpop.f32.mrf.mxu0
    %v4440 = vadd.f32 0.0, %v4439
    %v4441 = vpop.f32.mrf.mxu0
    %4442 = vdwg.mxu0
    %4443 = vmatpush.bf16.msra.mxu0 %v3217
    %4444 = vmatpush.bf16.msra.mxu0 %v3209
    %4445 = vmatpush.bf16.msra.mxu0 %v3201
    %4446 = vmatpush.bf16.msra.mxu0 %v3193
    %4447 = vmatpush.bf16.msra.mxu0 %v3185
    %4448 = vmatpush.bf16.msra.mxu0 %v3177
    %4449 = vmatpush.bf16.msra.mxu0 %v3169
    %4450 = vmatpush.bf16.msra.mxu0 %v3161
    %4451 = vmatmul.bf16.gmra.mxu0 %v1039
    %v4452 = vpop.f32.mrf.mxu0
    %v4453 = vadd.f32 %v4440, %v4452
    %v4454 = vpop.f32.mrf.mxu0
    %4455 = vdwg.mxu0
    %4456 = vmatpush.bf16.msra.mxu0 %v3281
    %4457 = vmatpush.bf16.msra.mxu0 %v3273
    %4458 = vmatpush.bf16.msra.mxu0 %v3265
    %4459 = vmatpush.bf16.msra.mxu0 %v3257
    %4460 = vmatpush.bf16.msra.mxu0 %v3249
    %4461 = vmatpush.bf16.msra.mxu0 %v3241
    %4462 = vmatpush.bf16.msra.mxu0 %v3233
    %4463 = vmatpush.bf16.msra.mxu0 %v3225
    %4464 = vmatmul.bf16.gmra.mxu0 %v1040
    %v4465 = vpop.f32.mrf.mxu0
    %v4466 = vadd.f32 %v4453, %v4465
    %v4467 = vpop.f32.mrf.mxu0
    %4468 = vdwg.mxu0
    %4469 = vmatpush.bf16.msra.mxu0 %v3345
    %4470 = vmatpush.bf16.msra.mxu0 %v3337
    %4471 = vmatpush.bf16.msra.mxu0 %v3329
    %4472 = vmatpush.bf16.msra.mxu0 %v3321
    %4473 = vmatpush.bf16.msra.mxu0 %v3313
    %4474 = vmatpush.bf16.msra.mxu0 %v3305
    %4475 = vmatpush.bf16.msra.mxu0 %v3297
    %4476 = vmatpush.bf16.msra.mxu0 %v3289
    %4477 = vmatmul.bf16.gmra.mxu0 %v1041
    %v4478 = vpop.f32.mrf.mxu0
    %v4479 = vadd.f32 %v4466, %v4478
    %v4480 = vpop.f32.mrf.mxu0
    %4481 = vdwg.mxu0
    %4482 = vmatpush.bf16.msra.mxu0 %v3409
    %4483 = vmatpush.bf16.msra.mxu0 %v3401
    %4484 = vmatpush.bf16.msra.mxu0 %v3393
    %4485 = vmatpush.bf16.msra.mxu0 %v3385
    %4486 = vmatpush.bf16.msra.mxu0 %v3377
    %4487 = vmatpush.bf16.msra.mxu0 %v3369
    %4488 = vmatpush.bf16.msra.mxu0 %v3361
    %4489 = vmatpush.bf16.msra.mxu0 %v3353
    %4490 = vmatmul.bf16.gmra.mxu0 %v1042
    %v4491 = vpop.f32.mrf.mxu0
    %v4492 = vadd.f32 %v4479, %v4491
    %v4493 = vpop.f32.mrf.mxu0
    %4494 = vdwg.mxu0
    %4495 = vmatpush.bf16.msra.mxu0 %v3473
    %4496 = vmatpush.bf16.msra.mxu0 %v3465
    %4497 = vmatpush.bf16.msra.mxu0 %v3457
    %4498 = vmatpush.bf16.msra.mxu0 %v3449
    %4499 = vmatpush.bf16.msra.mxu0 %v3441
    %4500 = vmatpush.bf16.msra.mxu0 %v3433
    %4501 = vmatpush.bf16.msra.mxu0 %v3425
    %4502 = vmatpush.bf16.msra.mxu0 %v3417
    %4503 = vmatmul.bf16.gmra.mxu0 %v1043
    %v4504 = vpop.f32.mrf.mxu0
    %v4505 = vadd.f32 %v4492, %v4504
    %v4506 = vpop.f32.mrf.mxu0
    %4507 = vdwg.mxu0
    %4508 = vmatpush.bf16.msra.mxu0 %v3537
    %4509 = vmatpush.bf16.msra.mxu0 %v3529
    %4510 = vmatpush.bf16.msra.mxu0 %v3521
    %4511 = vmatpush.bf16.msra.mxu0 %v3513
    %4512 = vmatpush.bf16.msra.mxu0 %v3505
    %4513 = vmatpush.bf16.msra.mxu0 %v3497
    %4514 = vmatpush.bf16.msra.mxu0 %v3489
    %4515 = vmatpush.bf16.msra.mxu0 %v3481
    %4516 = vmatmul.bf16.gmra.mxu0 %v1044
    %v4517 = vpop.f32.mrf.mxu0
    %v4518 = vadd.f32 %v4505, %v4517
    %v4519 = vpop.f32.mrf.mxu0
    %4520 = vdwg.mxu0
    %4521 = vmatpush.bf16.msra.mxu0 %v3601
    %4522 = vmatpush.bf16.msra.mxu0 %v3593
    %4523 = vmatpush.bf16.msra.mxu0 %v3585
    %4524 = vmatpush.bf16.msra.mxu0 %v3577
    %4525 = vmatpush.bf16.msra.mxu0 %v3569
    %4526 = vmatpush.bf16.msra.mxu0 %v3561
    %4527 = vmatpush.bf16.msra.mxu0 %v3553
    %4528 = vmatpush.bf16.msra.mxu0 %v3545
    %4529 = vmatmul.bf16.gmra.mxu0 %v1045
    %v4530 = vpop.f32.mrf.mxu0
    %v4531 = vadd.f32 %v4518, %v4530
    %v4532 = vpop.f32.mrf.mxu0
    %4533 = vdwg.mxu0
    %4534 = vmatpush.bf16.msra.mxu0 %v3154
    %4535 = vmatpush.bf16.msra.mxu0 %v3146
    %4536 = vmatpush.bf16.msra.mxu0 %v3138
    %4537 = vmatpush.bf16.msra.mxu0 %v3130
    %4538 = vmatpush.bf16.msra.mxu0 %v3122
    %4539 = vmatpush.bf16.msra.mxu0 %v3114
    %4540 = vmatpush.bf16.msra.mxu0 %v3106
    %4541 = vmatpush.bf16.msra.mxu0 %v3098
    %4542 = vmatmul.bf16.gmra.mxu0 %v1038
    %v4543 = vpop.f32.mrf.mxu0
    %v4544 = vadd.f32 0.0, %v4543
    %v4545 = vpop.f32.mrf.mxu0
    %4546 = vdwg.mxu0
    %4547 = vmatpush.bf16.msra.mxu0 %v3218
    %4548 = vmatpush.bf16.msra.mxu0 %v3210
    %4549 = vmatpush.bf16.msra.mxu0 %v3202
    %4550 = vmatpush.bf16.msra.mxu0 %v3194
    %4551 = vmatpush.bf16.msra.mxu0 %v3186
    %4552 = vmatpush.bf16.msra.mxu0 %v3178
    %4553 = vmatpush.bf16.msra.mxu0 %v3170
    %4554 = vmatpush.bf16.msra.mxu0 %v3162
    %4555 = vmatmul.bf16.gmra.mxu0 %v1039
    %v4556 = vpop.f32.mrf.mxu0
    %v4557 = vadd.f32 %v4544, %v4556
    %v4558 = vpop.f32.mrf.mxu0
    %4559 = vdwg.mxu0
    %4560 = vmatpush.bf16.msra.mxu0 %v3282
    %4561 = vmatpush.bf16.msra.mxu0 %v3274
    %4562 = vmatpush.bf16.msra.mxu0 %v3266
    %4563 = vmatpush.bf16.msra.mxu0 %v3258
    %4564 = vmatpush.bf16.msra.mxu0 %v3250
    %4565 = vmatpush.bf16.msra.mxu0 %v3242
    %4566 = vmatpush.bf16.msra.mxu0 %v3234
    %4567 = vmatpush.bf16.msra.mxu0 %v3226
    %4568 = vmatmul.bf16.gmra.mxu0 %v1040
    %v4569 = vpop.f32.mrf.mxu0
    %v4570 = vadd.f32 %v4557, %v4569
    %v4571 = vpop.f32.mrf.mxu0
    %4572 = vdwg.mxu0
    %4573 = vmatpush.bf16.msra.mxu0 %v3346
    %4574 = vmatpush.bf16.msra.mxu0 %v3338
    %4575 = vmatpush.bf16.msra.mxu0 %v3330
    %4576 = vmatpush.bf16.msra.mxu0 %v3322
    %4577 = vmatpush.bf16.msra.mxu0 %v3314
    %4578 = vmatpush.bf16.msra.mxu0 %v3306
    %4579 = vmatpush.bf16.msra.mxu0 %v3298
    %4580 = vmatpush.bf16.msra.mxu0 %v3290
    %4581 = vmatmul.bf16.gmra.mxu0 %v1041
    %v4582 = vpop.f32.mrf.mxu0
    %v4583 = vadd.f32 %v4570, %v4582
    %v4584 = vpop.f32.mrf.mxu0
    %4585 = vdwg.mxu0
    %4586 = vmatpush.bf16.msra.mxu0 %v3410
    %4587 = vmatpush.bf16.msra.mxu0 %v3402
    %4588 = vmatpush.bf16.msra.mxu0 %v3394
    %4589 = vmatpush.bf16.msra.mxu0 %v3386
    %4590 = vmatpush.bf16.msra.mxu0 %v3378
    %4591 = vmatpush.bf16.msra.mxu0 %v3370
    %4592 = vmatpush.bf16.msra.mxu0 %v3362
    %4593 = vmatpush.bf16.msra.mxu0 %v3354
    %4594 = vmatmul.bf16.gmra.mxu0 %v1042
    %v4595 = vpop.f32.mrf.mxu0
    %v4596 = vadd.f32 %v4583, %v4595
    %v4597 = vpop.f32.mrf.mxu0
    %4598 = vdwg.mxu0
    %4599 = vmatpush.bf16.msra.mxu0 %v3474
    %4600 = vmatpush.bf16.msra.mxu0 %v3466
    %4601 = vmatpush.bf16.msra.mxu0 %v3458
    %4602 = vmatpush.bf16.msra.mxu0 %v3450
    %4603 = vmatpush.bf16.msra.mxu0 %v3442
    %4604 = vmatpush.bf16.msra.mxu0 %v3434
    %4605 = vmatpush.bf16.msra.mxu0 %v3426
    %4606 = vmatpush.bf16.msra.mxu0 %v3418
    %4607 = vmatmul.bf16.gmra.mxu0 %v1043
    %v4608 = vpop.f32.mrf.mxu0
    %v4609 = vadd.f32 %v4596, %v4608
    %v4610 = vpop.f32.mrf.mxu0
    %4611 = vdwg.mxu0
    %4612 = vmatpush.bf16.msra.mxu0 %v3538
    %4613 = vmatpush.bf16.msra.mxu0 %v3530
    %4614 = vmatpush.bf16.msra.mxu0 %v3522
    %4615 = vmatpush.bf16.msra.mxu0 %v3514
    %4616 = vmatpush.bf16.msra.mxu0 %v3506
    %4617 = vmatpush.bf16.msra.mxu0 %v3498
    %4618 = vmatpush.bf16.msra.mxu0 %v3490
    %4619 = vmatpush.bf16.msra.mxu0 %v3482
    %4620 = vmatmul.bf16.gmra.mxu0 %v1044
    %v4621 = vpop.f32.mrf.mxu0
    %v4622 = vadd.f32 %v4609, %v4621
    %v4623 = vpop.f32.mrf.mxu0
    %4624 = vdwg.mxu0
    %4625 = vmatpush.bf16.msra.mxu0 %v3602
    %4626 = vmatpush.bf16.msra.mxu0 %v3594
    %4627 = vmatpush.bf16.msra.mxu0 %v3586
    %4628 = vmatpush.bf16.msra.mxu0 %v3578
    %4629 = vmatpush.bf16.msra.mxu0 %v3570
    %4630 = vmatpush.bf16.msra.mxu0 %v3562
    %4631 = vmatpush.bf16.msra.mxu0 %v3554
    %4632 = vmatpush.bf16.msra.mxu0 %v3546
    %4633 = vmatmul.bf16.gmra.mxu0 %v1045
    %v4634 = vpop.f32.mrf.mxu0
    %v4635 = vadd.f32 %v4622, %v4634
    %v4636 = vpop.f32.mrf.mxu0
    %4637 = vdwg.mxu0
    %4638 = vmatpush.bf16.msra.mxu0 %v3155
    %4639 = vmatpush.bf16.msra.mxu0 %v3147
    %4640 = vmatpush.bf16.msra.mxu0 %v3139
    %4641 = vmatpush.bf16.msra.mxu0 %v3131
    %4642 = vmatpush.bf16.msra.mxu0 %v3123
    %4643 = vmatpush.bf16.msra.mxu0 %v3115
    %4644 = vmatpush.bf16.msra.mxu0 %v3107
    %4645 = vmatpush.bf16.msra.mxu0 %v3099
    %4646 = vmatmul.bf16.gmra.mxu0 %v1038
    %v4647 = vpop.f32.mrf.mxu0
    %v4648 = vadd.f32 0.0, %v4647
    %v4649 = vpop.f32.mrf.mxu0
    %4650 = vdwg.mxu0
    %4651 = vmatpush.bf16.msra.mxu0 %v3219
    %4652 = vmatpush.bf16.msra.mxu0 %v3211
    %4653 = vmatpush.bf16.msra.mxu0 %v3203
    %4654 = vmatpush.bf16.msra.mxu0 %v3195
    %4655 = vmatpush.bf16.msra.mxu0 %v3187
    %4656 = vmatpush.bf16.msra.mxu0 %v3179
    %4657 = vmatpush.bf16.msra.mxu0 %v3171
    %4658 = vmatpush.bf16.msra.mxu0 %v3163
    %4659 = vmatmul.bf16.gmra.mxu0 %v1039
    %v4660 = vpop.f32.mrf.mxu0
    %v4661 = vadd.f32 %v4648, %v4660
    %v4662 = vpop.f32.mrf.mxu0
    %4663 = vdwg.mxu0
    %4664 = vmatpush.bf16.msra.mxu0 %v3283
    %4665 = vmatpush.bf16.msra.mxu0 %v3275
    %4666 = vmatpush.bf16.msra.mxu0 %v3267
    %4667 = vmatpush.bf16.msra.mxu0 %v3259
    %4668 = vmatpush.bf16.msra.mxu0 %v3251
    %4669 = vmatpush.bf16.msra.mxu0 %v3243
    %4670 = vmatpush.bf16.msra.mxu0 %v3235
    %4671 = vmatpush.bf16.msra.mxu0 %v3227
    %4672 = vmatmul.bf16.gmra.mxu0 %v1040
    %v4673 = vpop.f32.mrf.mxu0
    %v4674 = vadd.f32 %v4661, %v4673
    %v4675 = vpop.f32.mrf.mxu0
    %4676 = vdwg.mxu0
    %4677 = vmatpush.bf16.msra.mxu0 %v3347
    %4678 = vmatpush.bf16.msra.mxu0 %v3339
    %4679 = vmatpush.bf16.msra.mxu0 %v3331
    %4680 = vmatpush.bf16.msra.mxu0 %v3323
    %4681 = vmatpush.bf16.msra.mxu0 %v3315
    %4682 = vmatpush.bf16.msra.mxu0 %v3307
    %4683 = vmatpush.bf16.msra.mxu0 %v3299
    %4684 = vmatpush.bf16.msra.mxu0 %v3291
    %4685 = vmatmul.bf16.gmra.mxu0 %v1041
    %v4686 = vpop.f32.mrf.mxu0
    %v4687 = vadd.f32 %v4674, %v4686
    %v4688 = vpop.f32.mrf.mxu0
    %4689 = vdwg.mxu0
    %4690 = vmatpush.bf16.msra.mxu0 %v3411
    %4691 = vmatpush.bf16.msra.mxu0 %v3403
    %4692 = vmatpush.bf16.msra.mxu0 %v3395
    %4693 = vmatpush.bf16.msra.mxu0 %v3387
    %4694 = vmatpush.bf16.msra.mxu0 %v3379
    %4695 = vmatpush.bf16.msra.mxu0 %v3371
    %4696 = vmatpush.bf16.msra.mxu0 %v3363
    %4697 = vmatpush.bf16.msra.mxu0 %v3355
    %4698 = vmatmul.bf16.gmra.mxu0 %v1042
    %v4699 = vpop.f32.mrf.mxu0
    %v4700 = vadd.f32 %v4687, %v4699
    %v4701 = vpop.f32.mrf.mxu0
    %4702 = vdwg.mxu0
    %4703 = vmatpush.bf16.msra.mxu0 %v3475
    %4704 = vmatpush.bf16.msra.mxu0 %v3467
    %4705 = vmatpush.bf16.msra.mxu0 %v3459
    %4706 = vmatpush.bf16.msra.mxu0 %v3451
    %4707 = vmatpush.bf16.msra.mxu0 %v3443
    %4708 = vmatpush.bf16.msra.mxu0 %v3435
    %4709 = vmatpush.bf16.msra.mxu0 %v3427
    %4710 = vmatpush.bf16.msra.mxu0 %v3419
    %4711 = vmatmul.bf16.gmra.mxu0 %v1043
    %v4712 = vpop.f32.mrf.mxu0
    %v4713 = vadd.f32 %v4700, %v4712
    %v4714 = vpop.f32.mrf.mxu0
    %4715 = vdwg.mxu0
    %4716 = vmatpush.bf16.msra.mxu0 %v3539
    %4717 = vmatpush.bf16.msra.mxu0 %v3531
    %4718 = vmatpush.bf16.msra.mxu0 %v3523
    %4719 = vmatpush.bf16.msra.mxu0 %v3515
    %4720 = vmatpush.bf16.msra.mxu0 %v3507
    %4721 = vmatpush.bf16.msra.mxu0 %v3499
    %4722 = vmatpush.bf16.msra.mxu0 %v3491
    %4723 = vmatpush.bf16.msra.mxu0 %v3483
    %4724 = vmatmul.bf16.gmra.mxu0 %v1044
    %v4725 = vpop.f32.mrf.mxu0
    %v4726 = vadd.f32 %v4713, %v4725
    %v4727 = vpop.f32.mrf.mxu0
    %4728 = vdwg.mxu0
    %4729 = vmatpush.bf16.msra.mxu0 %v3603
    %4730 = vmatpush.bf16.msra.mxu0 %v3595
    %4731 = vmatpush.bf16.msra.mxu0 %v3587
    %4732 = vmatpush.bf16.msra.mxu0 %v3579
    %4733 = vmatpush.bf16.msra.mxu0 %v3571
    %4734 = vmatpush.bf16.msra.mxu0 %v3563
    %4735 = vmatpush.bf16.msra.mxu0 %v3555
    %4736 = vmatpush.bf16.msra.mxu0 %v3547
    %4737 = vmatmul.bf16.gmra.mxu0 %v1045
    %v4738 = vpop.f32.mrf.mxu0
    %v4739 = vadd.f32 %v4726, %v4738
    %v4740 = vpop.f32.mrf.mxu0
    %4741 = vdwg.mxu0
    %4742 = vmatpush.bf16.msra.mxu0 %v3156
    %4743 = vmatpush.bf16.msra.mxu0 %v3148
    %4744 = vmatpush.bf16.msra.mxu0 %v3140
    %4745 = vmatpush.bf16.msra.mxu0 %v3132
    %4746 = vmatpush.bf16.msra.mxu0 %v3124
    %4747 = vmatpush.bf16.msra.mxu0 %v3116
    %4748 = vmatpush.bf16.msra.mxu0 %v3108
    %4749 = vmatpush.bf16.msra.mxu0 %v3100
    %4750 = vmatmul.bf16.gmra.mxu0 %v1038
    %v4751 = vpop.f32.mrf.mxu0
    %v4752 = vadd.f32 0.0, %v4751
    %v4753 = vpop.f32.mrf.mxu0
    %4754 = vdwg.mxu0
    %4755 = vmatpush.bf16.msra.mxu0 %v3220
    %4756 = vmatpush.bf16.msra.mxu0 %v3212
    %4757 = vmatpush.bf16.msra.mxu0 %v3204
    %4758 = vmatpush.bf16.msra.mxu0 %v3196
    %4759 = vmatpush.bf16.msra.mxu0 %v3188
    %4760 = vmatpush.bf16.msra.mxu0 %v3180
    %4761 = vmatpush.bf16.msra.mxu0 %v3172
    %4762 = vmatpush.bf16.msra.mxu0 %v3164
    %4763 = vmatmul.bf16.gmra.mxu0 %v1039
    %v4764 = vpop.f32.mrf.mxu0
    %v4765 = vadd.f32 %v4752, %v4764
    %v4766 = vpop.f32.mrf.mxu0
    %4767 = vdwg.mxu0
    %4768 = vmatpush.bf16.msra.mxu0 %v3284
    %4769 = vmatpush.bf16.msra.mxu0 %v3276
    %4770 = vmatpush.bf16.msra.mxu0 %v3268
    %4771 = vmatpush.bf16.msra.mxu0 %v3260
    %4772 = vmatpush.bf16.msra.mxu0 %v3252
    %4773 = vmatpush.bf16.msra.mxu0 %v3244
    %4774 = vmatpush.bf16.msra.mxu0 %v3236
    %4775 = vmatpush.bf16.msra.mxu0 %v3228
    %4776 = vmatmul.bf16.gmra.mxu0 %v1040
    %v4777 = vpop.f32.mrf.mxu0
    %v4778 = vadd.f32 %v4765, %v4777
    %v4779 = vpop.f32.mrf.mxu0
    %4780 = vdwg.mxu0
    %4781 = vmatpush.bf16.msra.mxu0 %v3348
    %4782 = vmatpush.bf16.msra.mxu0 %v3340
    %4783 = vmatpush.bf16.msra.mxu0 %v3332
    %4784 = vmatpush.bf16.msra.mxu0 %v3324
    %4785 = vmatpush.bf16.msra.mxu0 %v3316
    %4786 = vmatpush.bf16.msra.mxu0 %v3308
    %4787 = vmatpush.bf16.msra.mxu0 %v3300
    %4788 = vmatpush.bf16.msra.mxu0 %v3292
    %4789 = vmatmul.bf16.gmra.mxu0 %v1041
    %v4790 = vpop.f32.mrf.mxu0
    %v4791 = vadd.f32 %v4778, %v4790
    %v4792 = vpop.f32.mrf.mxu0
    %4793 = vdwg.mxu0
    %4794 = vmatpush.bf16.msra.mxu0 %v3412
    %4795 = vmatpush.bf16.msra.mxu0 %v3404
    %4796 = vmatpush.bf16.msra.mxu0 %v3396
    %4797 = vmatpush.bf16.msra.mxu0 %v3388
    %4798 = vmatpush.bf16.msra.mxu0 %v3380
    %4799 = vmatpush.bf16.msra.mxu0 %v3372
    %4800 = vmatpush.bf16.msra.mxu0 %v3364
    %4801 = vmatpush.bf16.msra.mxu0 %v3356
    %4802 = vmatmul.bf16.gmra.mxu0 %v1042
    %v4803 = vpop.f32.mrf.mxu0
    %v4804 = vadd.f32 %v4791, %v4803
    %v4805 = vpop.f32.mrf.mxu0
    %4806 = vdwg.mxu0
    %4807 = vmatpush.bf16.msra.mxu0 %v3476
    %4808 = vmatpush.bf16.msra.mxu0 %v3468
    %4809 = vmatpush.bf16.msra.mxu0 %v3460
    %4810 = vmatpush.bf16.msra.mxu0 %v3452
    %4811 = vmatpush.bf16.msra.mxu0 %v3444
    %4812 = vmatpush.bf16.msra.mxu0 %v3436
    %4813 = vmatpush.bf16.msra.mxu0 %v3428
    %4814 = vmatpush.bf16.msra.mxu0 %v3420
    %4815 = vmatmul.bf16.gmra.mxu0 %v1043
    %v4816 = vpop.f32.mrf.mxu0
    %v4817 = vadd.f32 %v4804, %v4816
    %v4818 = vpop.f32.mrf.mxu0
    %4819 = vdwg.mxu0
    %4820 = vmatpush.bf16.msra.mxu0 %v3540
    %4821 = vmatpush.bf16.msra.mxu0 %v3532
    %4822 = vmatpush.bf16.msra.mxu0 %v3524
    %4823 = vmatpush.bf16.msra.mxu0 %v3516
    %4824 = vmatpush.bf16.msra.mxu0 %v3508
    %4825 = vmatpush.bf16.msra.mxu0 %v3500
    %4826 = vmatpush.bf16.msra.mxu0 %v3492
    %4827 = vmatpush.bf16.msra.mxu0 %v3484
    %4828 = vmatmul.bf16.gmra.mxu0 %v1044
    %v4829 = vpop.f32.mrf.mxu0
    %v4830 = vadd.f32 %v4817, %v4829
    %v4831 = vpop.f32.mrf.mxu0
    %4832 = vdwg.mxu0
    %4833 = vmatpush.bf16.msra.mxu0 %v3604
    %4834 = vmatpush.bf16.msra.mxu0 %v3596
    %4835 = vmatpush.bf16.msra.mxu0 %v3588
    %4836 = vmatpush.bf16.msra.mxu0 %v3580
    %4837 = vmatpush.bf16.msra.mxu0 %v3572
    %4838 = vmatpush.bf16.msra.mxu0 %v3564
    %4839 = vmatpush.bf16.msra.mxu0 %v3556
    %4840 = vmatpush.bf16.msra.mxu0 %v3548
    %4841 = vmatmul.bf16.gmra.mxu0 %v1045
    %v4842 = vpop.f32.mrf.mxu0
    %v4843 = vadd.f32 %v4830, %v4842
    %v4844 = vpop.f32.mrf.mxu0
    %4845 = vdwg.mxu0
    %4846 = vmatpush.bf16.msra.mxu0 %v3157
    %4847 = vmatpush.bf16.msra.mxu0 %v3149
    %4848 = vmatpush.bf16.msra.mxu0 %v3141
    %4849 = vmatpush.bf16.msra.mxu0 %v3133
    %4850 = vmatpush.bf16.msra.mxu0 %v3125
    %4851 = vmatpush.bf16.msra.mxu0 %v3117
    %4852 = vmatpush.bf16.msra.mxu0 %v3109
    %4853 = vmatpush.bf16.msra.mxu0 %v3101
    %4854 = vmatmul.bf16.gmra.mxu0 %v1038
    %v4855 = vpop.f32.mrf.mxu0
    %v4856 = vadd.f32 0.0, %v4855
    %v4857 = vpop.f32.mrf.mxu0
    %4858 = vdwg.mxu0
    %4859 = vmatpush.bf16.msra.mxu0 %v3221
    %4860 = vmatpush.bf16.msra.mxu0 %v3213
    %4861 = vmatpush.bf16.msra.mxu0 %v3205
    %4862 = vmatpush.bf16.msra.mxu0 %v3197
    %4863 = vmatpush.bf16.msra.mxu0 %v3189
    %4864 = vmatpush.bf16.msra.mxu0 %v3181
    %4865 = vmatpush.bf16.msra.mxu0 %v3173
    %4866 = vmatpush.bf16.msra.mxu0 %v3165
    %4867 = vmatmul.bf16.gmra.mxu0 %v1039
    %v4868 = vpop.f32.mrf.mxu0
    %v4869 = vadd.f32 %v4856, %v4868
    %v4870 = vpop.f32.mrf.mxu0
    %4871 = vdwg.mxu0
    %4872 = vmatpush.bf16.msra.mxu0 %v3285
    %4873 = vmatpush.bf16.msra.mxu0 %v3277
    %4874 = vmatpush.bf16.msra.mxu0 %v3269
    %4875 = vmatpush.bf16.msra.mxu0 %v3261
    %4876 = vmatpush.bf16.msra.mxu0 %v3253
    %4877 = vmatpush.bf16.msra.mxu0 %v3245
    %4878 = vmatpush.bf16.msra.mxu0 %v3237
    %4879 = vmatpush.bf16.msra.mxu0 %v3229
    %4880 = vmatmul.bf16.gmra.mxu0 %v1040
    %v4881 = vpop.f32.mrf.mxu0
    %v4882 = vadd.f32 %v4869, %v4881
    %v4883 = vpop.f32.mrf.mxu0
    %4884 = vdwg.mxu0
    %4885 = vmatpush.bf16.msra.mxu0 %v3349
    %4886 = vmatpush.bf16.msra.mxu0 %v3341
    %4887 = vmatpush.bf16.msra.mxu0 %v3333
    %4888 = vmatpush.bf16.msra.mxu0 %v3325
    %4889 = vmatpush.bf16.msra.mxu0 %v3317
    %4890 = vmatpush.bf16.msra.mxu0 %v3309
    %4891 = vmatpush.bf16.msra.mxu0 %v3301
    %4892 = vmatpush.bf16.msra.mxu0 %v3293
    %4893 = vmatmul.bf16.gmra.mxu0 %v1041
    %v4894 = vpop.f32.mrf.mxu0
    %v4895 = vadd.f32 %v4882, %v4894
    %v4896 = vpop.f32.mrf.mxu0
    %4897 = vdwg.mxu0
    %4898 = vmatpush.bf16.msra.mxu0 %v3413
    %4899 = vmatpush.bf16.msra.mxu0 %v3405
    %4900 = vmatpush.bf16.msra.mxu0 %v3397
    %4901 = vmatpush.bf16.msra.mxu0 %v3389
    %4902 = vmatpush.bf16.msra.mxu0 %v3381
    %4903 = vmatpush.bf16.msra.mxu0 %v3373
    %4904 = vmatpush.bf16.msra.mxu0 %v3365
    %4905 = vmatpush.bf16.msra.mxu0 %v3357
    %4906 = vmatmul.bf16.gmra.mxu0 %v1042
    %v4907 = vpop.f32.mrf.mxu0
    %v4908 = vadd.f32 %v4895, %v4907
    %v4909 = vpop.f32.mrf.mxu0
    %4910 = vdwg.mxu0
    %4911 = vmatpush.bf16.msra.mxu0 %v3477
    %4912 = vmatpush.bf16.msra.mxu0 %v3469
    %4913 = vmatpush.bf16.msra.mxu0 %v3461
    %4914 = vmatpush.bf16.msra.mxu0 %v3453
    %4915 = vmatpush.bf16.msra.mxu0 %v3445
    %4916 = vmatpush.bf16.msra.mxu0 %v3437
    %4917 = vmatpush.bf16.msra.mxu0 %v3429
    %4918 = vmatpush.bf16.msra.mxu0 %v3421
    %4919 = vmatmul.bf16.gmra.mxu0 %v1043
    %v4920 = vpop.f32.mrf.mxu0
    %v4921 = vadd.f32 %v4908, %v4920
    %v4922 = vpop.f32.mrf.mxu0
    %4923 = vdwg.mxu0
    %4924 = vmatpush.bf16.msra.mxu0 %v3541
    %4925 = vmatpush.bf16.msra.mxu0 %v3533
    %4926 = vmatpush.bf16.msra.mxu0 %v3525
    %4927 = vmatpush.bf16.msra.mxu0 %v3517
    %4928 = vmatpush.bf16.msra.mxu0 %v3509
    %4929 = vmatpush.bf16.msra.mxu0 %v3501
    %4930 = vmatpush.bf16.msra.mxu0 %v3493
    %4931 = vmatpush.bf16.msra.mxu0 %v3485
    %4932 = vmatmul.bf16.gmra.mxu0 %v1044
    %v4933 = vpop.f32.mrf.mxu0
    %v4934 = vadd.f32 %v4921, %v4933
    %v4935 = vpop.f32.mrf.mxu0
    %4936 = vdwg.mxu0
    %4937 = vmatpush.bf16.msra.mxu0 %v3605
    %4938 = vmatpush.bf16.msra.mxu0 %v3597
    %4939 = vmatpush.bf16.msra.mxu0 %v3589
    %4940 = vmatpush.bf16.msra.mxu0 %v3581
    %4941 = vmatpush.bf16.msra.mxu0 %v3573
    %4942 = vmatpush.bf16.msra.mxu0 %v3565
    %4943 = vmatpush.bf16.msra.mxu0 %v3557
    %4944 = vmatpush.bf16.msra.mxu0 %v3549
    %4945 = vmatmul.bf16.gmra.mxu0 %v1045
    %v4946 = vpop.f32.mrf.mxu0
    %v4947 = vadd.f32 %v4934, %v4946
    %v4948 = vpop.f32.mrf.mxu0
    %4949 = vdwg.mxu0
    %v4958 = vrot.slane %v4323, 6
    %v4959 = vrot.slane %v4427, 4
    %v4960 = vrot.slane %v4531, 2
    %v4961 = vrot.slane %v4739, 6
    %v4962 = vrot.slane %v4843, 4
    %v4963 = vrot.slane %v4947, 2
    %vm4964 = vcmask 1041408
    %v4965 = vsel %vm4964, %v4219, %v4958
    %vm4966 = vcmask 1045508
    %v4967 = vsel %vm4966, %v4959, %v4960
    %vm4968 = vcmask 1043456
    %v4969 = vsel %vm4968, %v4965, %v4967
    %v4970 = vsel %vm4964, %v4635, %v4961
    %v4971 = vsel %vm4966, %v4962, %v4963
    %v4972 = vsel %vm4968, %v4970, %v4971
    %v4975 = vadd.f32 %v1036, %v4969
    %v4976 = vadd.f32 %v1037, %v4972
    %4977 = vst [vmem:[#allocation2] sm:$0xff] %v4975
    %4978 = vst [vmem:[#allocation2 + $0x8] sm:$0xff] %v4976
    // Predicated region
    $region90: #{_lambda_.1} parent=1 // pred_check
      %p4979 = pneg %p177
    $region91: #{_lambda_.1} parent=1 // pred_check_branch
      %4981 = sbr.rel (%p4979) target = $region93
    $region92: #{_lambda_.1} parent=1 // pred_region
      %v4982 = vld [vmem:[%s0] sm:$0xf]
      %v4983 = vld [vmem:[#allocation8] sm:$0xff]
      %v4984 = vld [vmem:[#allocation8 + $0x8] sm:$0xff]
      %v4985 = vld [vmem:[#allocation8 + $0x10] sm:$0xff]
      %v4986 = vld [vmem:[#allocation8 + $0x18] sm:$0xff]
      %v4987 = vld [vmem:[#allocation8 + $0x20] sm:$0xff]
      %v4988 = vld [vmem:[#allocation8 + $0x28] sm:$0xff]
      %v4989 = vld [vmem:[#allocation8 + $0x30] sm:$0xff]
      %v4990 = vld [vmem:[#allocation8 + $0x38] sm:$0xff]
      %v4991 = vld [vmem:[#allocation8 + $0x40] sm:$0xff]
      %v4992 = vld [vmem:[#allocation8 + $0x48] sm:$0xff]
      %v4993 = vld [vmem:[#allocation8 + $0x50] sm:$0xff]
      %v4994 = vld [vmem:[#allocation8 + $0x58] sm:$0xff]
      %v4995 = vld [vmem:[#allocation8 + $0x60] sm:$0xff]
      %v4996 = vld [vmem:[#allocation8 + $0x68] sm:$0xff]
      %v4997 = vld [vmem:[#allocation8 + $0x70] sm:$0xff]
      %v4998 = vld [vmem:[#allocation8 + $0x78] sm:$0xff]
      %v4999 = vld [vmem:[#allocation8 + $0x80] sm:$0xff]
      %v5000 = vld [vmem:[#allocation8 + $0x88] sm:$0xff]
      %v5001 = vld [vmem:[#allocation8 + $0x90] sm:$0xff]
      %v5002 = vld [vmem:[#allocation8 + $0x98] sm:$0xff]
      %v5003 = vld [vmem:[#allocation8 + $0xa0] sm:$0xff]
      %v5004 = vld [vmem:[#allocation8 + $0xa8] sm:$0xff]
      %v5005 = vld [vmem:[#allocation8 + $0xb0] sm:$0xff]
      %v5006 = vld [vmem:[#allocation8 + $0xb8] sm:$0xff]
      %v5007 = vld [vmem:[#allocation8 + $0xc0] sm:$0xff]
      %v5008 = vld [vmem:[#allocation8 + $0xc8] sm:$0xff]
      %5010 = vst [vmem:[#allocation1] ss:$4 sm:$0xff] %v4982
      %v5011 = vld.sshfl [vmem:[#allocation1] sm:$0xff pattern:$0x73625140]
      %v5012 = vld.sshfl [vmem:[#allocation1 + $0x8] sm:$0xff pattern:$0x73625140]
      %v5014 = vsel %vm816, %v5012, 0
      %5016 = vmatpush.msra.mxu0 %v4998
      %5017 = vmatpush.msra.mxu0 %v4997
      %5018 = vmatpush.msra.mxu0 %v4996
      %5019 = vmatpush.msra.mxu0 %v4995
      %5020 = vmatpush.msra.mxu0 %v4994
      %5021 = vmatpush.msra.mxu0 %v4993
      %5022 = vmatpush.msra.mxu0 %v4992
      %5023 = vmatpush.msra.mxu0 %v4991
      %5024 = vmatpush.msra.mxu0 %v4990
      %5025 = vmatpush.msra.mxu0 %v4989
      %5026 = vmatpush.msra.mxu0 %v4988
      %5027 = vmatpush.msra.mxu0 %v4987
      %5028 = vmatpush.msra.mxu0 %v4986
      %5029 = vmatpush.msra.mxu0 %v4985
      %5030 = vmatpush.msra.mxu0 %v4984
      %5031 = vmatpush.msra.mxu0 %v4983
      %5032 = vmatmul.f32.gmra.mxu0 %v5011
      %v5033 = vpop.f32.mrf.mxu0
      %v5034 = vadd.f32 0.0, %v5033
      %5035 = vdwg.mxu0
      %5036 = vmatpush.msra.mxu0 0.0
      %5037 = vmatpush.msra.mxu0 0.0
      %5038 = vmatpush.msra.mxu0 0.0
      %5039 = vmatpush.msra.mxu0 0.0
      %5040 = vmatpush.msra.mxu0 0.0
      %5041 = vmatpush.msra.mxu0 0.0
      %5042 = vmatpush.msra.mxu0 %v5008
      %5043 = vmatpush.msra.mxu0 %v5007
      %5044 = vmatpush.msra.mxu0 %v5006
      %5045 = vmatpush.msra.mxu0 %v5005
      %5046 = vmatpush.msra.mxu0 %v5004
      %5047 = vmatpush.msra.mxu0 %v5003
      %5048 = vmatpush.msra.mxu0 %v5002
      %5049 = vmatpush.msra.mxu0 %v5001
      %5050 = vmatpush.msra.mxu0 %v5000
      %5051 = vmatpush.msra.mxu0 %v4999
      %5052 = vmatmul.f32.gmra.mxu0 %v5014
      %v5053 = vpop.f32.mrf.mxu0
      %v5054 = vadd.f32 %v5034, %v5053
      %5055 = vdwg.mxu0
      %v5056 = vld [vmem:[#allocation5] sm:$0x3]
      %v5057 = vld [vmem:[#allocation10] sm:$0xff]
      %v5058 = vld [vmem:[#allocation10 + $0x8] sm:$0x3]
      %v5059 = vld [vmem:[#allocation11] sm:$0x1]
      %v5061 = vperm.slane %v5059, 0
      %vm5063 = vcmask 80896
      %v5065 = vsel %vm5063, %v5056, 0
      %v5068 = vsel %vm4964, %v5058, 0
      %5070 = vmatpush.msra.mxu0 0.0
      %5071 = vmatpush.msra.mxu0 0.0
      %5072 = vmatpush.msra.mxu0 0.0
      %5073 = vmatpush.msra.mxu0 0.0
      %5074 = vmatpush.msra.mxu0 0.0
      %5075 = vmatpush.msra.mxu0 0.0
      %5076 = vmatpush.msra.mxu0 0.0
      %5077 = vmatpush.msra.mxu0 0.0
      %5078 = vmatpush.msra.mxu0 0.0
      %5079 = vmatpush.msra.mxu0 0.0
      %5080 = vmatpush.msra.mxu0 0.0
      %5081 = vmatpush.msra.mxu0 0.0
      %5082 = vmatpush.msra.mxu0 0.0
      %5083 = vmatpush.msra.mxu0 0.0
      %5084 = vmatpush.msra.mxu0 %v5068
      %5085 = vmatpush.msra.mxu0 %v5057
      %5086 = vmatmul.f32.gmra.mxu0 %v5065
      %v5087 = vpop.f32.mrf.mxu0
      %v5088 = vadd.f32 %v5061, %v5087
      %5089 = vdwg.mxu0
      %v5090 = vmax.f32 %v5088, 0.0
      %v5091 = vld [vmem:[#allocation13] sm:$0x1f]
      %v5092 = vld [vmem:[#allocation3] sm:$0x1]
      %v5094 = vperm.slane %v5092, 0
      %vm5096 = vcmask 39936
      %v5098 = vsel %vm5096, %v5090, 0
      %vm5100 = vcmask 1044480
      %v5102 = vsel %vm5100, %v5091, 0
      %5104 = vmatpush.msra.mxu0 0.0
      %5105 = vmatpush.msra.mxu0 0.0
      %5106 = vmatpush.msra.mxu0 0.0
      %5107 = vmatpush.msra.mxu0 0.0
      %5108 = vmatpush.msra.mxu0 0.0
      %5109 = vmatpush.msra.mxu0 0.0
      %5110 = vmatpush.msra.mxu0 0.0
      %5111 = vmatpush.msra.mxu0 0.0
      %5112 = vmatpush.msra.mxu0 0.0
      %5113 = vmatpush.msra.mxu0 0.0
      %5114 = vmatpush.msra.mxu0 0.0
      %5115 = vmatpush.msra.mxu0 0.0
      %5116 = vmatpush.msra.mxu0 0.0
      %5117 = vmatpush.msra.mxu0 0.0
      %5118 = vmatpush.msra.mxu0 0.0
      %5119 = vmatpush.msra.mxu0 %v5102
      %5120 = vmatmul.f32.gmra.mxu0 %v5098
      %v5121 = vpop.f32.mrf.mxu0
      %v5122 = vadd.f32 %v5094, %v5121
      %5123 = vdwg.mxu0
      %v5124 = vld [vmem:[#allocation2] sm:$0xff]
      %v5125 = vld [vmem:[#allocation2 + $0x8] sm:$0xff]
      %v5126 = vld [vmem:[#allocation17] sm:$0xff]
      %v5128 = vperm.slane %v5126, 0
      %v5129 = vperm.slane %v5126, 1
      %v5130 = vperm.slane %v5126, 2
      %v5131 = vperm.slane %v5126, 3
      %v5132 = vperm.slane %v5126, 4
      %v5133 = vperm.slane %v5126, 5
      %v5134 = vperm.slane %v5126, 6
      %v5135 = vperm.slane %v5126, 7
      %v5136 = vrot.slane %v5129, 6
      %v5137 = vrot.slane %v5130, 4
      %v5138 = vrot.slane %v5131, 2
      %v5139 = vrot.slane %v5133, 6
      %v5140 = vrot.slane %v5134, 4
      %v5141 = vrot.slane %v5135, 2
      %v5142 = vsel %vm4964, %v5128, %v5136
      %v5143 = vsel %vm4966, %v5137, %v5138
      %v5144 = vsel %vm4968, %v5142, %v5143
      %v5145 = vsel %vm4964, %v5132, %v5139
      %v5146 = vsel %vm4966, %v5140, %v5141
      %v5147 = vsel %vm4968, %v5145, %v5146
      %v5150 = vadd.f32 %v5124, %v5144
      %v5151 = vadd.f32 %v5125, %v5147
      %v5152 = vmax.f32 %v5150, 0.0
      %v5153 = vmax.f32 %v5151, 0.0
      %v5154 = vld [vmem:[#allocation19] sm:$0xff]
      %v5156 = vperm.slane %v5154, 0
      %v5157 = vperm.slane %v5154, 1
      %v5158 = vperm.slane %v5154, 2
      %v5159 = vperm.slane %v5154, 3
      %v5160 = vperm.slane %v5154, 4
      %v5161 = vperm.slane %v5154, 5
      %v5162 = vperm.slane %v5154, 6
      %v5163 = vperm.slane %v5154, 7
      %v5164 = vrot.slane %v5157, 6
      %v5165 = vrot.slane %v5158, 4
      %v5166 = vrot.slane %v5159, 2
      %v5167 = vrot.slane %v5161, 6
      %v5168 = vrot.slane %v5162, 4
      %v5169 = vrot.slane %v5163, 2
      %v5170 = vsel %vm4964, %v5156, %v5164
      %v5171 = vsel %vm4966, %v5165, %v5166
      %v5172 = vsel %vm4968, %v5170, %v5171
      %v5173 = vsel %vm4964, %v5160, %v5167
      %v5174 = vsel %vm4966, %v5168, %v5169
      %v5175 = vsel %vm4968, %v5173, %v5174
      %v5178 = vmul.f32 %v5152, %v5172
      %v5179 = vmul.f32 %v5153, %v5175
      %5182 = vst [vmem:[#allocation1] ss:$4 sm:$0xff] %v5178
      %s5183 = scalar_lea.vmem [#allocation1], 32
      %5184 = vst [vmem:[%s5183] ss:$4 sm:$0xff] %v5179
      %v5185 = vld.sshfl [vmem:[#allocation1] sm:$0xff pattern:$0x73625140]
      %v5186 = vld.sshfl [vmem:[#allocation1 + $0x8] sm:$0xff pattern:$0x73625140]
      %v5187 = vld.sshfl [vmem:[#allocation1 + $0x10] sm:$0xff pattern:$0x73625140]
      %v5188 = vld.sshfl [vmem:[#allocation1 + $0x18] sm:$0xff pattern:$0x73625140]
      %v5189 = vld.sshfl [vmem:[#allocation1 + $0x20] sm:$0xff pattern:$0x73625140]
      %v5190 = vld.sshfl [vmem:[#allocation1 + $0x28] sm:$0xff pattern:$0x73625140]
      %v5191 = vld.sshfl [vmem:[#allocation1 + $0x30] sm:$0xff pattern:$0x73625140]
      %v5192 = vld.sshfl [vmem:[#allocation1 + $0x38] sm:$0xff pattern:$0x73625140]
      %v5201 = vsel %vm4964, %v5185, 0.0
      %v5202 = vsel %vm4964, %v5186, 0.0
      %v5203 = vadd.f32 %v5201, %v5202
      %v5204 = vsel %vm4964, %v5187, 0.0
      %v5205 = vadd.f32 %v5203, %v5204
      %v5206 = vsel %vm4964, %v5188, 0.0
      %v5207 = vadd.f32 %v5205, %v5206
      %v5208 = vsel %vm4964, %v5189, 0.0
      %v5209 = vadd.f32 %v5207, %v5208
      %v5210 = vsel %vm4964, %v5190, 0.0
      %v5211 = vadd.f32 %v5209, %v5210
      %v5212 = vsel %vm4964, %v5191, 0.0
      %v5213 = vadd.f32 %v5211, %v5212
      %v5214 = vsel %vm4964, %v5192, 0.0
      %v5215 = vadd.f32 %v5213, %v5214
      %5216 = vadd.xlane.f32.xlu0 %v5215
      %v5217 = vpop.xlane.xlu0 %5216
      %v5218 = vld [vmem:[#allocation4] sm:$0x1]
      %v5220 = vperm.slane %v5218, 0
      %v5222 = vadd.f32 %v5217, %v5220
      %vm5223 = vcmask 181248
      %5224 = vst.msk [vmem:[#allocation20] sm:$0x3] %vm5223, %v5054
      %5226 = vrot.lane.b32.xlu0 %v5222, 23
      %v5227 = vpop.permute.xlu0 %5226
      %vm5229 = vcmask 189624
      %5230 = vst.msk [vmem:[#allocation20] sm:$0x3] %vm5229, %v5227
      %5232 = vrot.lane.b32.xlu0 %v5122, 24
      %v5233 = vpop.permute.xlu0 %5232
      %vm5235 = vcmask 197824
      %5236 = vst.msk [vmem:[#allocation20] sm:$0x3] %vm5235, %v5233
    $region93: #{_lambda_.1} parent=1 // pred_fallthru
      _
    // Predicated region
    $region94: #{_lambda_.1} parent=1 // pred_check
      _
    $region95: #{_lambda_.1} parent=1 // pred_check_branch
      %5238 = sbr.rel (0) target = $region97
    $region96: #{_lambda_.1} parent=1 // pred_region
      %5240 = vsyncadd [#allocation7], 0
      %s5242 = sshll.u32 [#allocation20], 4
      %s5243 = int_to_ptr.vmem [resolvable:$true] %s5242
      %s5244 = sshll.u32 %s12, 4
      %s5245 = int_to_ptr.hbm [resolvable:$true] %s5244
      %5247 = dma.vmem_to_hbm [thread:$0]  %s5243, 32, %s5245, [#allocation7]
    $region97: #{_lambda_.1} parent=1 // pred_fallthru
      _
    // Predicated region
    $region98: #{_lambda_.1} parent=1 // pred_check
      _
    $region99: #{_lambda_.1} parent=1 // pred_check_branch
      %5249 = sbr.rel (0) target = $region101
    $region100: #{_lambda_.1} parent=1 // pred_region
      %5251 = dma.done [#allocation7], 32
    $region101: #{_lambda_.1} parent=1 // pred_fallthru
      _
    %5252 = vsyncpa [#allocation6], 1
    %5253 = vsyncpa [#allocation9], 1
    %5254 = vsyncpa [#allocation12], 1
    %5255 = vsyncpa [#allocation15], 1
    %5256 = vsyncpa [#allocation18], 1
    %5257 = vsyncpa [#allocation7], 1

</llo_original>
